<compile_context>
chip_gen: v7x
topology: tpu7x:2x2x1
jax: 0.10.0
libtpu: 0.0.40
codegen_flags: <defaults>
</compile_context>

<pallas_src>
import functools

import jax
import jax.numpy as jnp
import numpy as np
from jax.experimental import pallas as pl
from jax.experimental.pallas import tpu as pltpu

EPS = 1e-5
LANE = 128


def _conv_stats_kernel(inp_ref, w_ref, scale_ref, bias_ref,
                       y_ref, stats_ref, pad_ref, *, apply_act):
    """3x3 conv (pad=1, stride=1) via a single im2col matmul, with per-channel
    sum / sum-of-squares fused into the conv epilogue (BN finalized outside).

    inp_ref  : (1, H*W, C)   activation for one image (bf16)
    w_ref    : (9*C, Co)     conv weight, (ky, kx, cin) flattened, bf16
    scale_ref: (1, C)        BN affine scale applied to the *input* (pass B)
    bias_ref : (1, C)        BN affine bias  applied to the *input* (pass B)
    y_ref    : (1, H*W, Co)  raw conv output (bf16 store, pre-BN)
    stats_ref: (1, 2, Co)    per-image [sum, sum_of_squares] of the f32 output
    pad_ref  : (H+2, W+2, C) f32 scratch, zero-padded conv input
    """
    HW, C = inp_ref.shape[1], inp_ref.shape[2]
    Hp, Wp, _ = pad_ref.shape
    H, W = Hp - 2, Wp - 2

    a = inp_ref[0].astype(jnp.float32)
    if apply_act:                         # first-BN affine + ReLU (pass B only)
        a = jnp.maximum(a * scale_ref[...] + bias_ref[...], 0.0)

    # Zero-padded conv input (halo = 0).  Scratch is per-core and fully
    # rewritten every grid step, so it is safe under megacore "parallel".
    pad_ref[...] = jnp.zeros_like(pad_ref)
    pad_ref[1:H + 1, 1:W + 1, :] = a.reshape(H, W, C)

    # im2col: one (HW, 9*C) bf16 patch matrix -> one MXU matmul (K = 9*C).
    # Per-slice bf16 cast keeps the large concat intermediate in bf16.
    patches = jnp.concatenate(
        [pad_ref[dy:dy + H, dx:dx + W, :].reshape(HW, C).astype(jnp.bfloat16)
         for dy in range(3) for dx in range(3)], axis=-1)
    y = jnp.dot(patches, w_ref[...],
                preferred_element_type=jnp.float32)          # (HW, Co) f32

    y_ref[0] = y.astype(y_ref.dtype)                         # bf16 store
    # BN batch statistics fused into the epilogue (f32, no extra pass over y).
    stats_ref[0, 0:1, :] = jnp.sum(y, axis=0, keepdims=True)
    stats_ref[0, 1:2, :] = jnp.sum(y * y, axis=0, keepdims=True)


def _bn_add_relu_kernel(y_ref, x_ref, scale_ref, bias_ref, out_ref):
    """Lane-dense BN + residual add + ReLU.  All blocks are (*, 128)."""
    y = y_ref[0].astype(jnp.float32)
    out_ref[0] = jnp.maximum(
        y * scale_ref[...] + bias_ref[...] + x_ref[0], 0.0)


def _conv_pass(inp, w_r, scale, bias, *, apply_act, H, W, out_dtype,
               compiler_params):
    N, HW, C = inp.shape
    Co = w_r.shape[1]
    kernel = functools.partial(_conv_stats_kernel, apply_act=apply_act)
    return pl.pallas_call(
        kernel,
        grid=(N,),
        out_shape=(jax.ShapeDtypeStruct((N, HW, Co), out_dtype),
                   jax.ShapeDtypeStruct((N, 2, Co), jnp.float32)),
        in_specs=[
            pl.BlockSpec((1, HW, C), lambda n: (n, 0, 0)),
            pl.BlockSpec((9 * C, Co), lambda n: (0, 0)),
            pl.BlockSpec((1, C), lambda n: (0, 0)),
            pl.BlockSpec((1, C), lambda n: (0, 0)),
        ],
        out_specs=(
            pl.BlockSpec((1, HW, Co), lambda n: (n, 0, 0)),
            pl.BlockSpec((1, 2, Co), lambda n: (n, 0, 0)),
        ),
        scratch_shapes=[pltpu.VMEM((H + 2, W + 2, C), jnp.float32)],
        compiler_params=compiler_params,
    )(inp, w_r, scale, bias)


@jax.jit
def block_forward(x_nchw, w1_hwio, w2_hwio, gamma2, beta2):
    N, C, H, W = x_nchw.shape
    Co = w1_hwio.shape[-1]
    assert Co == C, "residual add requires in_channels == out_channels"
    HW = H * W
    assert (HW * C) % LANE == 0 and LANE % C == 0, \
        "lane-dense epilogue needs H*W*C % 128 == 0 and C | 128"
    R = (HW * C) // LANE

    cparams = pltpu.CompilerParams(
        dimension_semantics=("parallel",),        # shard N across TensorCores
        vmem_limit_bytes=32 * 1024 * 1024)

    x_nhwc = jnp.transpose(x_nchw, (0, 2, 3, 1)).astype(jnp.float32)
    x_rows = x_nhwc.reshape(N, HW, C)
    x_bf16 = x_rows.astype(jnp.bfloat16)          # conv input (half the DMA)
    w1_r = w1_hwio.reshape(9 * C, Co).astype(jnp.bfloat16)
    w2_r = w2_hwio.reshape(9 * Co, Co).astype(jnp.bfloat16)
    gamma = gamma2.astype(jnp.float32).reshape(Co)
    beta = beta2.astype(jnp.float32).reshape(Co)

    def bn_affine(stats):
        cnt = N * HW
        mean = jnp.sum(stats[:, 0, :], axis=0) / cnt
        var = jnp.maximum(jnp.sum(stats[:, 1, :], axis=0) / cnt - mean * mean,
                          0.0)                    # biased (training-mode) var
        scale = gamma * jax.lax.rsqrt(var + EPS)
        bias = beta - mean * scale
        return scale, bias

    ones = jnp.ones((1, C), jnp.float32)
    zeros = jnp.zeros((1, C), jnp.float32)

    # ---- pass A: conv1 + fused BN stats -------------------------------------
    y1, stats1 = _conv_pass(x_bf16, w1_r, ones, zeros,
                            apply_act=False, H=H, W=W,
                            out_dtype=jnp.bfloat16, compiler_params=cparams)
    scale1, bias1 = bn_affine(stats1)

    # ---- pass B: BN + ReLU + conv2 + fused BN stats --------------------------
    y2, stats2 = _conv_pass(y1, w2_r, scale1.reshape(1, Co),
                            bias1.reshape(1, Co),
                            apply_act=True, H=H, W=W,
                            out_dtype=jnp.bfloat16, compiler_params=cparams)
    scale2, bias2 = bn_affine(stats2)

    # ---- pass C: lane-dense BN + residual + ReLU -----------------------------
    # Tile the per-channel affine across 128 lanes (lane l <-> channel l % C),
    # and present all operands / the output as (N, R, 128) slabs so every
    # vector op and store uses full lanes.
    scale2_l = jnp.tile(scale2, LANE // Co).reshape(1, LANE)
    bias2_l = jnp.tile(bias2, LANE // Co).reshape(1, LANE)
    y2_ld = y2.reshape(N, R, LANE)
    x_ld = x_nhwc.reshape(N, R, LANE)

    out_ld = pl.pallas_call(
        _bn_add_relu_kernel,
        grid=(N,),
        out_shape=jax.ShapeDtypeStruct((N, R, LANE), jnp.float32),
        in_specs=[
            pl.BlockSpec((1, R, LANE), lambda n: (n, 0, 0)),
            pl.BlockSpec((1, R, LANE), lambda n: (n, 0, 0)),
            pl.BlockSpec((1, LANE), lambda n: (0, 0)),
            pl.BlockSpec((1, LANE), lambda n: (0, 0)),
        ],
        out_specs=pl.BlockSpec((1, R, LANE), lambda n: (n, 0, 0)),
        compiler_params=cparams,
    )(y2_ld, x_ld, scale2_l, bias2_l)

    out = out_ld.reshape(N, H, W, Co)
    return jnp.transpose(out, (0, 3, 1, 2))                         # NCHW


def block_reference(x_nchw, w1_hwio, w2_hwio, gamma2, beta2):
    """Pure-JAX reference of the same forward (for correctness check)."""
    x = jnp.transpose(x_nchw, (0, 2, 3, 1)).astype(jnp.float32)

    def conv(inp, w):
        return jax.lax.conv_general_dilated(
            inp, w, window_strides=(1, 1), padding=((1, 1), (1, 1)),
            dimension_numbers=('NHWC', 'HWIO', 'NHWC'),
            precision=jax.lax.Precision.HIGHEST)

    def bn(y):
        m = jnp.mean(y, axis=(0, 1, 2), keepdims=True)
        v = jnp.mean((y - m) ** 2, axis=(0, 1, 2), keepdims=True)
        return (y - m) * jax.lax.rsqrt(v + EPS) * gamma2 + beta2

    h = jax.nn.relu(bn(conv(x, w1_hwio)))
    h = bn(conv(h, w2_hwio))
    h = jax.nn.relu(h + x)
    return jnp.transpose(h, (0, 3, 1, 2))


if __name__ == "__main__":
    key = jax.random.PRNGKey(0)
    k_x, k_w1, k_w2, k_g, k_b = jax.random.split(key, 5)

    # in_channels == out_channels, stride=1 (required for the residual add
    # when i_downsample is None).
    N, C, H, W = 2, 4, 16, 16
    x = jax.random.normal(k_x, (N, C, H, W), jnp.float32)

    # PyTorch Conv2d weights are OIHW; convert to HWIO for the NHWC kernel.
    w1_oihw = 0.1 * jax.random.normal(k_w1, (C, C, 3, 3), jnp.float32)
    w2_oihw = 0.1 * jax.random.normal(k_w2, (C, C, 3, 3), jnp.float32)
    w1 = jnp.transpose(w1_oihw, (2, 3, 1, 0))
    w2 = jnp.transpose(w2_oihw, (2, 3, 1, 0))

    # Only batch_norm2 parameters matter (batch_norm1 is unused in forward).
    gamma2 = 1.0 + 0.1 * jax.random.normal(k_g, (C,), jnp.float32)
    beta2 = 0.1 * jax.random.normal(k_b, (C,), jnp.float32)

    out = jax.block_until_ready(block_forward(x, w1, w2, gamma2, beta2))
    ref = block_reference(x, w1, w2, gamma2, beta2)
    # Tolerance accounts for deliberate bf16 MXU inputs / bf16 inter-pass
    # intermediates (f32 accumulation and f32 BN statistics) vs the f32
    # Precision.HIGHEST reference.
    np.testing.assert_allclose(np.asarray(out), np.asarray(ref),
                               rtol=5e-2, atol=5e-2)
    print("KERNEL_OK")
</pallas_src>

<mosaic_0001>
module attributes {stable_mosaic.version = 11 : i64} {
  func.func @_conv_stats_kernel(%arg0: i32, %arg1: memref<1x256x4xbf16, #tpu.memory_space<vmem>>, %arg2: memref<36x4xbf16, #tpu.memory_space<vmem>>, %arg3: memref<1x4xf32, #tpu.memory_space<vmem>>, %arg4: memref<1x4xf32, #tpu.memory_space<vmem>>, %arg5: memref<1x256x4xbf16, #tpu.memory_space<vmem>>, %arg6: memref<1x2x4xf32, #tpu.memory_space<vmem>>, %arg7: memref<18x18x4xf32, #tpu.memory_space<vmem>>) attributes {dimension_semantics = [#tpu.dimension_semantics<parallel>], iteration_bounds = array<i64: 2>, scalar_prefetch = 0 : i64, scratch_operands = 1 : i64, tpu.core_type = #tpu.core_type<tc>, window_params = [{transform_indices = @transform_0, window_bounds = array<i64: 1, 256, 4>}, {pipeline_mode = #tpu.pipeline_mode<synchronous>, transform_indices = @transform_1, window_bounds = array<i64: 36, 4>}, {pipeline_mode = #tpu.pipeline_mode<synchronous>, transform_indices = @transform_2, window_bounds = array<i64: 1, 4>}, {pipeline_mode = #tpu.pipeline_mode<synchronous>, transform_indices = @transform_3, window_bounds = array<i64: 1, 4>}, {transform_indices = @transform_4, window_bounds = array<i64: 1, 256, 4>}, {transform_indices = @transform_5, window_bounds = array<i64: 1, 2, 4>}]} {
    %c0 = arith.constant 0 : index
    %c0_0 = arith.constant 0 : index
    %c0_1 = arith.constant 0 : index
    %0 = vector.load %arg1[%c0, %c0_0, %c0_1] : memref<1x256x4xbf16, #tpu.memory_space<vmem>>, vector<1x256x4xbf16>
    %1 = vector.shape_cast %0 : vector<1x256x4xbf16> to vector<256x4xbf16>
    %2 = arith.extf %1 : vector<256x4xbf16> to vector<256x4xf32>
    %cst = arith.constant 0.000000e+00 : f32
    %3 = vector.broadcast %cst : f32 to vector<18x18x4xf32>
    %c0_2 = arith.constant 0 : index
    %c0_3 = arith.constant 0 : index
    %c0_4 = arith.constant 0 : index
    %4 = vector.load %arg7[%c0_2, %c0_3, %c0_4] : memref<18x18x4xf32, #tpu.memory_space<vmem>>, vector<18x18x4xf32>
    tpu.vector_store %arg7[%c0_2, %c0_3, %c0_4], %3 {strides = array<i32>} : memref<18x18x4xf32, #tpu.memory_space<vmem>>, vector<18x18x4xf32>,
    %5 = vector.shape_cast %2 : vector<256x4xf32> to vector<16x16x4xf32>
    %c1 = arith.constant 1 : index
    %c1_5 = arith.constant 1 : index
    %c0_6 = arith.constant 0 : index
    %6 = vector.load %arg7[%c1, %c1_5, %c0_6] : memref<18x18x4xf32, #tpu.memory_space<vmem>>, vector<16x16x4xf32>
    tpu.vector_store %arg7[%c1, %c1_5, %c0_6], %5 {strides = array<i32>} : memref<18x18x4xf32, #tpu.memory_space<vmem>>, vector<16x16x4xf32>,
    %c0_7 = arith.constant 0 : index
    %c0_8 = arith.constant 0 : index
    %c0_9 = arith.constant 0 : index
    %7 = vector.load %arg7[%c0_7, %c0_8, %c0_9] : memref<18x18x4xf32, #tpu.memory_space<vmem>>, vector<16x16x4xf32>
    %8 = vector.shape_cast %7 : vector<16x16x4xf32> to vector<256x4xf32>
    %9 = arith.truncf %8 : vector<256x4xf32> to vector<256x4xbf16>
    %c0_10 = arith.constant 0 : index
    %c1_11 = arith.constant 1 : index
    %c0_12 = arith.constant 0 : index
    %10 = vector.load %arg7[%c0_10, %c1_11, %c0_12] : memref<18x18x4xf32, #tpu.memory_space<vmem>>, vector<16x16x4xf32>
    %11 = vector.shape_cast %10 : vector<16x16x4xf32> to vector<256x4xf32>
    %12 = arith.truncf %11 : vector<256x4xf32> to vector<256x4xbf16>
    %c0_13 = arith.constant 0 : index
    %c2 = arith.constant 2 : index
    %c0_14 = arith.constant 0 : index
    %13 = vector.load %arg7[%c0_13, %c2, %c0_14] : memref<18x18x4xf32, #tpu.memory_space<vmem>>, vector<16x16x4xf32>
    %14 = vector.shape_cast %13 : vector<16x16x4xf32> to vector<256x4xf32>
    %15 = arith.truncf %14 : vector<256x4xf32> to vector<256x4xbf16>
    %c1_15 = arith.constant 1 : index
    %c0_16 = arith.constant 0 : index
    %c0_17 = arith.constant 0 : index
    %16 = vector.load %arg7[%c1_15, %c0_16, %c0_17] : memref<18x18x4xf32, #tpu.memory_space<vmem>>, vector<16x16x4xf32>
    %17 = vector.shape_cast %16 : vector<16x16x4xf32> to vector<256x4xf32>
    %18 = arith.truncf %17 : vector<256x4xf32> to vector<256x4xbf16>
    %c1_18 = arith.constant 1 : index
    %c1_19 = arith.constant 1 : index
    %c0_20 = arith.constant 0 : index
    %19 = vector.load %arg7[%c1_18, %c1_19, %c0_20] : memref<18x18x4xf32, #tpu.memory_space<vmem>>, vector<16x16x4xf32>
    %20 = vector.shape_cast %19 : vector<16x16x4xf32> to vector<256x4xf32>
    %21 = arith.truncf %20 : vector<256x4xf32> to vector<256x4xbf16>
    %c1_21 = arith.constant 1 : index
    %c2_22 = arith.constant 2 : index
    %c0_23 = arith.constant 0 : index
    %22 = vector.load %arg7[%c1_21, %c2_22, %c0_23] : memref<18x18x4xf32, #tpu.memory_space<vmem>>, vector<16x16x4xf32>
    %23 = vector.shape_cast %22 : vector<16x16x4xf32> to vector<256x4xf32>
    %24 = arith.truncf %23 : vector<256x4xf32> to vector<256x4xbf16>
    %c2_24 = arith.constant 2 : index
    %c0_25 = arith.constant 0 : index
    %c0_26 = arith.constant 0 : index
    %25 = vector.load %arg7[%c2_24, %c0_25, %c0_26] : memref<18x18x4xf32, #tpu.memory_space<vmem>>, vector<16x16x4xf32>
    %26 = vector.shape_cast %25 : vector<16x16x4xf32> to vector<256x4xf32>
    %27 = arith.truncf %26 : vector<256x4xf32> to vector<256x4xbf16>
    %c2_27 = arith.constant 2 : index
    %c1_28 = arith.constant 1 : index
    %c0_29 = arith.constant 0 : index
    %28 = vector.load %arg7[%c2_27, %c1_28, %c0_29] : memref<18x18x4xf32, #tpu.memory_space<vmem>>, vector<16x16x4xf32>
    %29 = vector.shape_cast %28 : vector<16x16x4xf32> to vector<256x4xf32>
    %30 = arith.truncf %29 : vector<256x4xf32> to vector<256x4xbf16>
    %c2_30 = arith.constant 2 : index
    %c2_31 = arith.constant 2 : index
    %c0_32 = arith.constant 0 : index
    %31 = vector.load %arg7[%c2_30, %c2_31, %c0_32] : memref<18x18x4xf32, #tpu.memory_space<vmem>>, vector<16x16x4xf32>
    %32 = vector.shape_cast %31 : vector<16x16x4xf32> to vector<256x4xf32>
    %33 = arith.truncf %32 : vector<256x4xf32> to vector<256x4xbf16>
    %34 = tpu.concatenate %9, %12, %15, %18, %21, %24, %27, %30, %33 in 1 : vector<256x4xbf16>, vector<256x4xbf16>, vector<256x4xbf16>, vector<256x4xbf16>, vector<256x4xbf16>, vector<256x4xbf16>, vector<256x4xbf16>, vector<256x4xbf16>, vector<256x4xbf16> -> vector<256x36xbf16>
    %c0_33 = arith.constant 0 : index
    %c0_34 = arith.constant 0 : index
    %35 = vector.load %arg2[%c0_33, %c0_34] : memref<36x4xbf16, #tpu.memory_space<vmem>>, vector<36x4xbf16>
    %cst_35 = arith.constant dense<0.000000e+00> : vector<256x4xf32>
    %36 = tpu.matmul %34, %35, %cst_35 {dimension_numbers = #tpu.dot_dimension_numbers<[1], [0], [0], [1], [0, 0, 1, 1], [], []>} : vector<256x36xbf16>, vector<36x4xbf16>, vector<256x4xf32> -> vector<256x4xf32>
    %37 = arith.truncf %36 : vector<256x4xf32> to vector<256x4xbf16>
    %c0_36 = arith.constant 0 : index
    %c0_37 = arith.constant 0 : index
    %c0_38 = arith.constant 0 : index
    %38 = vector.load %arg5[%c0_36, %c0_37, %c0_38] : memref<1x256x4xbf16, #tpu.memory_space<vmem>>, vector<1x256x4xbf16>
    %39 = vector.shape_cast %38 : vector<1x256x4xbf16> to vector<256x4xbf16>
    %40 = vector.shape_cast %37 : vector<256x4xbf16> to vector<1x256x4xbf16>
    tpu.vector_store %arg5[%c0_36, %c0_37, %c0_38], %40 {strides = array<i32>} : memref<1x256x4xbf16, #tpu.memory_space<vmem>>, vector<1x256x4xbf16>,
    %cst_39 = arith.constant dense<0.000000e+00> : vector<4xf32>
    %41 = vector.multi_reduction <add>, %36, %cst_39 [0] : vector<256x4xf32> to vector<4xf32>
    %42 = vector.shape_cast %41 : vector<4xf32> to vector<1x4xf32>
    %c0_40 = arith.constant 0 : index
    %c0_41 = arith.constant 0 : index
    %c0_42 = arith.constant 0 : index
    %43 = vector.load %arg6[%c0_40, %c0_41, %c0_42] : memref<1x2x4xf32, #tpu.memory_space<vmem>>, vector<1x1x4xf32>
    %44 = vector.shape_cast %43 : vector<1x1x4xf32> to vector<1x4xf32>
    %45 = vector.shape_cast %42 : vector<1x4xf32> to vector<1x1x4xf32>
    tpu.vector_store %arg6[%c0_40, %c0_41, %c0_42], %45 {strides = array<i32>} : memref<1x2x4xf32, #tpu.memory_space<vmem>>, vector<1x1x4xf32>,
    %46 = arith.mulf %36, %36 : vector<256x4xf32>
    %cst_43 = arith.constant dense<0.000000e+00> : vector<4xf32>
    %47 = vector.multi_reduction <add>, %46, %cst_43 [0] : vector<256x4xf32> to vector<4xf32>
    %48 = vector.shape_cast %47 : vector<4xf32> to vector<1x4xf32>
    %c0_44 = arith.constant 0 : index
    %c1_45 = arith.constant 1 : index
    %c0_46 = arith.constant 0 : index
    %49 = vector.load %arg6[%c0_44, %c1_45, %c0_46] : memref<1x2x4xf32, #tpu.memory_space<vmem>>, vector<1x1x4xf32>
    %50 = vector.shape_cast %49 : vector<1x1x4xf32> to vector<1x4xf32>
    %51 = vector.shape_cast %48 : vector<1x4xf32> to vector<1x1x4xf32>
    tpu.vector_store %arg6[%c0_44, %c1_45, %c0_46], %51 {strides = array<i32>} : memref<1x2x4xf32, #tpu.memory_space<vmem>>, vector<1x1x4xf32>,
    return
  }
  func.func @transform_0(%arg0: i32) -> (i32, i32, i32) {
    %c0_i32 = arith.constant 0 : i32
    %c0_i32_0 = arith.constant 0 : i32
    %c0_i32_1 = arith.constant 0 : i32
    return %arg0, %c0_i32, %c0_i32_0 : i32, i32, i32
  }
  func.func @transform_1(%arg0: i32) -> (i32, i32) {
    %c0_i32 = arith.constant 0 : i32
    %c0_i32_0 = arith.constant 0 : i32
    %c0_i32_1 = arith.constant 0 : i32
    return %c0_i32, %c0_i32_0 : i32, i32
  }
  func.func @transform_2(%arg0: i32) -> (i32, i32) {
    %c0_i32 = arith.constant 0 : i32
    %c0_i32_0 = arith.constant 0 : i32
    %c0_i32_1 = arith.constant 0 : i32
    return %c0_i32, %c0_i32_0 : i32, i32
  }
  func.func @transform_3(%arg0: i32) -> (i32, i32) {
    %c0_i32 = arith.constant 0 : i32
    %c0_i32_0 = arith.constant 0 : i32
    %c0_i32_1 = arith.constant 0 : i32
    return %c0_i32, %c0_i32_0 : i32, i32
  }
  func.func @transform_4(%arg0: i32) -> (i32, i32, i32) {
    %c0_i32 = arith.constant 0 : i32
    %c0_i32_0 = arith.constant 0 : i32
    %c0_i32_1 = arith.constant 0 : i32
    return %arg0, %c0_i32, %c0_i32_0 : i32, i32, i32
  }
  func.func @transform_5(%arg0: i32) -> (i32, i32, i32) {
    %c0_i32 = arith.constant 0 : i32
    %c0_i32_0 = arith.constant 0 : i32
    %c0_i32_1 = arith.constant 0 : i32
    return %arg0, %c0_i32, %c0_i32_0 : i32, i32, i32
  }
}

module attributes {stable_mosaic.version = 11 : i64} {
  func.func @_conv_stats_kernel(%arg0: i32, %arg1: memref<1x256x4xbf16, #tpu.memory_space<vmem>>, %arg2: memref<36x4xbf16, #tpu.memory_space<vmem>>, %arg3: memref<1x4xf32, #tpu.memory_space<vmem>>, %arg4: memref<1x4xf32, #tpu.memory_space<vmem>>, %arg5: memref<1x256x4xbf16, #tpu.memory_space<vmem>>, %arg6: memref<1x2x4xf32, #tpu.memory_space<vmem>>, %arg7: memref<18x18x4xf32, #tpu.memory_space<vmem>>) attributes {dimension_semantics = [#tpu.dimension_semantics<parallel>], iteration_bounds = array<i64: 2>, scalar_prefetch = 0 : i64, scratch_operands = 1 : i64, tpu.core_type = #tpu.core_type<tc>, window_params = [{transform_indices = @transform_0, window_bounds = array<i64: 1, 256, 4>}, {pipeline_mode = #tpu.pipeline_mode<synchronous>, transform_indices = @transform_1, window_bounds = array<i64: 36, 4>}, {pipeline_mode = #tpu.pipeline_mode<synchronous>, transform_indices = @transform_2, window_bounds = array<i64: 1, 4>}, {pipeline_mode = #tpu.pipeline_mode<synchronous>, transform_indices = @transform_3, window_bounds = array<i64: 1, 4>}, {transform_indices = @transform_4, window_bounds = array<i64: 1, 256, 4>}, {transform_indices = @transform_5, window_bounds = array<i64: 1, 2, 4>}]} {
    %c0 = arith.constant 0 : index
    %c0_0 = arith.constant 0 : index
    %c0_1 = arith.constant 0 : index
    %0 = vector.load %arg1[%c0, %c0_0, %c0_1] : memref<1x256x4xbf16, #tpu.memory_space<vmem>>, vector<1x256x4xbf16>
    %1 = vector.shape_cast %0 : vector<1x256x4xbf16> to vector<256x4xbf16>
    %2 = arith.extf %1 : vector<256x4xbf16> to vector<256x4xf32>
    %c0_2 = arith.constant 0 : index
    %c0_3 = arith.constant 0 : index
    %3 = vector.load %arg3[%c0_2, %c0_3] : memref<1x4xf32, #tpu.memory_space<vmem>>, vector<1x4xf32>
    %4 = vector.broadcast %3 : vector<1x4xf32> to vector<256x4xf32>
    %5 = arith.mulf %2, %4 : vector<256x4xf32>
    %c0_4 = arith.constant 0 : index
    %c0_5 = arith.constant 0 : index
    %6 = vector.load %arg4[%c0_4, %c0_5] : memref<1x4xf32, #tpu.memory_space<vmem>>, vector<1x4xf32>
    %7 = vector.broadcast %6 : vector<1x4xf32> to vector<256x4xf32>
    %8 = arith.addf %5, %7 : vector<256x4xf32>
    %cst = arith.constant 0.000000e+00 : f32
    %9 = vector.broadcast %cst : f32 to vector<256x4xf32>
    %10 = arith.maximumf %8, %9 : vector<256x4xf32>
    %cst_6 = arith.constant 0.000000e+00 : f32
    %11 = vector.broadcast %cst_6 : f32 to vector<18x18x4xf32>
    %c0_7 = arith.constant 0 : index
    %c0_8 = arith.constant 0 : index
    %c0_9 = arith.constant 0 : index
    %12 = vector.load %arg7[%c0_7, %c0_8, %c0_9] : memref<18x18x4xf32, #tpu.memory_space<vmem>>, vector<18x18x4xf32>
    tpu.vector_store %arg7[%c0_7, %c0_8, %c0_9], %11 {strides = array<i32>} : memref<18x18x4xf32, #tpu.memory_space<vmem>>, vector<18x18x4xf32>,
    %13 = vector.shape_cast %10 : vector<256x4xf32> to vector<16x16x4xf32>
    %c1 = arith.constant 1 : index
    %c1_10 = arith.constant 1 : index
    %c0_11 = arith.constant 0 : index
    %14 = vector.load %arg7[%c1, %c1_10, %c0_11] : memref<18x18x4xf32, #tpu.memory_space<vmem>>, vector<16x16x4xf32>
    tpu.vector_store %arg7[%c1, %c1_10, %c0_11], %13 {strides = array<i32>} : memref<18x18x4xf32, #tpu.memory_space<vmem>>, vector<16x16x4xf32>,
    %c0_12 = arith.constant 0 : index
    %c0_13 = arith.constant 0 : index
    %c0_14 = arith.constant 0 : index
    %15 = vector.load %arg7[%c0_12, %c0_13, %c0_14] : memref<18x18x4xf32, #tpu.memory_space<vmem>>, vector<16x16x4xf32>
    %16 = vector.shape_cast %15 : vector<16x16x4xf32> to vector<256x4xf32>
    %17 = arith.truncf %16 : vector<256x4xf32> to vector<256x4xbf16>
    %c0_15 = arith.constant 0 : index
    %c1_16 = arith.constant 1 : index
    %c0_17 = arith.constant 0 : index
    %18 = vector.load %arg7[%c0_15, %c1_16, %c0_17] : memref<18x18x4xf32, #tpu.memory_space<vmem>>, vector<16x16x4xf32>
    %19 = vector.shape_cast %18 : vector<16x16x4xf32> to vector<256x4xf32>
    %20 = arith.truncf %19 : vector<256x4xf32> to vector<256x4xbf16>
    %c0_18 = arith.constant 0 : index
    %c2 = arith.constant 2 : index
    %c0_19 = arith.constant 0 : index
    %21 = vector.load %arg7[%c0_18, %c2, %c0_19] : memref<18x18x4xf32, #tpu.memory_space<vmem>>, vector<16x16x4xf32>
    %22 = vector.shape_cast %21 : vector<16x16x4xf32> to vector<256x4xf32>
    %23 = arith.truncf %22 : vector<256x4xf32> to vector<256x4xbf16>
    %c1_20 = arith.constant 1 : index
    %c0_21 = arith.constant 0 : index
    %c0_22 = arith.constant 0 : index
    %24 = vector.load %arg7[%c1_20, %c0_21, %c0_22] : memref<18x18x4xf32, #tpu.memory_space<vmem>>, vector<16x16x4xf32>
    %25 = vector.shape_cast %24 : vector<16x16x4xf32> to vector<256x4xf32>
    %26 = arith.truncf %25 : vector<256x4xf32> to vector<256x4xbf16>
    %c1_23 = arith.constant 1 : index
    %c1_24 = arith.constant 1 : index
    %c0_25 = arith.constant 0 : index
    %27 = vector.load %arg7[%c1_23, %c1_24, %c0_25] : memref<18x18x4xf32, #tpu.memory_space<vmem>>, vector<16x16x4xf32>
    %28 = vector.shape_cast %27 : vector<16x16x4xf32> to vector<256x4xf32>
    %29 = arith.truncf %28 : vector<256x4xf32> to vector<256x4xbf16>
    %c1_26 = arith.constant 1 : index
    %c2_27 = arith.constant 2 : index
    %c0_28 = arith.constant 0 : index
    %30 = vector.load %arg7[%c1_26, %c2_27, %c0_28] : memref<18x18x4xf32, #tpu.memory_space<vmem>>, vector<16x16x4xf32>
    %31 = vector.shape_cast %30 : vector<16x16x4xf32> to vector<256x4xf32>
    %32 = arith.truncf %31 : vector<256x4xf32> to vector<256x4xbf16>
    %c2_29 = arith.constant 2 : index
    %c0_30 = arith.constant 0 : index
    %c0_31 = arith.constant 0 : index
    %33 = vector.load %arg7[%c2_29, %c0_30, %c0_31] : memref<18x18x4xf32, #tpu.memory_space<vmem>>, vector<16x16x4xf32>
    %34 = vector.shape_cast %33 : vector<16x16x4xf32> to vector<256x4xf32>
    %35 = arith.truncf %34 : vector<256x4xf32> to vector<256x4xbf16>
    %c2_32 = arith.constant 2 : index
    %c1_33 = arith.constant 1 : index
    %c0_34 = arith.constant 0 : index
    %36 = vector.load %arg7[%c2_32, %c1_33, %c0_34] : memref<18x18x4xf32, #tpu.memory_space<vmem>>, vector<16x16x4xf32>
    %37 = vector.shape_cast %36 : vector<16x16x4xf32> to vector<256x4xf32>
    %38 = arith.truncf %37 : vector<256x4xf32> to vector<256x4xbf16>
    %c2_35 = arith.constant 2 : index
    %c2_36 = arith.constant 2 : index
    %c0_37 = arith.constant 0 : index
    %39 = vector.load %arg7[%c2_35, %c2_36, %c0_37] : memref<18x18x4xf32, #tpu.memory_space<vmem>>, vector<16x16x4xf32>
    %40 = vector.shape_cast %39 : vector<16x16x4xf32> to vector<256x4xf32>
    %41 = arith.truncf %40 : vector<256x4xf32> to vector<256x4xbf16>
    %42 = tpu.concatenate %17, %20, %23, %26, %29, %32, %35, %38, %41 in 1 : vector<256x4xbf16>, vector<256x4xbf16>, vector<256x4xbf16>, vector<256x4xbf16>, vector<256x4xbf16>, vector<256x4xbf16>, vector<256x4xbf16>, vector<256x4xbf16>, vector<256x4xbf16> -> vector<256x36xbf16>
    %c0_38 = arith.constant 0 : index
    %c0_39 = arith.constant 0 : index
    %43 = vector.load %arg2[%c0_38, %c0_39] : memref<36x4xbf16, #tpu.memory_space<vmem>>, vector<36x4xbf16>
    %cst_40 = arith.constant dense<0.000000e+00> : vector<256x4xf32>
    %44 = tpu.matmul %42, %43, %cst_40 {dimension_numbers = #tpu.dot_dimension_numbers<[1], [0], [0], [1], [0, 0, 1, 1], [], []>} : vector<256x36xbf16>, vector<36x4xbf16>, vector<256x4xf32> -> vector<256x4xf32>
    %45 = arith.truncf %44 : vector<256x4xf32> to vector<256x4xbf16>
    %c0_41 = arith.constant 0 : index
    %c0_42 = arith.constant 0 : index
    %c0_43 = arith.constant 0 : index
    %46 = vector.load %arg5[%c0_41, %c0_42, %c0_43] : memref<1x256x4xbf16, #tpu.memory_space<vmem>>, vector<1x256x4xbf16>
    %47 = vector.shape_cast %46 : vector<1x256x4xbf16> to vector<256x4xbf16>
    %48 = vector.shape_cast %45 : vector<256x4xbf16> to vector<1x256x4xbf16>
    tpu.vector_store %arg5[%c0_41, %c0_42, %c0_43], %48 {strides = array<i32>} : memref<1x256x4xbf16, #tpu.memory_space<vmem>>, vector<1x256x4xbf16>,
    %cst_44 = arith.constant dense<0.000000e+00> : vector<4xf32>
    %49 = vector.multi_reduction <add>, %44, %cst_44 [0] : vector<256x4xf32> to vector<4xf32>
    %50 = vector.shape_cast %49 : vector<4xf32> to vector<1x4xf32>
    %c0_45 = arith.constant 0 : index
    %c0_46 = arith.constant 0 : index
    %c0_47 = arith.constant 0 : index
    %51 = vector.load %arg6[%c0_45, %c0_46, %c0_47] : memref<1x2x4xf32, #tpu.memory_space<vmem>>, vector<1x1x4xf32>
    %52 = vector.shape_cast %51 : vector<1x1x4xf32> to vector<1x4xf32>
    %53 = vector.shape_cast %50 : vector<1x4xf32> to vector<1x1x4xf32>
    tpu.vector_store %arg6[%c0_45, %c0_46, %c0_47], %53 {strides = array<i32>} : memref<1x2x4xf32, #tpu.memory_space<vmem>>, vector<1x1x4xf32>,
    %54 = arith.mulf %44, %44 : vector<256x4xf32>
    %cst_48 = arith.constant dense<0.000000e+00> : vector<4xf32>
    %55 = vector.multi_reduction <add>, %54, %cst_48 [0] : vector<256x4xf32> to vector<4xf32>
    %56 = vector.shape_cast %55 : vector<4xf32> to vector<1x4xf32>
    %c0_49 = arith.constant 0 : index
    %c1_50 = arith.constant 1 : index
    %c0_51 = arith.constant 0 : index
    %57 = vector.load %arg6[%c0_49, %c1_50, %c0_51] : memref<1x2x4xf32, #tpu.memory_space<vmem>>, vector<1x1x4xf32>
    %58 = vector.shape_cast %57 : vector<1x1x4xf32> to vector<1x4xf32>
    %59 = vector.shape_cast %56 : vector<1x4xf32> to vector<1x1x4xf32>
    tpu.vector_store %arg6[%c0_49, %c1_50, %c0_51], %59 {strides = array<i32>} : memref<1x2x4xf32, #tpu.memory_space<vmem>>, vector<1x1x4xf32>,
    return
  }
  func.func @transform_0(%arg0: i32) -> (i32, i32, i32) {
    %c0_i32 = arith.constant 0 : i32
    %c0_i32_0 = arith.constant 0 : i32
    %c0_i32_1 = arith.constant 0 : i32
    return %arg0, %c0_i32, %c0_i32_0 : i32, i32, i32
  }
  func.func @transform_1(%arg0: i32) -> (i32, i32) {
    %c0_i32 = arith.constant 0 : i32
    %c0_i32_0 = arith.constant 0 : i32
    %c0_i32_1 = arith.constant 0 : i32
    return %c0_i32, %c0_i32_0 : i32, i32
  }
  func.func @transform_2(%arg0: i32) -> (i32, i32) {
    %c0_i32 = arith.constant 0 : i32
    %c0_i32_0 = arith.constant 0 : i32
    %c0_i32_1 = arith.constant 0 : i32
    return %c0_i32, %c0_i32_0 : i32, i32
  }
  func.func @transform_3(%arg0: i32) -> (i32, i32) {
    %c0_i32 = arith.constant 0 : i32
    %c0_i32_0 = arith.constant 0 : i32
    %c0_i32_1 = arith.constant 0 : i32
    return %c0_i32, %c0_i32_0 : i32, i32
  }
  func.func @transform_4(%arg0: i32) -> (i32, i32, i32) {
    %c0_i32 = arith.constant 0 : i32
    %c0_i32_0 = arith.constant 0 : i32
    %c0_i32_1 = arith.constant 0 : i32
    return %arg0, %c0_i32, %c0_i32_0 : i32, i32, i32
  }
  func.func @transform_5(%arg0: i32) -> (i32, i32, i32) {
    %c0_i32 = arith.constant 0 : i32
    %c0_i32_0 = arith.constant 0 : i32
    %c0_i32_1 = arith.constant 0 : i32
    return %arg0, %c0_i32, %c0_i32_0 : i32, i32, i32
  }
}

module attributes {stable_mosaic.version = 11 : i64} {
  func.func @_bn_add_relu_kernel(%arg0: i32, %arg1: memref<1x8x128xbf16, #tpu.memory_space<vmem>>, %arg2: memref<1x8x128xf32, #tpu.memory_space<vmem>>, %arg3: memref<1x128xf32, #tpu.memory_space<vmem>>, %arg4: memref<1x128xf32, #tpu.memory_space<vmem>>, %arg5: memref<1x8x128xf32, #tpu.memory_space<vmem>>) attributes {dimension_semantics = [#tpu.dimension_semantics<parallel>], iteration_bounds = array<i64: 2>, scalar_prefetch = 0 : i64, scratch_operands = 0 : i64, tpu.core_type = #tpu.core_type<tc>, window_params = [{transform_indices = @transform_0, window_bounds = array<i64: 1, 8, 128>}, {transform_indices = @transform_1, window_bounds = array<i64: 1, 8, 128>}, {pipeline_mode = #tpu.pipeline_mode<synchronous>, transform_indices = @transform_2, window_bounds = array<i64: 1, 128>}, {pipeline_mode = #tpu.pipeline_mode<synchronous>, transform_indices = @transform_3, window_bounds = array<i64: 1, 128>}, {transform_indices = @transform_4, window_bounds = array<i64: 1, 8, 128>}]} {
    %c0 = arith.constant 0 : index
    %c0_0 = arith.constant 0 : index
    %c0_1 = arith.constant 0 : index
    %0 = vector.load %arg1[%c0, %c0_0, %c0_1] : memref<1x8x128xbf16, #tpu.memory_space<vmem>>, vector<1x8x128xbf16>
    %1 = vector.shape_cast %0 : vector<1x8x128xbf16> to vector<8x128xbf16>
    %2 = arith.extf %1 : vector<8x128xbf16> to vector<8x128xf32>
    %c0_2 = arith.constant 0 : index
    %c0_3 = arith.constant 0 : index
    %3 = vector.load %arg3[%c0_2, %c0_3] : memref<1x128xf32, #tpu.memory_space<vmem>>, vector<1x128xf32>
    %4 = vector.broadcast %3 : vector<1x128xf32> to vector<8x128xf32>
    %5 = arith.mulf %2, %4 : vector<8x128xf32>
    %c0_4 = arith.constant 0 : index
    %c0_5 = arith.constant 0 : index
    %6 = vector.load %arg4[%c0_4, %c0_5] : memref<1x128xf32, #tpu.memory_space<vmem>>, vector<1x128xf32>
    %7 = vector.broadcast %6 : vector<1x128xf32> to vector<8x128xf32>
    %8 = arith.addf %5, %7 : vector<8x128xf32>
    %c0_6 = arith.constant 0 : index
    %c0_7 = arith.constant 0 : index
    %c0_8 = arith.constant 0 : index
    %9 = vector.load %arg2[%c0_6, %c0_7, %c0_8] : memref<1x8x128xf32, #tpu.memory_space<vmem>>, vector<1x8x128xf32>
    %10 = vector.shape_cast %9 : vector<1x8x128xf32> to vector<8x128xf32>
    %11 = arith.addf %8, %10 : vector<8x128xf32>
    %cst = arith.constant 0.000000e+00 : f32
    %12 = vector.broadcast %cst : f32 to vector<8x128xf32>
    %13 = arith.maximumf %11, %12 : vector<8x128xf32>
    %c0_9 = arith.constant 0 : index
    %c0_10 = arith.constant 0 : index
    %c0_11 = arith.constant 0 : index
    %14 = vector.load %arg5[%c0_9, %c0_10, %c0_11] : memref<1x8x128xf32, #tpu.memory_space<vmem>>, vector<1x8x128xf32>
    %15 = vector.shape_cast %14 : vector<1x8x128xf32> to vector<8x128xf32>
    %16 = vector.shape_cast %13 : vector<8x128xf32> to vector<1x8x128xf32>
    tpu.vector_store %arg5[%c0_9, %c0_10, %c0_11], %16 {strides = array<i32>} : memref<1x8x128xf32, #tpu.memory_space<vmem>>, vector<1x8x128xf32>,
    return
  }
  func.func @transform_0(%arg0: i32) -> (i32, i32, i32) {
    %c0_i32 = arith.constant 0 : i32
    %c0_i32_0 = arith.constant 0 : i32
    %c0_i32_1 = arith.constant 0 : i32
    return %arg0, %c0_i32, %c0_i32_0 : i32, i32, i32
  }
  func.func @transform_1(%arg0: i32) -> (i32, i32, i32) {
    %c0_i32 = arith.constant 0 : i32
    %c0_i32_0 = arith.constant 0 : i32
    %c0_i32_1 = arith.constant 0 : i32
    return %arg0, %c0_i32, %c0_i32_0 : i32, i32, i32
  }
  func.func @transform_2(%arg0: i32) -> (i32, i32) {
    %c0_i32 = arith.constant 0 : i32
    %c0_i32_0 = arith.constant 0 : i32
    %c0_i32_1 = arith.constant 0 : i32
    return %c0_i32, %c0_i32_0 : i32, i32
  }
  func.func @transform_3(%arg0: i32) -> (i32, i32) {
    %c0_i32 = arith.constant 0 : i32
    %c0_i32_0 = arith.constant 0 : i32
    %c0_i32_1 = arith.constant 0 : i32
    return %c0_i32, %c0_i32_0 : i32, i32
  }
  func.func @transform_4(%arg0: i32) -> (i32, i32, i32) {
    %c0_i32 = arith.constant 0 : i32
    %c0_i32_0 = arith.constant 0 : i32
    %c0_i32_1 = arith.constant 0 : i32
    return %arg0, %c0_i32, %c0_i32_0 : i32, i32, i32
  }
}

</mosaic_0001>

<llo_original>
// kernel: tile.18
$region0: #{tile.18}
  #allocation0 [shape = 's32[1]{0}', space=sflag, size = 0x4, scoped, tag = 'scoped memory for tile.18']
  %s0 = inlined_call_operand.vmem [shape: f32[4], index: 0, kind: input, shape index: {}]
  %s1 = inlined_call_operand.vmem [shape: f32[32,4], index: 1, kind: output, shape index: {}]
  // Predicated region
  $region2: #{tile.18} parent=0 // pred_check
    _
  $region3: #{tile.18} parent=0 // pred_check_branch
    %3 = sbr.rel (0) target = $region5
  $region4: #{tile.18} parent=0 // pred_region
    _
  $region5: #{tile.18} parent=0 // pred_fallthru
    _
  %v4 = vld [vmem:[%s0] ss:$0 sm:$0xff]
  %5 = vst [vmem:[%s1] sm:$0xff] %v4
  %s6 = scalar_lea.vmem %s1, 8
  %7 = vst [vmem:[%s6] sm:$0xff] %v4
  %s8 = scalar_lea.vmem %s1, 16
  %9 = vst [vmem:[%s8] sm:$0xff] %v4
  %s10 = scalar_lea.vmem %s1, 24
  %11 = vst [vmem:[%s10] sm:$0xff] %v4

// kernel: tile.19
$region0: #{tile.19}
  %s0 = inlined_call_operand.vmem [shape: f32[32,4], index: 0, kind: input, shape index: {}]
  %s1 = inlined_call_operand.vmem [shape: f32[1,128], index: 1, kind: output, shape index: {}]
  $region1: #{tile.19} parent=0
    #allocation0 [shape = 'u8[4096]{0}', space=vmem, size = 0x1000, scoped, tag = 'scoped mem for output reshape']
    %v2 = vld [vmem:[%s0] sm:$0x1]
    %vm3 = vcmask 31744
    %4 = vst.msk [vmem:[#allocation0] sm:$0x1] %vm3, %v2
    %s5 = scalar_lea.vmem %s0, 31
    %v6 = vld [vmem:[%s5] sm:$0x1]
    %7 = vrot.lane.b32.xlu0 %v6, 124
    %v8 = vpop.permute.xlu0 %7
    %vm9 = vcmask 1048544
    %10 = vst.msk [vmem:[#allocation0] sm:$0x1] %vm9, %v8
    %s11 = scalar_lea.vmem %s0, 30
    %v12 = vld [vmem:[%s11] sm:$0x1]
    %13 = vrot.lane.b32.xlu0 %v12, 120
    %v14 = vpop.permute.xlu0 %13
    %vm15 = vcmask 1015744
    %16 = vst.msk [vmem:[#allocation0] sm:$0x1] %vm15, %v14
    %s17 = scalar_lea.vmem %s0, 29
    %v18 = vld [vmem:[%s17] sm:$0x1]
    %19 = vrot.lane.b32.xlu0 %v18, 116
    %v20 = vpop.permute.xlu0 %19
    %vm21 = vcmask 982944
    %22 = vst.msk [vmem:[#allocation0] sm:$0x1] %vm21, %v20
    %s23 = scalar_lea.vmem %s0, 28
    %v24 = vld [vmem:[%s23] sm:$0x1]
    %25 = vrot.lane.b32.xlu0 %v24, 112
    %v26 = vpop.permute.xlu0 %25
    %vm27 = vcmask 950144
    %28 = vst.msk [vmem:[#allocation0] sm:$0x1] %vm27, %v26
    %s29 = scalar_lea.vmem %s0, 27
    %v30 = vld [vmem:[%s29] sm:$0x1]
    %31 = vrot.lane.b32.xlu0 %v30, 108
    %v32 = vpop.permute.xlu0 %31
    %vm33 = vcmask 917344
    %34 = vst.msk [vmem:[#allocation0] sm:$0x1] %vm33, %v32
    %s35 = scalar_lea.vmem %s0, 26
    %v36 = vld [vmem:[%s35] sm:$0x1]
    %37 = vrot.lane.b32.xlu0 %v36, 104
    %v38 = vpop.permute.xlu0 %37
    %vm39 = vcmask 884544
    %40 = vst.msk [vmem:[#allocation0] sm:$0x1] %vm39, %v38
    %s41 = scalar_lea.vmem %s0, 25
    %v42 = vld [vmem:[%s41] sm:$0x1]
    %43 = vrot.lane.b32.xlu0 %v42, 100
    %v44 = vpop.permute.xlu0 %43
    %vm45 = vcmask 851744
    %46 = vst.msk [vmem:[#allocation0] sm:$0x1] %vm45, %v44
    %s47 = scalar_lea.vmem %s0, 24
    %v48 = vld [vmem:[%s47] sm:$0x1]
    %49 = vrot.lane.b32.xlu0 %v48, 96
    %v50 = vpop.permute.xlu0 %49
    %vm51 = vcmask 818944
    %52 = vst.msk [vmem:[#allocation0] sm:$0x1] %vm51, %v50
    %s53 = scalar_lea.vmem %s0, 23
    %v54 = vld [vmem:[%s53] sm:$0x1]
    %55 = vrot.lane.b32.xlu0 %v54, 92
    %v56 = vpop.permute.xlu0 %55
    %vm57 = vcmask 786144
    %58 = vst.msk [vmem:[#allocation0] sm:$0x1] %vm57, %v56
    %s59 = scalar_lea.vmem %s0, 22
    %v60 = vld [vmem:[%s59] sm:$0x1]
    %61 = vrot.lane.b32.xlu0 %v60, 88
    %v62 = vpop.permute.xlu0 %61
    %vm63 = vcmask 753344
    %64 = vst.msk [vmem:[#allocation0] sm:$0x1] %vm63, %v62
    %s65 = scalar_lea.vmem %s0, 21
    %v66 = vld [vmem:[%s65] sm:$0x1]
    %67 = vrot.lane.b32.xlu0 %v66, 84
    %v68 = vpop.permute.xlu0 %67
    %vm69 = vcmask 720544
    %70 = vst.msk [vmem:[#allocation0] sm:$0x1] %vm69, %v68
    %s71 = scalar_lea.vmem %s0, 20
    %v72 = vld [vmem:[%s71] sm:$0x1]
    %73 = vrot.lane.b32.xlu0 %v72, 80
    %v74 = vpop.permute.xlu0 %73
    %vm75 = vcmask 687744
    %76 = vst.msk [vmem:[#allocation0] sm:$0x1] %vm75, %v74
    %s77 = scalar_lea.vmem %s0, 19
    %v78 = vld [vmem:[%s77] sm:$0x1]
    %79 = vrot.lane.b32.xlu0 %v78, 76
    %v80 = vpop.permute.xlu0 %79
    %vm81 = vcmask 654944
    %82 = vst.msk [vmem:[#allocation0] sm:$0x1] %vm81, %v80
    %s83 = scalar_lea.vmem %s0, 18
    %v84 = vld [vmem:[%s83] sm:$0x1]
    %85 = vrot.lane.b32.xlu0 %v84, 72
    %v86 = vpop.permute.xlu0 %85
    %vm87 = vcmask 622144
    %88 = vst.msk [vmem:[#allocation0] sm:$0x1] %vm87, %v86
    %s89 = scalar_lea.vmem %s0, 17
    %v90 = vld [vmem:[%s89] sm:$0x1]
    %91 = vrot.lane.b32.xlu0 %v90, 68
    %v92 = vpop.permute.xlu0 %91
    %vm93 = vcmask 589344
    %94 = vst.msk [vmem:[#allocation0] sm:$0x1] %vm93, %v92
    %s95 = scalar_lea.vmem %s0, 16
    %v96 = vld [vmem:[%s95] sm:$0x1]
    %97 = vrot.lane.b32.xlu0 %v96, 64
    %v98 = vpop.permute.xlu0 %97
    %vm99 = vcmask 556544
    %100 = vst.msk [vmem:[#allocation0] sm:$0x1] %vm99, %v98
    %s101 = scalar_lea.vmem %s0, 15
    %v102 = vld [vmem:[%s101] sm:$0x1]
    %103 = vrot.lane.b32.xlu0 %v102, 60
    %v104 = vpop.permute.xlu0 %103
    %vm105 = vcmask 523744
    %106 = vst.msk [vmem:[#allocation0] sm:$0x1] %vm105, %v104
    %s107 = scalar_lea.vmem %s0, 14
    %v108 = vld [vmem:[%s107] sm:$0x1]
    %109 = vrot.lane.b32.xlu0 %v108, 56
    %v110 = vpop.permute.xlu0 %109
    %vm111 = vcmask 490944
    %112 = vst.msk [vmem:[#allocation0] sm:$0x1] %vm111, %v110
    %s113 = scalar_lea.vmem %s0, 13
    %v114 = vld [vmem:[%s113] sm:$0x1]
    %115 = vrot.lane.b32.xlu0 %v114, 52
    %v116 = vpop.permute.xlu0 %115
    %vm117 = vcmask 458144
    %118 = vst.msk [vmem:[#allocation0] sm:$0x1] %vm117, %v116
    %s119 = scalar_lea.vmem %s0, 12
    %v120 = vld [vmem:[%s119] sm:$0x1]
    %121 = vrot.lane.b32.xlu0 %v120, 48
    %v122 = vpop.permute.xlu0 %121
    %vm123 = vcmask 425344
    %124 = vst.msk [vmem:[#allocation0] sm:$0x1] %vm123, %v122
    %s125 = scalar_lea.vmem %s0, 11
    %v126 = vld [vmem:[%s125] sm:$0x1]
    %127 = vrot.lane.b32.xlu0 %v126, 44
    %v128 = vpop.permute.xlu0 %127
    %vm129 = vcmask 392544
    %130 = vst.msk [vmem:[#allocation0] sm:$0x1] %vm129, %v128
    %s131 = scalar_lea.vmem %s0, 10
    %v132 = vld [vmem:[%s131] sm:$0x1]
    %133 = vrot.lane.b32.xlu0 %v132, 40
    %v134 = vpop.permute.xlu0 %133
    %vm135 = vcmask 359744
    %136 = vst.msk [vmem:[#allocation0] sm:$0x1] %vm135, %v134
    %s137 = scalar_lea.vmem %s0, 9
    %v138 = vld [vmem:[%s137] sm:$0x1]
    %139 = vrot.lane.b32.xlu0 %v138, 36
    %v140 = vpop.permute.xlu0 %139
    %vm141 = vcmask 326944
    %142 = vst.msk [vmem:[#allocation0] sm:$0x1] %vm141, %v140
    %s143 = scalar_lea.vmem %s0, 8
    %v144 = vld [vmem:[%s143] sm:$0x1]
    %145 = vrot.lane.b32.xlu0 %v144, 32
    %v146 = vpop.permute.xlu0 %145
    %vm147 = vcmask 294144
    %148 = vst.msk [vmem:[#allocation0] sm:$0x1] %vm147, %v146
    %s149 = scalar_lea.vmem %s0, 7
    %v150 = vld [vmem:[%s149] sm:$0x1]
    %151 = vrot.lane.b32.xlu0 %v150, 28
    %v152 = vpop.permute.xlu0 %151
    %vm153 = vcmask 261344
    %154 = vst.msk [vmem:[#allocation0] sm:$0x1] %vm153, %v152
    %s155 = scalar_lea.vmem %s0, 6
    %v156 = vld [vmem:[%s155] sm:$0x1]
    %157 = vrot.lane.b32.xlu0 %v156, 24
    %v158 = vpop.permute.xlu0 %157
    %vm159 = vcmask 228544
    %160 = vst.msk [vmem:[#allocation0] sm:$0x1] %vm159, %v158
    %s161 = scalar_lea.vmem %s0, 5
    %v162 = vld [vmem:[%s161] sm:$0x1]
    %163 = vrot.lane.b32.xlu0 %v162, 20
    %v164 = vpop.permute.xlu0 %163
    %vm165 = vcmask 195744
    %166 = vst.msk [vmem:[#allocation0] sm:$0x1] %vm165, %v164
    %s167 = scalar_lea.vmem %s0, 4
    %v168 = vld [vmem:[%s167] sm:$0x1]
    %169 = vrot.lane.b32.xlu0 %v168, 16
    %v170 = vpop.permute.xlu0 %169
    %vm171 = vcmask 162944
    %172 = vst.msk [vmem:[#allocation0] sm:$0x1] %vm171, %v170
    %s173 = scalar_lea.vmem %s0, 3
    %v174 = vld [vmem:[%s173] sm:$0x1]
    %175 = vrot.lane.b32.xlu0 %v174, 12
    %v176 = vpop.permute.xlu0 %175
    %vm177 = vcmask 130144
    %178 = vst.msk [vmem:[#allocation0] sm:$0x1] %vm177, %v176
    %s179 = scalar_lea.vmem %s0, 2
    %v180 = vld [vmem:[%s179] sm:$0x1]
    %181 = vrot.lane.b32.xlu0 %v180, 8
    %v182 = vpop.permute.xlu0 %181
    %vm183 = vcmask 97344
    %184 = vst.msk [vmem:[#allocation0] sm:$0x1] %vm183, %v182
    %s185 = scalar_lea.vmem %s0, 1
    %v186 = vld [vmem:[%s185] sm:$0x1]
    %187 = vrot.lane.b32.xlu0 %v186, 4
    %v188 = vpop.permute.xlu0 %187
    %vm189 = vcmask 64544
    %190 = vst.msk [vmem:[#allocation0] sm:$0x1] %vm189, %v188
    %s192 = sshllo.u32 0, 1
    %v194 = vld [vmem:[#allocation0] sm:%s192]
    %s195 = sshllo.u32 0, 1
    %196 = vst [vmem:[%s1] sm:%s195] %v194

// kernel: block_forward.5
$region0: #{block_forward.5}
  #allocation0 [shape = 'u32[]', space=smem, size = 0x4, offset = 0x4, fixed_abs, tag = 'smem constant byte address 0x4 - core index']
  #allocation1 [shape = 'u32[144,128]{1,0:T(1,128)}', space=vmem, size = 0x12000, scoped, tag = 'internal scratch']
  %s0 = inlined_call_operand.vmem [shape: bf16[2,8,128], index: 0, kind: input, shape index: {}]
  %s1 = inlined_call_operand.vmem [shape: f32[2,8,128], index: 1, kind: input, shape index: {}]
  %s2 = inlined_call_operand.vmem [shape: f32[1,128], index: 2, kind: input, shape index: {}]
  %s3 = inlined_call_operand.vmem [shape: f32[1,128], index: 3, kind: input, shape index: {}]
  %s4 = inlined_call_operand.vmem [shape: f32[2,8,128], index: 4, kind: output, shape index: {}]
  %s5 = sld [smem:[#allocation0]]
  $region49: #{block_forward.5} parent=0
    _
  %s7 = ssub.s32 1, %s5
  %s8 = scalar_select 0, %s7, %s5
  loop: start=0, step=1, limit=4
  $region2: #{block_forward.5} parent=0 // loop_pre_header
    _
  $region3: #{block_forward.5} parent=0 // loop_header
    %s10 = sphi 0, %s14
    %p11 = scmp.ge.s32.totalorder %s10, 4
    %s20 = sphi 0, %s22
    %s23 = sphi 0, %s20
    %s24 = sphi 0, %s23
    %s40 = sphi 0, %s24
    %s46 = sphi 0, %s48
    %s49 = sphi 0, %s46
    %s50 = sphi 0, %s49
    %s66 = sphi 0, %s50
    %s70 = sphi 0, %s70
    %s72 = sphi 0, %s70
    %s73 = sphi 0, %s72
    %s87 = sphi 0, %s73
    %s91 = sphi 0, %s91
    %s93 = sphi 0, %s91
    %s94 = sphi 0, %s93
    %s108 = sphi 0, %s94
    %s114 = sphi 0, %s116
    %s117 = sphi 0, %s114
    %s118 = sphi 0, %s117
    %s134 = sphi 0, %s118
  $region4: #{block_forward.5} parent=0 // loop_header_branch
    %13 = sbr.rel (%p11) target = $region8
  $region5: #{block_forward.5} parent=0 // loop_body
    %s15 = ssub.s32 %s10, 1
    %s16 = ssub.s32 %s10, 2
    %s17 = sadd.s32 %s10, 1
    %s18 = ssub.s32 %s10, %s17
    %p19 = scmp.eq.s32.totalorder %s18, 0
    %s21 = sadd.s32 %s20, 1
    %s22 = scalar_select %p19, %s20, %s21
    %p25 = pneg %p19
    %p26 = scmp.eq.s32.totalorder %s10, 1
    %p27 = por %p25, %p26
    %p28 = scmp.ne.s32.totalorder %s20, %s23
    %p29 = scmp.eq.s32.totalorder %s10, 0
    %p30 = por %p28, %p29
    %p31 = scmp.ne.s32.totalorder %s20, %s23
    %p32 = scmp.eq.s32.totalorder %s15, 1
    %p33 = por %p31, %p32
    %p34 = scmp.ne.s32.totalorder %s23, %s24
    %p35 = scmp.eq.s32.totalorder %s15, 0
    %p36 = por %p34, %p35
    %p37 = scmp.ne.s32.totalorder %s23, %s24
    %p38 = scmp.eq.s32.totalorder %s16, 1
    %p39 = por %p37, %p38
    %p41 = scmp.ne.s32.totalorder %s24, %s40
    %p42 = scmp.eq.s32.totalorder %s16, 0
    %p43 = por %p41, %p42
    %s44 = ssub.s32 %s10, %s17
    %p45 = scmp.eq.s32.totalorder %s44, 0
    %s47 = sadd.s32 %s46, 1
    %s48 = scalar_select %p45, %s46, %s47
    %p51 = pneg %p45
    %p52 = scmp.eq.s32.totalorder %s10, 1
    %p53 = por %p51, %p52
    %p54 = scmp.ne.s32.totalorder %s46, %s49
    %p55 = scmp.eq.s32.totalorder %s10, 0
    %p56 = por %p54, %p55
    %p57 = scmp.ne.s32.totalorder %s46, %s49
    %p58 = scmp.eq.s32.totalorder %s15, 1
    %p59 = por %p57, %p58
    %p60 = scmp.ne.s32.totalorder %s49, %s50
    %p61 = scmp.eq.s32.totalorder %s15, 0
    %p62 = por %p60, %p61
    %p63 = scmp.ne.s32.totalorder %s49, %s50
    %p64 = scmp.eq.s32.totalorder %s16, 1
    %p65 = por %p63, %p64
    %p67 = scmp.ne.s32.totalorder %s50, %s66
    %p68 = scmp.eq.s32.totalorder %s16, 0
    %p69 = por %p67, %p68
    %s71 = sadd.s32 %s70, 1
    %p74 = scmp.eq.s32.totalorder %s10, 1
    %p75 = scmp.ne.s32.totalorder %s70, %s72
    %p76 = scmp.eq.s32.totalorder %s10, 0
    %p77 = por %p75, %p76
    %p78 = scmp.ne.s32.totalorder %s70, %s72
    %p79 = scmp.eq.s32.totalorder %s15, 1
    %p80 = por %p78, %p79
    %p81 = scmp.ne.s32.totalorder %s72, %s73
    %p82 = scmp.eq.s32.totalorder %s15, 0
    %p83 = por %p81, %p82
    %p84 = scmp.ne.s32.totalorder %s72, %s73
    %p85 = scmp.eq.s32.totalorder %s16, 1
    %p86 = por %p84, %p85
    %p88 = scmp.ne.s32.totalorder %s73, %s87
    %p89 = scmp.eq.s32.totalorder %s16, 0
    %p90 = por %p88, %p89
    %s92 = sadd.s32 %s91, 1
    %p95 = scmp.eq.s32.totalorder %s10, 1
    %p96 = scmp.ne.s32.totalorder %s91, %s93
    %p97 = scmp.eq.s32.totalorder %s10, 0
    %p98 = por %p96, %p97
    %p99 = scmp.ne.s32.totalorder %s91, %s93
    %p100 = scmp.eq.s32.totalorder %s15, 1
    %p101 = por %p99, %p100
    %p102 = scmp.ne.s32.totalorder %s93, %s94
    %p103 = scmp.eq.s32.totalorder %s15, 0
    %p104 = por %p102, %p103
    %p105 = scmp.ne.s32.totalorder %s93, %s94
    %p106 = scmp.eq.s32.totalorder %s16, 1
    %p107 = por %p105, %p106
    %p109 = scmp.ne.s32.totalorder %s94, %s108
    %p110 = scmp.eq.s32.totalorder %s16, 0
    %p111 = por %p109, %p110
    %s112 = ssub.s32 %s10, %s17
    %p113 = scmp.eq.s32.totalorder %s112, 0
    %s115 = sadd.s32 %s114, 1
    %s116 = scalar_select %p113, %s114, %s115
    %p119 = pneg %p113
    %p120 = scmp.eq.s32.totalorder %s10, 1
    %p121 = por %p119, %p120
    %p122 = scmp.ne.s32.totalorder %s114, %s117
    %p123 = scmp.eq.s32.totalorder %s10, 0
    %p124 = por %p122, %p123
    %p125 = scmp.ne.s32.totalorder %s114, %s117
    %p126 = scmp.eq.s32.totalorder %s15, 1
    %p127 = por %p125, %p126
    %p128 = scmp.ne.s32.totalorder %s117, %s118
    %p129 = scmp.eq.s32.totalorder %s15, 0
    %p130 = por %p128, %p129
    %p131 = scmp.ne.s32.totalorder %s117, %s118
    %p132 = scmp.eq.s32.totalorder %s16, 1
    %p133 = por %p131, %p132
    %p135 = scmp.ne.s32.totalorder %s118, %s134
    %p136 = scmp.eq.s32.totalorder %s16, 0
    %p137 = por %p135, %p136
    %p138 = scmp.le.s32.totalorder 1, %s10
    %p139 = scmp.lt.s32.totalorder %s10, 3
    %p140 = pnand %p138, %p139
    %p141 = pneg %p140
    // Predicated region
    $region9: #{block_forward.5} parent=5 // pred_check
      _
    $region10: #{block_forward.5} parent=5 // pred_check_branch
      %143 = sbr.rel (%p140) target = $region12
    $region11: #{block_forward.5} parent=5 // pred_region
      %s144 = ssub.s32 %s10, 1
      // Predicated region
      $region13: #{block_forward.5} parent=11 // pred_check
        %p145 = pneg %p83
      $region14: #{block_forward.5} parent=11 // pred_check_branch
        %147 = sbr.rel (%p145) target = $region16
      $region15: #{block_forward.5} parent=11 // pred_region
        _
      $region16: #{block_forward.5} parent=11 // pred_fallthru
        _
      // Predicated region
      $region17: #{block_forward.5} parent=11 // pred_check
        %p148 = pneg %p104
      $region18: #{block_forward.5} parent=11 // pred_check_branch
        %150 = sbr.rel (%p148) target = $region20
      $region19: #{block_forward.5} parent=11 // pred_region
        _
      $region20: #{block_forward.5} parent=11 // pred_fallthru
        _
    $region12: #{block_forward.5} parent=5 // pred_fallthru
      _
    %p151 = scmp.lt.s32.totalorder %s10, 2
    // Predicated region
    $region21: #{block_forward.5} parent=5 // pred_check
      %p152 = pneg %p151
    $region22: #{block_forward.5} parent=5 // pred_check_branch
      %154 = sbr.rel (%p152) target = $region24
    $region23: #{block_forward.5} parent=5 // pred_region
      // Predicated region
      $region25: #{block_forward.5} parent=23 // pred_check
        %p155 = pneg %p30
      $region26: #{block_forward.5} parent=23 // pred_check_branch
        %157 = sbr.rel (%p155) target = $region28
      $region27: #{block_forward.5} parent=23 // pred_region
        %p158 = scmp.lt.s32.totalorder %s10, 1
        %s159 = scalar_select %p158, %s10, 1
        %s160 = smul.addr %s159, 4
        %s161 = scalar_lea.vmem %s0, %s160
      $region28: #{block_forward.5} parent=23 // pred_fallthru
        _
      // Predicated region
      $region29: #{block_forward.5} parent=23 // pred_check
        %p162 = pneg %p56
      $region30: #{block_forward.5} parent=23 // pred_check_branch
        %164 = sbr.rel (%p162) target = $region32
      $region31: #{block_forward.5} parent=23 // pred_region
        %p165 = scmp.lt.s32.totalorder %s10, 1
        %s166 = scalar_select %p165, %s10, 1
        %s167 = smul.addr %s166, 8
        %s168 = scalar_lea.vmem %s1, %s167
      $region32: #{block_forward.5} parent=23 // pred_fallthru
        _
    $region24: #{block_forward.5} parent=5 // pred_fallthru
      _
    %p169 = scmp.le.s32.totalorder 1, %s10
    %p170 = scmp.lt.s32.totalorder %s10, 3
    %p171 = pnand %p169, %p170
    %p172 = pneg %p171
    // Predicated region
    $region33: #{block_forward.5} parent=5 // pred_check
      _
    $region34: #{block_forward.5} parent=5 // pred_check_branch
      %174 = sbr.rel (%p171) target = $region36
    $region35: #{block_forward.5} parent=5 // pred_region
      %s175 = ssub.s32 %s10, 1
      %p176 = scmp.lt.s32.totalorder %s15, 1
      %s177 = scalar_select %p176, %s15, 1
      %s178 = smul.addr %s177, 4
      %s179 = scalar_lea.vmem %s0, %s178
      %p180 = pneg %p36
      %p181 = pneg %p33
      %p182 = scmp.lt.s32.totalorder %s15, 1
      %s183 = scalar_select %p182, %s15, 1
      %s184 = smul.addr %s183, 8
      %s185 = scalar_lea.vmem %s1, %s184
      %p186 = pneg %p62
      %p187 = pneg %p59
      %p188 = pneg %p83
      %p189 = pneg %p80
      %p190 = pneg %p104
      %p191 = pneg %p101
      %p192 = pneg %p130
      %p193 = pneg %p127
      %p194 = scmp.lt.s32.totalorder %s15, 1
      %s195 = scalar_select %p194, %s15, 1
      %s196 = smul.addr %s195, 8
      %s197 = scalar_lea.vmem %s4, %s196
      %p198 = scmp.lt.s32.totalorder %s15, 1
      %s199 = scalar_select %p198, %s15, 1
      %s200 = smul.addr %s199, 4
      %s201 = scalar_lea.vmem %s0, %s200
      %p202 = scmp.lt.s32.totalorder %s15, 1
      %s203 = scalar_select %p202, %s15, 1
      %s204 = smul.addr %s203, 8
      %s205 = scalar_lea.vmem %s1, %s204
      %p206 = scmp.lt.s32.totalorder %s15, 1
      %s207 = scalar_select %p206, %s15, 1
      %s208 = smul.addr %s207, 8
      %s209 = scalar_lea.vmem %s4, %s208
      %v210 = vld [vmem:[%s201] sm:$0xf]
      %v211 = vunpack.c.l.bf16 %v210
      %v212 = vld [vmem:[%s2] sm:$0x1]
      %v214 = vlaneseq
      %v215 = vshrl.u32 %v214, 7
      %v216 = vsub.s32 0, %v215
      %v217 = vrot.slane %v212, %v216
      %v219 = vmul.f32 %v211, %v217
      %v220 = vld [vmem:[%s3] sm:$0x1]
      %v222 = vlaneseq
      %v223 = vshrl.u32 %v222, 7
      %v224 = vsub.s32 0, %v223
      %v225 = vrot.slane %v220, %v224
      %v227 = vadd.f32 %v219, %v225
      %v228 = vld [vmem:[%s205] sm:$0xff]
      %v229 = vadd.f32 %v227, %v228
      %v230 = vmax.f32 %v229, 0.0
      %231 = vst [vmem:[%s209] sm:$0xff] %v230
      %p232 = scmp.lt.s32.totalorder %s15, 1
      %s233 = scalar_select %p232, %s15, 1
      %s234 = smul.addr %s233, 8
      %s235 = scalar_lea.vmem %s4, %s234
      // Predicated region
      $region37: #{block_forward.5} parent=35 // pred_check
        %p236 = pneg %p127
      $region38: #{block_forward.5} parent=35 // pred_check_branch
        %238 = sbr.rel (%p236) target = $region40
      $region39: #{block_forward.5} parent=35 // pred_region
        _
      $region40: #{block_forward.5} parent=35 // pred_fallthru
        _
    $region36: #{block_forward.5} parent=5 // pred_fallthru
      _
    %p239 = scmp.le.s32.totalorder 2, %s10
    // Predicated region
    $region41: #{block_forward.5} parent=5 // pred_check
      %p240 = pneg %p239
    $region42: #{block_forward.5} parent=5 // pred_check_branch
      %242 = sbr.rel (%p240) target = $region44
    $region43: #{block_forward.5} parent=5 // pred_region
      %s243 = ssub.s32 %s10, 2
      // Predicated region
      $region45: #{block_forward.5} parent=43 // pred_check
        %p244 = pneg %p133
      $region46: #{block_forward.5} parent=43 // pred_check_branch
        %246 = sbr.rel (%p244) target = $region48
      $region47: #{block_forward.5} parent=43 // pred_region
        %p247 = scmp.lt.s32.totalorder %s16, 1
        %s248 = scalar_select %p247, %s16, 1
        %s249 = smul.addr %s248, 8
        %s250 = scalar_lea.vmem %s4, %s249
      $region48: #{block_forward.5} parent=43 // pred_fallthru
        _
    $region44: #{block_forward.5} parent=5 // pred_fallthru
      _
  $region6: #{block_forward.5} parent=0 // loop_footer
    %s14 = sadd.s32 1, %s10
  $region7: #{block_forward.5} parent=0 // loop_footer_branch
    %9 = sbr.rel target = $region3
  $region8: #{block_forward.5} parent=0 // loop_exit
    _

// kernel: block_forward.3
$region0: #{block_forward.3}
  #allocation0 [shape = 'u32[]', space=smem, size = 0x4, offset = 0x4, fixed_abs, tag = 'smem constant byte address 0x4 - core index']
  #allocation1 [shape = 'u32[144,128]{1,0:T(1,128)}', space=vmem, size = 0x12000, scoped, tag = 'internal scratch']
  #allocation2 [shape = 'f32[18,18,4]{2,1,0:T(8,128)}', space=vmem, size = 0x36000, scoped, tag = 'scratch operand']
  %s0 = inlined_call_operand.vmem [shape: bf16[2,256,4], index: 0, kind: input, shape index: {}]
  %s1 = inlined_call_operand.vmem [shape: bf16[36,4], index: 1, kind: input, shape index: {}]
  %s2 = inlined_call_operand.vmem [shape: f32[1,4], index: 2, kind: input, shape index: {}]
  %s3 = inlined_call_operand.vmem [shape: f32[1,4], index: 3, kind: input, shape index: {}]
  %s4 = inlined_call_operand.vmem [shape: bf16[2,256,4], index: 4, kind: output, shape index: {0}]
  %s5 = inlined_call_operand.vmem [shape: f32[2,2,4], index: 5, kind: output, shape index: {1}]
  %6 = xla_tuple %s4, %s5
  %s7 = sld [smem:[#allocation0]]
  $region57: #{block_forward.3} parent=0
    _
  %s9 = ssub.s32 1, %s7
  %s10 = scalar_select 0, %s9, %s7
  loop: start=0, step=1, limit=4
  $region2: #{block_forward.3} parent=0 // loop_pre_header
    _
  $region3: #{block_forward.3} parent=0 // loop_header
    %s12 = sphi 0, %s16
    %p13 = scmp.ge.s32.totalorder %s12, 4
    %s22 = sphi 0, %s24
    %s25 = sphi 0, %s22
    %s26 = sphi 0, %s25
    %s42 = sphi 0, %s26
    %s46 = sphi 0, %s46
    %s48 = sphi 0, %s46
    %s49 = sphi 0, %s48
    %s63 = sphi 0, %s49
    %s67 = sphi 0, %s67
    %s69 = sphi 0, %s67
    %s70 = sphi 0, %s69
    %s84 = sphi 0, %s70
    %s88 = sphi 0, %s88
    %s90 = sphi 0, %s88
    %s91 = sphi 0, %s90
    %s105 = sphi 0, %s91
    %s111 = sphi 0, %s113
    %s114 = sphi 0, %s111
    %s115 = sphi 0, %s114
    %s131 = sphi 0, %s115
    %s137 = sphi 0, %s139
    %s140 = sphi 0, %s137
    %s141 = sphi 0, %s140
    %s157 = sphi 0, %s141
  $region4: #{block_forward.3} parent=0 // loop_header_branch
    %15 = sbr.rel (%p13) target = $region8
  $region5: #{block_forward.3} parent=0 // loop_body
    %s17 = ssub.s32 %s12, 1
    %s18 = ssub.s32 %s12, 2
    %s19 = sadd.s32 %s12, 1
    %s20 = ssub.s32 %s12, %s19
    %p21 = scmp.eq.s32.totalorder %s20, 0
    %s23 = sadd.s32 %s22, 1
    %s24 = scalar_select %p21, %s22, %s23
    %p27 = pneg %p21
    %p28 = scmp.eq.s32.totalorder %s12, 1
    %p29 = por %p27, %p28
    %p30 = scmp.ne.s32.totalorder %s22, %s25
    %p31 = scmp.eq.s32.totalorder %s12, 0
    %p32 = por %p30, %p31
    %p33 = scmp.ne.s32.totalorder %s22, %s25
    %p34 = scmp.eq.s32.totalorder %s17, 1
    %p35 = por %p33, %p34
    %p36 = scmp.ne.s32.totalorder %s25, %s26
    %p37 = scmp.eq.s32.totalorder %s17, 0
    %p38 = por %p36, %p37
    %p39 = scmp.ne.s32.totalorder %s25, %s26
    %p40 = scmp.eq.s32.totalorder %s18, 1
    %p41 = por %p39, %p40
    %p43 = scmp.ne.s32.totalorder %s26, %s42
    %p44 = scmp.eq.s32.totalorder %s18, 0
    %p45 = por %p43, %p44
    %s47 = sadd.s32 %s46, 1
    %p50 = scmp.eq.s32.totalorder %s12, 1
    %p51 = scmp.ne.s32.totalorder %s46, %s48
    %p52 = scmp.eq.s32.totalorder %s12, 0
    %p53 = por %p51, %p52
    %p54 = scmp.ne.s32.totalorder %s46, %s48
    %p55 = scmp.eq.s32.totalorder %s17, 1
    %p56 = por %p54, %p55
    %p57 = scmp.ne.s32.totalorder %s48, %s49
    %p58 = scmp.eq.s32.totalorder %s17, 0
    %p59 = por %p57, %p58
    %p60 = scmp.ne.s32.totalorder %s48, %s49
    %p61 = scmp.eq.s32.totalorder %s18, 1
    %p62 = por %p60, %p61
    %p64 = scmp.ne.s32.totalorder %s49, %s63
    %p65 = scmp.eq.s32.totalorder %s18, 0
    %p66 = por %p64, %p65
    %s68 = sadd.s32 %s67, 1
    %p71 = scmp.eq.s32.totalorder %s12, 1
    %p72 = scmp.ne.s32.totalorder %s67, %s69
    %p73 = scmp.eq.s32.totalorder %s12, 0
    %p74 = por %p72, %p73
    %p75 = scmp.ne.s32.totalorder %s67, %s69
    %p76 = scmp.eq.s32.totalorder %s17, 1
    %p77 = por %p75, %p76
    %p78 = scmp.ne.s32.totalorder %s69, %s70
    %p79 = scmp.eq.s32.totalorder %s17, 0
    %p80 = por %p78, %p79
    %p81 = scmp.ne.s32.totalorder %s69, %s70
    %p82 = scmp.eq.s32.totalorder %s18, 1
    %p83 = por %p81, %p82
    %p85 = scmp.ne.s32.totalorder %s70, %s84
    %p86 = scmp.eq.s32.totalorder %s18, 0
    %p87 = por %p85, %p86
    %s89 = sadd.s32 %s88, 1
    %p92 = scmp.eq.s32.totalorder %s12, 1
    %p93 = scmp.ne.s32.totalorder %s88, %s90
    %p94 = scmp.eq.s32.totalorder %s12, 0
    %p95 = por %p93, %p94
    %p96 = scmp.ne.s32.totalorder %s88, %s90
    %p97 = scmp.eq.s32.totalorder %s17, 1
    %p98 = por %p96, %p97
    %p99 = scmp.ne.s32.totalorder %s90, %s91
    %p100 = scmp.eq.s32.totalorder %s17, 0
    %p101 = por %p99, %p100
    %p102 = scmp.ne.s32.totalorder %s90, %s91
    %p103 = scmp.eq.s32.totalorder %s18, 1
    %p104 = por %p102, %p103
    %p106 = scmp.ne.s32.totalorder %s91, %s105
    %p107 = scmp.eq.s32.totalorder %s18, 0
    %p108 = por %p106, %p107
    %s109 = ssub.s32 %s12, %s19
    %p110 = scmp.eq.s32.totalorder %s109, 0
    %s112 = sadd.s32 %s111, 1
    %s113 = scalar_select %p110, %s111, %s112
    %p116 = pneg %p110
    %p117 = scmp.eq.s32.totalorder %s12, 1
    %p118 = por %p116, %p117
    %p119 = scmp.ne.s32.totalorder %s111, %s114
    %p120 = scmp.eq.s32.totalorder %s12, 0
    %p121 = por %p119, %p120
    %p122 = scmp.ne.s32.totalorder %s111, %s114
    %p123 = scmp.eq.s32.totalorder %s17, 1
    %p124 = por %p122, %p123
    %p125 = scmp.ne.s32.totalorder %s114, %s115
    %p126 = scmp.eq.s32.totalorder %s17, 0
    %p127 = por %p125, %p126
    %p128 = scmp.ne.s32.totalorder %s114, %s115
    %p129 = scmp.eq.s32.totalorder %s18, 1
    %p130 = por %p128, %p129
    %p132 = scmp.ne.s32.totalorder %s115, %s131
    %p133 = scmp.eq.s32.totalorder %s18, 0
    %p134 = por %p132, %p133
    %s135 = ssub.s32 %s12, %s19
    %p136 = scmp.eq.s32.totalorder %s135, 0
    %s138 = sadd.s32 %s137, 1
    %s139 = scalar_select %p136, %s137, %s138
    %p142 = pneg %p136
    %p143 = scmp.eq.s32.totalorder %s12, 1
    %p144 = por %p142, %p143
    %p145 = scmp.ne.s32.totalorder %s137, %s140
    %p146 = scmp.eq.s32.totalorder %s12, 0
    %p147 = por %p145, %p146
    %p148 = scmp.ne.s32.totalorder %s137, %s140
    %p149 = scmp.eq.s32.totalorder %s17, 1
    %p150 = por %p148, %p149
    %p151 = scmp.ne.s32.totalorder %s140, %s141
    %p152 = scmp.eq.s32.totalorder %s17, 0
    %p153 = por %p151, %p152
    %p154 = scmp.ne.s32.totalorder %s140, %s141
    %p155 = scmp.eq.s32.totalorder %s18, 1
    %p156 = por %p154, %p155
    %p158 = scmp.ne.s32.totalorder %s141, %s157
    %p159 = scmp.eq.s32.totalorder %s18, 0
    %p160 = por %p158, %p159
    %p161 = scmp.le.s32.totalorder 1, %s12
    %p162 = scmp.lt.s32.totalorder %s12, 3
    %p163 = pnand %p161, %p162
    %p164 = pneg %p163
    // Predicated region
    $region9: #{block_forward.3} parent=5 // pred_check
      _
    $region10: #{block_forward.3} parent=5 // pred_check_branch
      %166 = sbr.rel (%p163) target = $region12
    $region11: #{block_forward.3} parent=5 // pred_region
      %s167 = ssub.s32 %s12, 1
      // Predicated region
      $region13: #{block_forward.3} parent=11 // pred_check
        %p168 = pneg %p59
      $region14: #{block_forward.3} parent=11 // pred_check_branch
        %170 = sbr.rel (%p168) target = $region16
      $region15: #{block_forward.3} parent=11 // pred_region
        _
      $region16: #{block_forward.3} parent=11 // pred_fallthru
        _
      // Predicated region
      $region17: #{block_forward.3} parent=11 // pred_check
        %p171 = pneg %p80
      $region18: #{block_forward.3} parent=11 // pred_check_branch
        %173 = sbr.rel (%p171) target = $region20
      $region19: #{block_forward.3} parent=11 // pred_region
        _
      $region20: #{block_forward.3} parent=11 // pred_fallthru
        _
      // Predicated region
      $region21: #{block_forward.3} parent=11 // pred_check
        %p174 = pneg %p101
      $region22: #{block_forward.3} parent=11 // pred_check_branch
        %176 = sbr.rel (%p174) target = $region24
      $region23: #{block_forward.3} parent=11 // pred_region
        _
      $region24: #{block_forward.3} parent=11 // pred_fallthru
        _
    $region12: #{block_forward.3} parent=5 // pred_fallthru
      _
    %p177 = scmp.lt.s32.totalorder %s12, 2
    // Predicated region
    $region25: #{block_forward.3} parent=5 // pred_check
      %p178 = pneg %p177
    $region26: #{block_forward.3} parent=5 // pred_check_branch
      %180 = sbr.rel (%p178) target = $region28
    $region27: #{block_forward.3} parent=5 // pred_region
      // Predicated region
      $region29: #{block_forward.3} parent=27 // pred_check
        %p181 = pneg %p32
      $region30: #{block_forward.3} parent=27 // pred_check_branch
        %183 = sbr.rel (%p181) target = $region32
      $region31: #{block_forward.3} parent=27 // pred_region
        %p184 = scmp.lt.s32.totalorder %s12, 1
        %s185 = scalar_select %p184, %s12, 1
        %s186 = smul.addr %s185, 32
        %s187 = smul.addr %s186, 4
        %s188 = scalar_lea.vmem %s0, %s187
      $region32: #{block_forward.3} parent=27 // pred_fallthru
        _
    $region28: #{block_forward.3} parent=5 // pred_fallthru
      _
    %p189 = scmp.le.s32.totalorder 1, %s12
    %p190 = scmp.lt.s32.totalorder %s12, 3
    %p191 = pnand %p189, %p190
    %p192 = pneg %p191
    // Predicated region
    $region33: #{block_forward.3} parent=5 // pred_check
      _
    $region34: #{block_forward.3} parent=5 // pred_check_branch
      %194 = sbr.rel (%p191) target = $region36
    $region35: #{block_forward.3} parent=5 // pred_region
      %s195 = ssub.s32 %s12, 1
      %p196 = scmp.lt.s32.totalorder %s17, 1
      %s197 = scalar_select %p196, %s17, 1
      %s198 = smul.addr %s197, 32
      %s199 = smul.addr %s198, 4
      %s200 = scalar_lea.vmem %s0, %s199
      %p201 = pneg %p38
      %p202 = pneg %p35
      %p203 = pneg %p59
      %p204 = pneg %p56
      %p205 = pneg %p80
      %p206 = pneg %p77
      %p207 = pneg %p101
      %p208 = pneg %p98
      %p209 = pneg %p127
      %p210 = pneg %p124
      %p211 = scmp.lt.s32.totalorder %s17, 1
      %s212 = scalar_select %p211, %s17, 1
      %s213 = smul.addr %s212, 32
      %s214 = smul.addr %s213, 4
      %s215 = scalar_lea.vmem %s4, %s214
      %p216 = pneg %p153
      %p217 = pneg %p150
      %p218 = scmp.lt.s32.totalorder %s17, 1
      %s219 = scalar_select %p218, %s17, 1
      %s220 = smul.addr %s219, 2
      %s221 = scalar_lea.vmem %s5, %s220
      %p222 = scmp.lt.s32.totalorder %s17, 1
      %s223 = scalar_select %p222, %s17, 1
      %s224 = smul.addr %s223, 32
      %s225 = smul.addr %s224, 4
      %s226 = scalar_lea.vmem %s0, %s225
      %p227 = scmp.lt.s32.totalorder %s17, 1
      %s228 = scalar_select %p227, %s17, 1
      %s229 = smul.addr %s228, 32
      %s230 = smul.addr %s229, 4
      %s231 = scalar_lea.vmem %s4, %s230
      %p232 = scmp.lt.s32.totalorder %s17, 1
      %s233 = scalar_select %p232, %s17, 1
      %s234 = smul.addr %s233, 2
      %s235 = scalar_lea.vmem %s5, %s234
      %v237 = vld [vmem:[%s226] sm:$0xf]
      %v238 = vld [vmem:[%s226 + $0x4] sm:$0xf]
      %v239 = vld [vmem:[%s226 + $0x8] sm:$0xf]
      %v240 = vld [vmem:[%s226 + $0xc] sm:$0xf]
      %v241 = vld [vmem:[%s226 + $0x10] sm:$0xf]
      %v242 = vld [vmem:[%s226 + $0x14] sm:$0xf]
      %v243 = vld [vmem:[%s226 + $0x18] sm:$0xf]
      %v244 = vld [vmem:[%s226 + $0x1c] sm:$0xf]
      %v245 = vld [vmem:[%s226 + $0x20] sm:$0xf]
      %v246 = vld [vmem:[%s226 + $0x24] sm:$0xf]
      %v247 = vld [vmem:[%s226 + $0x28] sm:$0xf]
      %v248 = vld [vmem:[%s226 + $0x2c] sm:$0xf]
      %v249 = vld [vmem:[%s226 + $0x30] sm:$0xf]
      %v250 = vld [vmem:[%s226 + $0x34] sm:$0xf]
      %v251 = vld [vmem:[%s226 + $0x38] sm:$0xf]
      %v252 = vld [vmem:[%s226 + $0x3c] sm:$0xf]
      %v253 = vld [vmem:[%s226 + $0x40] sm:$0xf]
      %v254 = vld [vmem:[%s226 + $0x44] sm:$0xf]
      %v255 = vld [vmem:[%s226 + $0x48] sm:$0xf]
      %v256 = vld [vmem:[%s226 + $0x4c] sm:$0xf]
      %v257 = vld [vmem:[%s226 + $0x50] sm:$0xf]
      %v258 = vld [vmem:[%s226 + $0x54] sm:$0xf]
      %v259 = vld [vmem:[%s226 + $0x58] sm:$0xf]
      %v260 = vld [vmem:[%s226 + $0x5c] sm:$0xf]
      %v261 = vld [vmem:[%s226 + $0x60] sm:$0xf]
      %v262 = vld [vmem:[%s226 + $0x64] sm:$0xf]
      %v263 = vld [vmem:[%s226 + $0x68] sm:$0xf]
      %v264 = vld [vmem:[%s226 + $0x6c] sm:$0xf]
      %v265 = vld [vmem:[%s226 + $0x70] sm:$0xf]
      %v266 = vld [vmem:[%s226 + $0x74] sm:$0xf]
      %v267 = vld [vmem:[%s226 + $0x78] sm:$0xf]
      %v268 = vld [vmem:[%s226 + $0x7c] sm:$0xf]
      %v269 = vunpack.c.l.bf16 %v237
      %v270 = vunpack.c.l.bf16 %v238
      %v271 = vunpack.c.l.bf16 %v239
      %v272 = vunpack.c.l.bf16 %v240
      %v273 = vunpack.c.l.bf16 %v241
      %v274 = vunpack.c.l.bf16 %v242
      %v275 = vunpack.c.l.bf16 %v243
      %v276 = vunpack.c.l.bf16 %v244
      %v277 = vunpack.c.l.bf16 %v245
      %v278 = vunpack.c.l.bf16 %v246
      %v279 = vunpack.c.l.bf16 %v247
      %v280 = vunpack.c.l.bf16 %v248
      %v281 = vunpack.c.l.bf16 %v249
      %v282 = vunpack.c.l.bf16 %v250
      %v283 = vunpack.c.l.bf16 %v251
      %v284 = vunpack.c.l.bf16 %v252
      %v285 = vunpack.c.l.bf16 %v253
      %v286 = vunpack.c.l.bf16 %v254
      %v287 = vunpack.c.l.bf16 %v255
      %v288 = vunpack.c.l.bf16 %v256
      %v289 = vunpack.c.l.bf16 %v257
      %v290 = vunpack.c.l.bf16 %v258
      %v291 = vunpack.c.l.bf16 %v259
      %v292 = vunpack.c.l.bf16 %v260
      %v293 = vunpack.c.l.bf16 %v261
      %v294 = vunpack.c.l.bf16 %v262
      %v295 = vunpack.c.l.bf16 %v263
      %v296 = vunpack.c.l.bf16 %v264
      %v297 = vunpack.c.l.bf16 %v265
      %v298 = vunpack.c.l.bf16 %v266
      %v299 = vunpack.c.l.bf16 %v267
      %v300 = vunpack.c.l.bf16 %v268
      %vm301 = vcmask 31744
      %302 = vst.msk [vmem:[#allocation2] sm:$0xff] %vm301, 0.0
      %303 = vst.msk [vmem:[#allocation2 + $0x8] sm:$0xff] %vm301, 0.0
      %vm304 = vcmask 25600
      %305 = vst.msk [vmem:[#allocation2 + $0x10] sm:$0x3] %vm304, 0.0
      %306 = vst.msk [vmem:[#allocation2 + $0x18] sm:$0xff] %vm301, 0.0
      %307 = vst.msk [vmem:[#allocation2 + $0x20] sm:$0xff] %vm301, 0.0
      %308 = vst.msk [vmem:[#allocation2 + $0x28] sm:$0x3] %vm304, 0.0
      %309 = vst.msk [vmem:[#allocation2 + $0x30] sm:$0xff] %vm301, 0.0
      %310 = vst.msk [vmem:[#allocation2 + $0x38] sm:$0xff] %vm301, 0.0
      %311 = vst.msk [vmem:[#allocation2 + $0x40] sm:$0x3] %vm304, 0.0
      %312 = vst.msk [vmem:[#allocation2 + $0x48] sm:$0xff] %vm301, 0.0
      %313 = vst.msk [vmem:[#allocation2 + $0x50] sm:$0xff] %vm301, 0.0
      %314 = vst.msk [vmem:[#allocation2 + $0x58] sm:$0x3] %vm304, 0.0
      %315 = vst.msk [vmem:[#allocation2 + $0x60] sm:$0xff] %vm301, 0.0
      %316 = vst.msk [vmem:[#allocation2 + $0x68] sm:$0xff] %vm301, 0.0
      %317 = vst.msk [vmem:[#allocation2 + $0x70] sm:$0x3] %vm304, 0.0
      %318 = vst.msk [vmem:[#allocation2 + $0x78] sm:$0xff] %vm301, 0.0
      %319 = vst.msk [vmem:[#allocation2 + $0x80] sm:$0xff] %vm301, 0.0
      %320 = vst.msk [vmem:[#allocation2 + $0x88] sm:$0x3] %vm304, 0.0
      %321 = vst.msk [vmem:[#allocation2 + $0x90] sm:$0xff] %vm301, 0.0
      %322 = vst.msk [vmem:[#allocation2 + $0x98] sm:$0xff] %vm301, 0.0
      %323 = vst.msk [vmem:[#allocation2 + $0xa0] sm:$0x3] %vm304, 0.0
      %324 = vst.msk [vmem:[#allocation2 + $0xa8] sm:$0xff] %vm301, 0.0
      %325 = vst.msk [vmem:[#allocation2 + $0xb0] sm:$0xff] %vm301, 0.0
      %326 = vst.msk [vmem:[#allocation2 + $0xb8] sm:$0x3] %vm304, 0.0
      %327 = vst.msk [vmem:[#allocation2 + $0xc0] sm:$0xff] %vm301, 0.0
      %328 = vst.msk [vmem:[#allocation2 + $0xc8] sm:$0xff] %vm301, 0.0
      %329 = vst.msk [vmem:[#allocation2 + $0xd0] sm:$0x3] %vm304, 0.0
      %330 = vst.msk [vmem:[#allocation2 + $0xd8] sm:$0xff] %vm301, 0.0
      %331 = vst.msk [vmem:[#allocation2 + $0xe0] sm:$0xff] %vm301, 0.0
      %332 = vst.msk [vmem:[#allocation2 + $0xe8] sm:$0x3] %vm304, 0.0
      %333 = vst.msk [vmem:[#allocation2 + $0xf0] sm:$0xff] %vm301, 0.0
      %334 = vst.msk [vmem:[#allocation2 + $0xf8] sm:$0xff] %vm301, 0.0
      %335 = vst.msk [vmem:[#allocation2 + $0x100] sm:$0x3] %vm304, 0.0
      %336 = vst.msk [vmem:[#allocation2 + $0x108] sm:$0xff] %vm301, 0.0
      %337 = vst.msk [vmem:[#allocation2 + $0x110] sm:$0xff] %vm301, 0.0
      %338 = vst.msk [vmem:[#allocation2 + $0x118] sm:$0x3] %vm304, 0.0
      %339 = vst.msk [vmem:[#allocation2 + $0x120] sm:$0xff] %vm301, 0.0
      %340 = vst.msk [vmem:[#allocation2 + $0x128] sm:$0xff] %vm301, 0.0
      %341 = vst.msk [vmem:[#allocation2 + $0x130] sm:$0x3] %vm304, 0.0
      %342 = vst.msk [vmem:[#allocation2 + $0x138] sm:$0xff] %vm301, 0.0
      %343 = vst.msk [vmem:[#allocation2 + $0x140] sm:$0xff] %vm301, 0.0
      %344 = vst.msk [vmem:[#allocation2 + $0x148] sm:$0x3] %vm304, 0.0
      %345 = vst.msk [vmem:[#allocation2 + $0x150] sm:$0xff] %vm301, 0.0
      %346 = vst.msk [vmem:[#allocation2 + $0x158] sm:$0xff] %vm301, 0.0
      %347 = vst.msk [vmem:[#allocation2 + $0x160] sm:$0x3] %vm304, 0.0
      %348 = vst.msk [vmem:[#allocation2 + $0x168] sm:$0xff] %vm301, 0.0
      %349 = vst.msk [vmem:[#allocation2 + $0x170] sm:$0xff] %vm301, 0.0
      %350 = vst.msk [vmem:[#allocation2 + $0x178] sm:$0x3] %vm304, 0.0
      %351 = vst.msk [vmem:[#allocation2 + $0x180] sm:$0xff] %vm301, 0.0
      %352 = vst.msk [vmem:[#allocation2 + $0x188] sm:$0xff] %vm301, 0.0
      %353 = vst.msk [vmem:[#allocation2 + $0x190] sm:$0x3] %vm304, 0.0
      %354 = vst.msk [vmem:[#allocation2 + $0x198] sm:$0xff] %vm301, 0.0
      %355 = vst.msk [vmem:[#allocation2 + $0x1a0] sm:$0xff] %vm301, 0.0
      %356 = vst.msk [vmem:[#allocation2 + $0x1a8] sm:$0x3] %vm304, 0.0
      %s357 = scalar_lea.vmem [#allocation2], 24
      %358 = vst.msk [vmem:[%s357 + $0x1] sm:$0xff] %vm301, %v269
      %359 = vst.msk [vmem:[%s357 + $0x9] sm:$0xff] %vm301, %v270
      %360 = vst.msk [vmem:[%s357 + $0x19] sm:$0xff] %vm301, %v271
      %361 = vst.msk [vmem:[%s357 + $0x21] sm:$0xff] %vm301, %v272
      %362 = vst.msk [vmem:[%s357 + $0x31] sm:$0xff] %vm301, %v273
      %363 = vst.msk [vmem:[%s357 + $0x39] sm:$0xff] %vm301, %v274
      %364 = vst.msk [vmem:[%s357 + $0x49] sm:$0xff] %vm301, %v275
      %365 = vst.msk [vmem:[%s357 + $0x51] sm:$0xff] %vm301, %v276
      %366 = vst.msk [vmem:[%s357 + $0x61] sm:$0xff] %vm301, %v277
      %367 = vst.msk [vmem:[%s357 + $0x69] sm:$0xff] %vm301, %v278
      %368 = vst.msk [vmem:[%s357 + $0x79] sm:$0xff] %vm301, %v279
      %369 = vst.msk [vmem:[%s357 + $0x81] sm:$0xff] %vm301, %v280
      %370 = vst.msk [vmem:[%s357 + $0x91] sm:$0xff] %vm301, %v281
      %371 = vst.msk [vmem:[%s357 + $0x99] sm:$0xff] %vm301, %v282
      %372 = vst.msk [vmem:[%s357 + $0xa9] sm:$0xff] %vm301, %v283
      %373 = vst.msk [vmem:[%s357 + $0xb1] sm:$0xff] %vm301, %v284
      %374 = vst.msk [vmem:[%s357 + $0xc1] sm:$0xff] %vm301, %v285
      %375 = vst.msk [vmem:[%s357 + $0xc9] sm:$0xff] %vm301, %v286
      %376 = vst.msk [vmem:[%s357 + $0xd9] sm:$0xff] %vm301, %v287
      %377 = vst.msk [vmem:[%s357 + $0xe1] sm:$0xff] %vm301, %v288
      %378 = vst.msk [vmem:[%s357 + $0xf1] sm:$0xff] %vm301, %v289
      %379 = vst.msk [vmem:[%s357 + $0xf9] sm:$0xff] %vm301, %v290
      %380 = vst.msk [vmem:[%s357 + $0x109] sm:$0xff] %vm301, %v291
      %381 = vst.msk [vmem:[%s357 + $0x111] sm:$0xff] %vm301, %v292
      %382 = vst.msk [vmem:[%s357 + $0x121] sm:$0xff] %vm301, %v293
      %383 = vst.msk [vmem:[%s357 + $0x129] sm:$0xff] %vm301, %v294
      %384 = vst.msk [vmem:[%s357 + $0x139] sm:$0xff] %vm301, %v295
      %385 = vst.msk [vmem:[%s357 + $0x141] sm:$0xff] %vm301, %v296
      %386 = vst.msk [vmem:[%s357 + $0x151] sm:$0xff] %vm301, %v297
      %387 = vst.msk [vmem:[%s357 + $0x159] sm:$0xff] %vm301, %v298
      %388 = vst.msk [vmem:[%s357 + $0x169] sm:$0xff] %vm301, %v299
      %389 = vst.msk [vmem:[%s357 + $0x171] sm:$0xff] %vm301, %v300
      %v390 = vld [vmem:[#allocation2] sm:$0xff]
      %v391 = vld [vmem:[#allocation2 + $0x8] sm:$0xff]
      %v392 = vld [vmem:[#allocation2 + $0x18] sm:$0xff]
      %v393 = vld [vmem:[#allocation2 + $0x20] sm:$0xff]
      %v394 = vld [vmem:[#allocation2 + $0x30] sm:$0xff]
      %v395 = vld [vmem:[#allocation2 + $0x38] sm:$0xff]
      %v396 = vld [vmem:[#allocation2 + $0x48] sm:$0xff]
      %v397 = vld [vmem:[#allocation2 + $0x50] sm:$0xff]
      %v398 = vld [vmem:[#allocation2 + $0x60] sm:$0xff]
      %v399 = vld [vmem:[#allocation2 + $0x68] sm:$0xff]
      %v400 = vld [vmem:[#allocation2 + $0x78] sm:$0xff]
      %v401 = vld [vmem:[#allocation2 + $0x80] sm:$0xff]
      %v402 = vld [vmem:[#allocation2 + $0x90] sm:$0xff]
      %v403 = vld [vmem:[#allocation2 + $0x98] sm:$0xff]
      %v404 = vld [vmem:[#allocation2 + $0xa8] sm:$0xff]
      %v405 = vld [vmem:[#allocation2 + $0xb0] sm:$0xff]
      %v406 = vld [vmem:[#allocation2 + $0xc0] sm:$0xff]
      %v407 = vld [vmem:[#allocation2 + $0xc8] sm:$0xff]
      %v408 = vld [vmem:[#allocation2 + $0xd8] sm:$0xff]
      %v409 = vld [vmem:[#allocation2 + $0xe0] sm:$0xff]
      %v410 = vld [vmem:[#allocation2 + $0xf0] sm:$0xff]
      %v411 = vld [vmem:[#allocation2 + $0xf8] sm:$0xff]
      %v412 = vld [vmem:[#allocation2 + $0x108] sm:$0xff]
      %v413 = vld [vmem:[#allocation2 + $0x110] sm:$0xff]
      %v414 = vld [vmem:[#allocation2 + $0x120] sm:$0xff]
      %v415 = vld [vmem:[#allocation2 + $0x128] sm:$0xff]
      %v416 = vld [vmem:[#allocation2 + $0x138] sm:$0xff]
      %v417 = vld [vmem:[#allocation2 + $0x140] sm:$0xff]
      %v418 = vld [vmem:[#allocation2 + $0x150] sm:$0xff]
      %v419 = vld [vmem:[#allocation2 + $0x158] sm:$0xff]
      %v420 = vld [vmem:[#allocation2 + $0x168] sm:$0xff]
      %v421 = vld [vmem:[#allocation2 + $0x170] sm:$0xff]
      %v422 = vpack.c.bf16 %v391, %v390
      %v423 = vpack.c.bf16 %v393, %v392
      %v424 = vpack.c.bf16 %v395, %v394
      %v425 = vpack.c.bf16 %v397, %v396
      %v426 = vpack.c.bf16 %v399, %v398
      %v427 = vpack.c.bf16 %v401, %v400
      %v428 = vpack.c.bf16 %v403, %v402
      %v429 = vpack.c.bf16 %v405, %v404
      %v430 = vpack.c.bf16 %v407, %v406
      %v431 = vpack.c.bf16 %v409, %v408
      %v432 = vpack.c.bf16 %v411, %v410
      %v433 = vpack.c.bf16 %v413, %v412
      %v434 = vpack.c.bf16 %v415, %v414
      %v435 = vpack.c.bf16 %v417, %v416
      %v436 = vpack.c.bf16 %v419, %v418
      %v437 = vpack.c.bf16 %v421, %v420
      %v438 = vld [vmem:[#allocation2 + $0x1] sm:$0xff]
      %v439 = vld [vmem:[#allocation2 + $0x9] sm:$0xff]
      %v440 = vld [vmem:[#allocation2 + $0x19] sm:$0xff]
      %v441 = vld [vmem:[#allocation2 + $0x21] sm:$0xff]
      %v442 = vld [vmem:[#allocation2 + $0x31] sm:$0xff]
      %v443 = vld [vmem:[#allocation2 + $0x39] sm:$0xff]
      %v444 = vld [vmem:[#allocation2 + $0x49] sm:$0xff]
      %v445 = vld [vmem:[#allocation2 + $0x51] sm:$0xff]
      %v446 = vld [vmem:[#allocation2 + $0x61] sm:$0xff]
      %v447 = vld [vmem:[#allocation2 + $0x69] sm:$0xff]
      %v448 = vld [vmem:[#allocation2 + $0x79] sm:$0xff]
      %v449 = vld [vmem:[#allocation2 + $0x81] sm:$0xff]
      %v450 = vld [vmem:[#allocation2 + $0x91] sm:$0xff]
      %v451 = vld [vmem:[#allocation2 + $0x99] sm:$0xff]
      %v452 = vld [vmem:[#allocation2 + $0xa9] sm:$0xff]
      %v453 = vld [vmem:[#allocation2 + $0xb1] sm:$0xff]
      %v454 = vld [vmem:[#allocation2 + $0xc1] sm:$0xff]
      %v455 = vld [vmem:[#allocation2 + $0xc9] sm:$0xff]
      %v456 = vld [vmem:[#allocation2 + $0xd9] sm:$0xff]
      %v457 = vld [vmem:[#allocation2 + $0xe1] sm:$0xff]
      %v458 = vld [vmem:[#allocation2 + $0xf1] sm:$0xff]
      %v459 = vld [vmem:[#allocation2 + $0xf9] sm:$0xff]
      %v460 = vld [vmem:[#allocation2 + $0x109] sm:$0xff]
      %v461 = vld [vmem:[#allocation2 + $0x111] sm:$0xff]
      %v462 = vld [vmem:[#allocation2 + $0x121] sm:$0xff]
      %v463 = vld [vmem:[#allocation2 + $0x129] sm:$0xff]
      %v464 = vld [vmem:[#allocation2 + $0x139] sm:$0xff]
      %v465 = vld [vmem:[#allocation2 + $0x141] sm:$0xff]
      %v466 = vld [vmem:[#allocation2 + $0x151] sm:$0xff]
      %v467 = vld [vmem:[#allocation2 + $0x159] sm:$0xff]
      %v468 = vld [vmem:[#allocation2 + $0x169] sm:$0xff]
      %v469 = vld [vmem:[#allocation2 + $0x171] sm:$0xff]
      %v470 = vpack.c.bf16 %v439, %v438
      %v471 = vpack.c.bf16 %v441, %v440
      %v472 = vpack.c.bf16 %v443, %v442
      %v473 = vpack.c.bf16 %v445, %v444
      %v474 = vpack.c.bf16 %v447, %v446
      %v475 = vpack.c.bf16 %v449, %v448
      %v476 = vpack.c.bf16 %v451, %v450
      %v477 = vpack.c.bf16 %v453, %v452
      %v478 = vpack.c.bf16 %v455, %v454
      %v479 = vpack.c.bf16 %v457, %v456
      %v480 = vpack.c.bf16 %v459, %v458
      %v481 = vpack.c.bf16 %v461, %v460
      %v482 = vpack.c.bf16 %v463, %v462
      %v483 = vpack.c.bf16 %v465, %v464
      %v484 = vpack.c.bf16 %v467, %v466
      %v485 = vpack.c.bf16 %v469, %v468
      %v486 = vld [vmem:[#allocation2 + $0x2] sm:$0xff]
      %v487 = vld [vmem:[#allocation2 + $0xa] sm:$0xff]
      %v488 = vld [vmem:[#allocation2 + $0x1a] sm:$0xff]
      %v489 = vld [vmem:[#allocation2 + $0x22] sm:$0xff]
      %v490 = vld [vmem:[#allocation2 + $0x32] sm:$0xff]
      %v491 = vld [vmem:[#allocation2 + $0x3a] sm:$0xff]
      %v492 = vld [vmem:[#allocation2 + $0x4a] sm:$0xff]
      %v493 = vld [vmem:[#allocation2 + $0x52] sm:$0xff]
      %v494 = vld [vmem:[#allocation2 + $0x62] sm:$0xff]
      %v495 = vld [vmem:[#allocation2 + $0x6a] sm:$0xff]
      %v496 = vld [vmem:[#allocation2 + $0x7a] sm:$0xff]
      %v497 = vld [vmem:[#allocation2 + $0x82] sm:$0xff]
      %v498 = vld [vmem:[#allocation2 + $0x92] sm:$0xff]
      %v499 = vld [vmem:[#allocation2 + $0x9a] sm:$0xff]
      %v500 = vld [vmem:[#allocation2 + $0xaa] sm:$0xff]
      %v501 = vld [vmem:[#allocation2 + $0xb2] sm:$0xff]
      %v502 = vld [vmem:[#allocation2 + $0xc2] sm:$0xff]
      %v503 = vld [vmem:[#allocation2 + $0xca] sm:$0xff]
      %v504 = vld [vmem:[#allocation2 + $0xda] sm:$0xff]
      %v505 = vld [vmem:[#allocation2 + $0xe2] sm:$0xff]
      %v506 = vld [vmem:[#allocation2 + $0xf2] sm:$0xff]
      %v507 = vld [vmem:[#allocation2 + $0xfa] sm:$0xff]
      %v508 = vld [vmem:[#allocation2 + $0x10a] sm:$0xff]
      %v509 = vld [vmem:[#allocation2 + $0x112] sm:$0xff]
      %v510 = vld [vmem:[#allocation2 + $0x122] sm:$0xff]
      %v511 = vld [vmem:[#allocation2 + $0x12a] sm:$0xff]
      %v512 = vld [vmem:[#allocation2 + $0x13a] sm:$0xff]
      %v513 = vld [vmem:[#allocation2 + $0x142] sm:$0xff]
      %v514 = vld [vmem:[#allocation2 + $0x152] sm:$0xff]
      %v515 = vld [vmem:[#allocation2 + $0x15a] sm:$0xff]
      %v516 = vld [vmem:[#allocation2 + $0x16a] sm:$0xff]
      %v517 = vld [vmem:[#allocation2 + $0x172] sm:$0xff]
      %v518 = vpack.c.bf16 %v487, %v486
      %v519 = vpack.c.bf16 %v489, %v488
      %v520 = vpack.c.bf16 %v491, %v490
      %v521 = vpack.c.bf16 %v493, %v492
      %v522 = vpack.c.bf16 %v495, %v494
      %v523 = vpack.c.bf16 %v497, %v496
      %v524 = vpack.c.bf16 %v499, %v498
      %v525 = vpack.c.bf16 %v501, %v500
      %v526 = vpack.c.bf16 %v503, %v502
      %v527 = vpack.c.bf16 %v505, %v504
      %v528 = vpack.c.bf16 %v507, %v506
      %v529 = vpack.c.bf16 %v509, %v508
      %v530 = vpack.c.bf16 %v511, %v510
      %v531 = vpack.c.bf16 %v513, %v512
      %v532 = vpack.c.bf16 %v515, %v514
      %v533 = vpack.c.bf16 %v517, %v516
      %v534 = vld [vmem:[%s357] sm:$0xff]
      %v535 = vld [vmem:[%s357 + $0x8] sm:$0xff]
      %v536 = vld [vmem:[%s357 + $0x18] sm:$0xff]
      %v537 = vld [vmem:[%s357 + $0x20] sm:$0xff]
      %v538 = vld [vmem:[%s357 + $0x30] sm:$0xff]
      %v539 = vld [vmem:[%s357 + $0x38] sm:$0xff]
      %v540 = vld [vmem:[%s357 + $0x48] sm:$0xff]
      %v541 = vld [vmem:[%s357 + $0x50] sm:$0xff]
      %v542 = vld [vmem:[%s357 + $0x60] sm:$0xff]
      %v543 = vld [vmem:[%s357 + $0x68] sm:$0xff]
      %v544 = vld [vmem:[%s357 + $0x78] sm:$0xff]
      %v545 = vld [vmem:[%s357 + $0x80] sm:$0xff]
      %v546 = vld [vmem:[%s357 + $0x90] sm:$0xff]
      %v547 = vld [vmem:[%s357 + $0x98] sm:$0xff]
      %v548 = vld [vmem:[%s357 + $0xa8] sm:$0xff]
      %v549 = vld [vmem:[%s357 + $0xb0] sm:$0xff]
      %v550 = vld [vmem:[%s357 + $0xc0] sm:$0xff]
      %v551 = vld [vmem:[%s357 + $0xc8] sm:$0xff]
      %v552 = vld [vmem:[%s357 + $0xd8] sm:$0xff]
      %v553 = vld [vmem:[%s357 + $0xe0] sm:$0xff]
      %v554 = vld [vmem:[%s357 + $0xf0] sm:$0xff]
      %v555 = vld [vmem:[%s357 + $0xf8] sm:$0xff]
      %v556 = vld [vmem:[%s357 + $0x108] sm:$0xff]
      %v557 = vld [vmem:[%s357 + $0x110] sm:$0xff]
      %v558 = vld [vmem:[%s357 + $0x120] sm:$0xff]
      %v559 = vld [vmem:[%s357 + $0x128] sm:$0xff]
      %v560 = vld [vmem:[%s357 + $0x138] sm:$0xff]
      %v561 = vld [vmem:[%s357 + $0x140] sm:$0xff]
      %v562 = vld [vmem:[%s357 + $0x150] sm:$0xff]
      %v563 = vld [vmem:[%s357 + $0x158] sm:$0xff]
      %v564 = vld [vmem:[%s357 + $0x168] sm:$0xff]
      %v565 = vld [vmem:[%s357 + $0x170] sm:$0xff]
      %v566 = vpack.c.bf16 %v535, %v534
      %v567 = vpack.c.bf16 %v537, %v536
      %v568 = vpack.c.bf16 %v539, %v538
      %v569 = vpack.c.bf16 %v541, %v540
      %v570 = vpack.c.bf16 %v543, %v542
      %v571 = vpack.c.bf16 %v545, %v544
      %v572 = vpack.c.bf16 %v547, %v546
      %v573 = vpack.c.bf16 %v549, %v548
      %v574 = vpack.c.bf16 %v551, %v550
      %v575 = vpack.c.bf16 %v553, %v552
      %v576 = vpack.c.bf16 %v555, %v554
      %v577 = vpack.c.bf16 %v557, %v556
      %v578 = vpack.c.bf16 %v559, %v558
      %v579 = vpack.c.bf16 %v561, %v560
      %v580 = vpack.c.bf16 %v563, %v562
      %v581 = vpack.c.bf16 %v565, %v564
      %v582 = vld [vmem:[%s357 + $0x1] sm:$0xff]
      %v583 = vld [vmem:[%s357 + $0x9] sm:$0xff]
      %v584 = vld [vmem:[%s357 + $0x19] sm:$0xff]
      %v585 = vld [vmem:[%s357 + $0x21] sm:$0xff]
      %v586 = vld [vmem:[%s357 + $0x31] sm:$0xff]
      %v587 = vld [vmem:[%s357 + $0x39] sm:$0xff]
      %v588 = vld [vmem:[%s357 + $0x49] sm:$0xff]
      %v589 = vld [vmem:[%s357 + $0x51] sm:$0xff]
      %v590 = vld [vmem:[%s357 + $0x61] sm:$0xff]
      %v591 = vld [vmem:[%s357 + $0x69] sm:$0xff]
      %v592 = vld [vmem:[%s357 + $0x79] sm:$0xff]
      %v593 = vld [vmem:[%s357 + $0x81] sm:$0xff]
      %v594 = vld [vmem:[%s357 + $0x91] sm:$0xff]
      %v595 = vld [vmem:[%s357 + $0x99] sm:$0xff]
      %v596 = vld [vmem:[%s357 + $0xa9] sm:$0xff]
      %v597 = vld [vmem:[%s357 + $0xb1] sm:$0xff]
      %v598 = vld [vmem:[%s357 + $0xc1] sm:$0xff]
      %v599 = vld [vmem:[%s357 + $0xc9] sm:$0xff]
      %v600 = vld [vmem:[%s357 + $0xd9] sm:$0xff]
      %v601 = vld [vmem:[%s357 + $0xe1] sm:$0xff]
      %v602 = vld [vmem:[%s357 + $0xf1] sm:$0xff]
      %v603 = vld [vmem:[%s357 + $0xf9] sm:$0xff]
      %v604 = vld [vmem:[%s357 + $0x109] sm:$0xff]
      %v605 = vld [vmem:[%s357 + $0x111] sm:$0xff]
      %v606 = vld [vmem:[%s357 + $0x121] sm:$0xff]
      %v607 = vld [vmem:[%s357 + $0x129] sm:$0xff]
      %v608 = vld [vmem:[%s357 + $0x139] sm:$0xff]
      %v609 = vld [vmem:[%s357 + $0x141] sm:$0xff]
      %v610 = vld [vmem:[%s357 + $0x151] sm:$0xff]
      %v611 = vld [vmem:[%s357 + $0x159] sm:$0xff]
      %v612 = vld [vmem:[%s357 + $0x169] sm:$0xff]
      %v613 = vld [vmem:[%s357 + $0x171] sm:$0xff]
      %v614 = vpack.c.bf16 %v583, %v582
      %v615 = vpack.c.bf16 %v585, %v584
      %v616 = vpack.c.bf16 %v587, %v586
      %v617 = vpack.c.bf16 %v589, %v588
      %v618 = vpack.c.bf16 %v591, %v590
      %v619 = vpack.c.bf16 %v593, %v592
      %v620 = vpack.c.bf16 %v595, %v594
      %v621 = vpack.c.bf16 %v597, %v596
      %v622 = vpack.c.bf16 %v599, %v598
      %v623 = vpack.c.bf16 %v601, %v600
      %v624 = vpack.c.bf16 %v603, %v602
      %v625 = vpack.c.bf16 %v605, %v604
      %v626 = vpack.c.bf16 %v607, %v606
      %v627 = vpack.c.bf16 %v609, %v608
      %v628 = vpack.c.bf16 %v611, %v610
      %v629 = vpack.c.bf16 %v613, %v612
      %v630 = vld [vmem:[%s357 + $0x2] sm:$0xff]
      %v631 = vld [vmem:[%s357 + $0xa] sm:$0xff]
      %v632 = vld [vmem:[%s357 + $0x1a] sm:$0xff]
      %v633 = vld [vmem:[%s357 + $0x22] sm:$0xff]
      %v634 = vld [vmem:[%s357 + $0x32] sm:$0xff]
      %v635 = vld [vmem:[%s357 + $0x3a] sm:$0xff]
      %v636 = vld [vmem:[%s357 + $0x4a] sm:$0xff]
      %v637 = vld [vmem:[%s357 + $0x52] sm:$0xff]
      %v638 = vld [vmem:[%s357 + $0x62] sm:$0xff]
      %v639 = vld [vmem:[%s357 + $0x6a] sm:$0xff]
      %v640 = vld [vmem:[%s357 + $0x7a] sm:$0xff]
      %v641 = vld [vmem:[%s357 + $0x82] sm:$0xff]
      %v642 = vld [vmem:[%s357 + $0x92] sm:$0xff]
      %v643 = vld [vmem:[%s357 + $0x9a] sm:$0xff]
      %v644 = vld [vmem:[%s357 + $0xaa] sm:$0xff]
      %v645 = vld [vmem:[%s357 + $0xb2] sm:$0xff]
      %v646 = vld [vmem:[%s357 + $0xc2] sm:$0xff]
      %v647 = vld [vmem:[%s357 + $0xca] sm:$0xff]
      %v648 = vld [vmem:[%s357 + $0xda] sm:$0xff]
      %v649 = vld [vmem:[%s357 + $0xe2] sm:$0xff]
      %v650 = vld [vmem:[%s357 + $0xf2] sm:$0xff]
      %v651 = vld [vmem:[%s357 + $0xfa] sm:$0xff]
      %v652 = vld [vmem:[%s357 + $0x10a] sm:$0xff]
      %v653 = vld [vmem:[%s357 + $0x112] sm:$0xff]
      %v654 = vld [vmem:[%s357 + $0x122] sm:$0xff]
      %v655 = vld [vmem:[%s357 + $0x12a] sm:$0xff]
      %v656 = vld [vmem:[%s357 + $0x13a] sm:$0xff]
      %v657 = vld [vmem:[%s357 + $0x142] sm:$0xff]
      %v658 = vld [vmem:[%s357 + $0x152] sm:$0xff]
      %v659 = vld [vmem:[%s357 + $0x15a] sm:$0xff]
      %v660 = vld [vmem:[%s357 + $0x16a] sm:$0xff]
      %v661 = vld [vmem:[%s357 + $0x172] sm:$0xff]
      %v662 = vpack.c.bf16 %v631, %v630
      %v663 = vpack.c.bf16 %v633, %v632
      %v664 = vpack.c.bf16 %v635, %v634
      %v665 = vpack.c.bf16 %v637, %v636
      %v666 = vpack.c.bf16 %v639, %v638
      %v667 = vpack.c.bf16 %v641, %v640
      %v668 = vpack.c.bf16 %v643, %v642
      %v669 = vpack.c.bf16 %v645, %v644
      %v670 = vpack.c.bf16 %v647, %v646
      %v671 = vpack.c.bf16 %v649, %v648
      %v672 = vpack.c.bf16 %v651, %v650
      %v673 = vpack.c.bf16 %v653, %v652
      %v674 = vpack.c.bf16 %v655, %v654
      %v675 = vpack.c.bf16 %v657, %v656
      %v676 = vpack.c.bf16 %v659, %v658
      %v677 = vpack.c.bf16 %v661, %v660
      %s678 = scalar_lea.vmem [#allocation2], 48
      %v679 = vld [vmem:[%s678] sm:$0xff]
      %v680 = vld [vmem:[%s678 + $0x8] sm:$0xff]
      %v681 = vld [vmem:[%s678 + $0x18] sm:$0xff]
      %v682 = vld [vmem:[%s678 + $0x20] sm:$0xff]
      %v683 = vld [vmem:[%s678 + $0x30] sm:$0xff]
      %v684 = vld [vmem:[%s678 + $0x38] sm:$0xff]
      %v685 = vld [vmem:[%s678 + $0x48] sm:$0xff]
      %v686 = vld [vmem:[%s678 + $0x50] sm:$0xff]
      %v687 = vld [vmem:[%s678 + $0x60] sm:$0xff]
      %v688 = vld [vmem:[%s678 + $0x68] sm:$0xff]
      %v689 = vld [vmem:[%s678 + $0x78] sm:$0xff]
      %v690 = vld [vmem:[%s678 + $0x80] sm:$0xff]
      %v691 = vld [vmem:[%s678 + $0x90] sm:$0xff]
      %v692 = vld [vmem:[%s678 + $0x98] sm:$0xff]
      %v693 = vld [vmem:[%s678 + $0xa8] sm:$0xff]
      %v694 = vld [vmem:[%s678 + $0xb0] sm:$0xff]
      %v695 = vld [vmem:[%s678 + $0xc0] sm:$0xff]
      %v696 = vld [vmem:[%s678 + $0xc8] sm:$0xff]
      %v697 = vld [vmem:[%s678 + $0xd8] sm:$0xff]
      %v698 = vld [vmem:[%s678 + $0xe0] sm:$0xff]
      %v699 = vld [vmem:[%s678 + $0xf0] sm:$0xff]
      %v700 = vld [vmem:[%s678 + $0xf8] sm:$0xff]
      %v701 = vld [vmem:[%s678 + $0x108] sm:$0xff]
      %v702 = vld [vmem:[%s678 + $0x110] sm:$0xff]
      %v703 = vld [vmem:[%s678 + $0x120] sm:$0xff]
      %v704 = vld [vmem:[%s678 + $0x128] sm:$0xff]
      %v705 = vld [vmem:[%s678 + $0x138] sm:$0xff]
      %v706 = vld [vmem:[%s678 + $0x140] sm:$0xff]
      %v707 = vld [vmem:[%s678 + $0x150] sm:$0xff]
      %v708 = vld [vmem:[%s678 + $0x158] sm:$0xff]
      %v709 = vld [vmem:[%s678 + $0x168] sm:$0xff]
      %v710 = vld [vmem:[%s678 + $0x170] sm:$0xff]
      %v711 = vpack.c.bf16 %v680, %v679
      %v712 = vpack.c.bf16 %v682, %v681
      %v713 = vpack.c.bf16 %v684, %v683
      %v714 = vpack.c.bf16 %v686, %v685
      %v715 = vpack.c.bf16 %v688, %v687
      %v716 = vpack.c.bf16 %v690, %v689
      %v717 = vpack.c.bf16 %v692, %v691
      %v718 = vpack.c.bf16 %v694, %v693
      %v719 = vpack.c.bf16 %v696, %v695
      %v720 = vpack.c.bf16 %v698, %v697
      %v721 = vpack.c.bf16 %v700, %v699
      %v722 = vpack.c.bf16 %v702, %v701
      %v723 = vpack.c.bf16 %v704, %v703
      %v724 = vpack.c.bf16 %v706, %v705
      %v725 = vpack.c.bf16 %v708, %v707
      %v726 = vpack.c.bf16 %v710, %v709
      %v727 = vld [vmem:[%s678 + $0x1] sm:$0xff]
      %v728 = vld [vmem:[%s678 + $0x9] sm:$0xff]
      %v729 = vld [vmem:[%s678 + $0x19] sm:$0xff]
      %v730 = vld [vmem:[%s678 + $0x21] sm:$0xff]
      %v731 = vld [vmem:[%s678 + $0x31] sm:$0xff]
      %v732 = vld [vmem:[%s678 + $0x39] sm:$0xff]
      %v733 = vld [vmem:[%s678 + $0x49] sm:$0xff]
      %v734 = vld [vmem:[%s678 + $0x51] sm:$0xff]
      %v735 = vld [vmem:[%s678 + $0x61] sm:$0xff]
      %v736 = vld [vmem:[%s678 + $0x69] sm:$0xff]
      %v737 = vld [vmem:[%s678 + $0x79] sm:$0xff]
      %v738 = vld [vmem:[%s678 + $0x81] sm:$0xff]
      %v739 = vld [vmem:[%s678 + $0x91] sm:$0xff]
      %v740 = vld [vmem:[%s678 + $0x99] sm:$0xff]
      %v741 = vld [vmem:[%s678 + $0xa9] sm:$0xff]
      %v742 = vld [vmem:[%s678 + $0xb1] sm:$0xff]
      %v743 = vld [vmem:[%s678 + $0xc1] sm:$0xff]
      %v744 = vld [vmem:[%s678 + $0xc9] sm:$0xff]
      %v745 = vld [vmem:[%s678 + $0xd9] sm:$0xff]
      %v746 = vld [vmem:[%s678 + $0xe1] sm:$0xff]
      %v747 = vld [vmem:[%s678 + $0xf1] sm:$0xff]
      %v748 = vld [vmem:[%s678 + $0xf9] sm:$0xff]
      %v749 = vld [vmem:[%s678 + $0x109] sm:$0xff]
      %v750 = vld [vmem:[%s678 + $0x111] sm:$0xff]
      %v751 = vld [vmem:[%s678 + $0x121] sm:$0xff]
      %v752 = vld [vmem:[%s678 + $0x129] sm:$0xff]
      %v753 = vld [vmem:[%s678 + $0x139] sm:$0xff]
      %v754 = vld [vmem:[%s678 + $0x141] sm:$0xff]
      %v755 = vld [vmem:[%s678 + $0x151] sm:$0xff]
      %v756 = vld [vmem:[%s678 + $0x159] sm:$0xff]
      %v757 = vld [vmem:[%s678 + $0x169] sm:$0xff]
      %v758 = vld [vmem:[%s678 + $0x171] sm:$0xff]
      %v759 = vpack.c.bf16 %v728, %v727
      %v760 = vpack.c.bf16 %v730, %v729
      %v761 = vpack.c.bf16 %v732, %v731
      %v762 = vpack.c.bf16 %v734, %v733
      %v763 = vpack.c.bf16 %v736, %v735
      %v764 = vpack.c.bf16 %v738, %v737
      %v765 = vpack.c.bf16 %v740, %v739
      %v766 = vpack.c.bf16 %v742, %v741
      %v767 = vpack.c.bf16 %v744, %v743
      %v768 = vpack.c.bf16 %v746, %v745
      %v769 = vpack.c.bf16 %v748, %v747
      %v770 = vpack.c.bf16 %v750, %v749
      %v771 = vpack.c.bf16 %v752, %v751
      %v772 = vpack.c.bf16 %v754, %v753
      %v773 = vpack.c.bf16 %v756, %v755
      %v774 = vpack.c.bf16 %v758, %v757
      %v775 = vld [vmem:[%s678 + $0x2] sm:$0xff]
      %v776 = vld [vmem:[%s678 + $0xa] sm:$0xff]
      %v777 = vld [vmem:[%s678 + $0x1a] sm:$0xff]
      %v778 = vld [vmem:[%s678 + $0x22] sm:$0xff]
      %v779 = vld [vmem:[%s678 + $0x32] sm:$0xff]
      %v780 = vld [vmem:[%s678 + $0x3a] sm:$0xff]
      %v781 = vld [vmem:[%s678 + $0x4a] sm:$0xff]
      %v782 = vld [vmem:[%s678 + $0x52] sm:$0xff]
      %v783 = vld [vmem:[%s678 + $0x62] sm:$0xff]
      %v784 = vld [vmem:[%s678 + $0x6a] sm:$0xff]
      %v785 = vld [vmem:[%s678 + $0x7a] sm:$0xff]
      %v786 = vld [vmem:[%s678 + $0x82] sm:$0xff]
      %v787 = vld [vmem:[%s678 + $0x92] sm:$0xff]
      %v788 = vld [vmem:[%s678 + $0x9a] sm:$0xff]
      %v789 = vld [vmem:[%s678 + $0xaa] sm:$0xff]
      %v790 = vld [vmem:[%s678 + $0xb2] sm:$0xff]
      %v791 = vld [vmem:[%s678 + $0xc2] sm:$0xff]
      %v792 = vld [vmem:[%s678 + $0xca] sm:$0xff]
      %v793 = vld [vmem:[%s678 + $0xda] sm:$0xff]
      %v794 = vld [vmem:[%s678 + $0xe2] sm:$0xff]
      %v795 = vld [vmem:[%s678 + $0xf2] sm:$0xff]
      %v796 = vld [vmem:[%s678 + $0xfa] sm:$0xff]
      %v797 = vld [vmem:[%s678 + $0x10a] sm:$0xff]
      %v798 = vld [vmem:[%s678 + $0x112] sm:$0xff]
      %v799 = vld [vmem:[%s678 + $0x122] sm:$0xff]
      %v800 = vld [vmem:[%s678 + $0x12a] sm:$0xff]
      %v801 = vld [vmem:[%s678 + $0x13a] sm:$0xff]
      %v802 = vld [vmem:[%s678 + $0x142] sm:$0xff]
      %v803 = vld [vmem:[%s678 + $0x152] sm:$0xff]
      %v804 = vld [vmem:[%s678 + $0x15a] sm:$0xff]
      %v805 = vld [vmem:[%s678 + $0x16a] sm:$0xff]
      %v806 = vld [vmem:[%s678 + $0x172] sm:$0xff]
      %v807 = vpack.c.bf16 %v776, %v775
      %v808 = vpack.c.bf16 %v778, %v777
      %v809 = vpack.c.bf16 %v780, %v779
      %v810 = vpack.c.bf16 %v782, %v781
      %v811 = vpack.c.bf16 %v784, %v783
      %v812 = vpack.c.bf16 %v786, %v785
      %v813 = vpack.c.bf16 %v788, %v787
      %v814 = vpack.c.bf16 %v790, %v789
      %v815 = vpack.c.bf16 %v792, %v791
      %v816 = vpack.c.bf16 %v794, %v793
      %v817 = vpack.c.bf16 %v796, %v795
      %v818 = vpack.c.bf16 %v798, %v797
      %v819 = vpack.c.bf16 %v800, %v799
      %v820 = vpack.c.bf16 %v802, %v801
      %v821 = vpack.c.bf16 %v804, %v803
      %v822 = vpack.c.bf16 %v806, %v805
      %839 = vrot.lane.b32.xlu0 %v470, 4
      %v840 = vpop.permute.xlu0 %839
      %841 = vrot.lane.b32.xlu0 %v471, 4
      %v842 = vpop.permute.xlu0 %841
      %843 = vrot.lane.b32.xlu0 %v472, 4
      %v844 = vpop.permute.xlu0 %843
      %845 = vrot.lane.b32.xlu0 %v473, 4
      %v846 = vpop.permute.xlu0 %845
      %847 = vrot.lane.b32.xlu0 %v474, 4
      %v848 = vpop.permute.xlu0 %847
      %849 = vrot.lane.b32.xlu0 %v475, 4
      %v850 = vpop.permute.xlu0 %849
      %851 = vrot.lane.b32.xlu0 %v476, 4
      %v852 = vpop.permute.xlu0 %851
      %853 = vrot.lane.b32.xlu0 %v477, 4
      %v854 = vpop.permute.xlu0 %853
      %855 = vrot.lane.b32.xlu0 %v478, 4
      %v856 = vpop.permute.xlu0 %855
      %857 = vrot.lane.b32.xlu0 %v479, 4
      %v858 = vpop.permute.xlu0 %857
      %859 = vrot.lane.b32.xlu0 %v480, 4
      %v860 = vpop.permute.xlu0 %859
      %861 = vrot.lane.b32.xlu0 %v481, 4
      %v862 = vpop.permute.xlu0 %861
      %863 = vrot.lane.b32.xlu0 %v482, 4
      %v864 = vpop.permute.xlu0 %863
      %865 = vrot.lane.b32.xlu0 %v483, 4
      %v866 = vpop.permute.xlu0 %865
      %867 = vrot.lane.b32.xlu0 %v484, 4
      %v868 = vpop.permute.xlu0 %867
      %869 = vrot.lane.b32.xlu0 %v485, 4
      %v870 = vpop.permute.xlu0 %869
      %887 = vrot.lane.b32.xlu0 %v518, 8
      %v888 = vpop.permute.xlu0 %887
      %889 = vrot.lane.b32.xlu0 %v519, 8
      %v890 = vpop.permute.xlu0 %889
      %891 = vrot.lane.b32.xlu0 %v520, 8
      %v892 = vpop.permute.xlu0 %891
      %893 = vrot.lane.b32.xlu0 %v521, 8
      %v894 = vpop.permute.xlu0 %893
      %895 = vrot.lane.b32.xlu0 %v522, 8
      %v896 = vpop.permute.xlu0 %895
      %897 = vrot.lane.b32.xlu0 %v523, 8
      %v898 = vpop.permute.xlu0 %897
      %899 = vrot.lane.b32.xlu0 %v524, 8
      %v900 = vpop.permute.xlu0 %899
      %901 = vrot.lane.b32.xlu0 %v525, 8
      %v902 = vpop.permute.xlu0 %901
      %903 = vrot.lane.b32.xlu0 %v526, 8
      %v904 = vpop.permute.xlu0 %903
      %905 = vrot.lane.b32.xlu0 %v527, 8
      %v906 = vpop.permute.xlu0 %905
      %907 = vrot.lane.b32.xlu0 %v528, 8
      %v908 = vpop.permute.xlu0 %907
      %909 = vrot.lane.b32.xlu0 %v529, 8
      %v910 = vpop.permute.xlu0 %909
      %911 = vrot.lane.b32.xlu0 %v530, 8
      %v912 = vpop.permute.xlu0 %911
      %913 = vrot.lane.b32.xlu0 %v531, 8
      %v914 = vpop.permute.xlu0 %913
      %915 = vrot.lane.b32.xlu0 %v532, 8
      %v916 = vpop.permute.xlu0 %915
      %917 = vrot.lane.b32.xlu0 %v533, 8
      %v918 = vpop.permute.xlu0 %917
      %935 = vrot.lane.b32.xlu0 %v566, 12
      %v936 = vpop.permute.xlu0 %935
      %937 = vrot.lane.b32.xlu0 %v567, 12
      %v938 = vpop.permute.xlu0 %937
      %939 = vrot.lane.b32.xlu0 %v568, 12
      %v940 = vpop.permute.xlu0 %939
      %941 = vrot.lane.b32.xlu0 %v569, 12
      %v942 = vpop.permute.xlu0 %941
      %943 = vrot.lane.b32.xlu0 %v570, 12
      %v944 = vpop.permute.xlu0 %943
      %945 = vrot.lane.b32.xlu0 %v571, 12
      %v946 = vpop.permute.xlu0 %945
      %947 = vrot.lane.b32.xlu0 %v572, 12
      %v948 = vpop.permute.xlu0 %947
      %949 = vrot.lane.b32.xlu0 %v573, 12
      %v950 = vpop.permute.xlu0 %949
      %951 = vrot.lane.b32.xlu0 %v574, 12
      %v952 = vpop.permute.xlu0 %951
      %953 = vrot.lane.b32.xlu0 %v575, 12
      %v954 = vpop.permute.xlu0 %953
      %955 = vrot.lane.b32.xlu0 %v576, 12
      %v956 = vpop.permute.xlu0 %955
      %957 = vrot.lane.b32.xlu0 %v577, 12
      %v958 = vpop.permute.xlu0 %957
      %959 = vrot.lane.b32.xlu0 %v578, 12
      %v960 = vpop.permute.xlu0 %959
      %961 = vrot.lane.b32.xlu0 %v579, 12
      %v962 = vpop.permute.xlu0 %961
      %963 = vrot.lane.b32.xlu0 %v580, 12
      %v964 = vpop.permute.xlu0 %963
      %965 = vrot.lane.b32.xlu0 %v581, 12
      %v966 = vpop.permute.xlu0 %965
      %983 = vrot.lane.b32.xlu0 %v614, 16
      %v984 = vpop.permute.xlu0 %983
      %985 = vrot.lane.b32.xlu0 %v615, 16
      %v986 = vpop.permute.xlu0 %985
      %987 = vrot.lane.b32.xlu0 %v616, 16
      %v988 = vpop.permute.xlu0 %987
      %989 = vrot.lane.b32.xlu0 %v617, 16
      %v990 = vpop.permute.xlu0 %989
      %991 = vrot.lane.b32.xlu0 %v618, 16
      %v992 = vpop.permute.xlu0 %991
      %993 = vrot.lane.b32.xlu0 %v619, 16
      %v994 = vpop.permute.xlu0 %993
      %995 = vrot.lane.b32.xlu0 %v620, 16
      %v996 = vpop.permute.xlu0 %995
      %997 = vrot.lane.b32.xlu0 %v621, 16
      %v998 = vpop.permute.xlu0 %997
      %999 = vrot.lane.b32.xlu0 %v622, 16
      %v1000 = vpop.permute.xlu0 %999
      %1001 = vrot.lane.b32.xlu0 %v623, 16
      %v1002 = vpop.permute.xlu0 %1001
      %1003 = vrot.lane.b32.xlu0 %v624, 16
      %v1004 = vpop.permute.xlu0 %1003
      %1005 = vrot.lane.b32.xlu0 %v625, 16
      %v1006 = vpop.permute.xlu0 %1005
      %1007 = vrot.lane.b32.xlu0 %v626, 16
      %v1008 = vpop.permute.xlu0 %1007
      %1009 = vrot.lane.b32.xlu0 %v627, 16
      %v1010 = vpop.permute.xlu0 %1009
      %1011 = vrot.lane.b32.xlu0 %v628, 16
      %v1012 = vpop.permute.xlu0 %1011
      %1013 = vrot.lane.b32.xlu0 %v629, 16
      %v1014 = vpop.permute.xlu0 %1013
      %1031 = vrot.lane.b32.xlu0 %v662, 20
      %v1032 = vpop.permute.xlu0 %1031
      %1033 = vrot.lane.b32.xlu0 %v663, 20
      %v1034 = vpop.permute.xlu0 %1033
      %1035 = vrot.lane.b32.xlu0 %v664, 20
      %v1036 = vpop.permute.xlu0 %1035
      %1037 = vrot.lane.b32.xlu0 %v665, 20
      %v1038 = vpop.permute.xlu0 %1037
      %1039 = vrot.lane.b32.xlu0 %v666, 20
      %v1040 = vpop.permute.xlu0 %1039
      %1041 = vrot.lane.b32.xlu0 %v667, 20
      %v1042 = vpop.permute.xlu0 %1041
      %1043 = vrot.lane.b32.xlu0 %v668, 20
      %v1044 = vpop.permute.xlu0 %1043
      %1045 = vrot.lane.b32.xlu0 %v669, 20
      %v1046 = vpop.permute.xlu0 %1045
      %1047 = vrot.lane.b32.xlu0 %v670, 20
      %v1048 = vpop.permute.xlu0 %1047
      %1049 = vrot.lane.b32.xlu0 %v671, 20
      %v1050 = vpop.permute.xlu0 %1049
      %1051 = vrot.lane.b32.xlu0 %v672, 20
      %v1052 = vpop.permute.xlu0 %1051
      %1053 = vrot.lane.b32.xlu0 %v673, 20
      %v1054 = vpop.permute.xlu0 %1053
      %1055 = vrot.lane.b32.xlu0 %v674, 20
      %v1056 = vpop.permute.xlu0 %1055
      %1057 = vrot.lane.b32.xlu0 %v675, 20
      %v1058 = vpop.permute.xlu0 %1057
      %1059 = vrot.lane.b32.xlu0 %v676, 20
      %v1060 = vpop.permute.xlu0 %1059
      %1061 = vrot.lane.b32.xlu0 %v677, 20
      %v1062 = vpop.permute.xlu0 %1061
      %1079 = vrot.lane.b32.xlu0 %v711, 24
      %v1080 = vpop.permute.xlu0 %1079
      %1081 = vrot.lane.b32.xlu0 %v712, 24
      %v1082 = vpop.permute.xlu0 %1081
      %1083 = vrot.lane.b32.xlu0 %v713, 24
      %v1084 = vpop.permute.xlu0 %1083
      %1085 = vrot.lane.b32.xlu0 %v714, 24
      %v1086 = vpop.permute.xlu0 %1085
      %1087 = vrot.lane.b32.xlu0 %v715, 24
      %v1088 = vpop.permute.xlu0 %1087
      %1089 = vrot.lane.b32.xlu0 %v716, 24
      %v1090 = vpop.permute.xlu0 %1089
      %1091 = vrot.lane.b32.xlu0 %v717, 24
      %v1092 = vpop.permute.xlu0 %1091
      %1093 = vrot.lane.b32.xlu0 %v718, 24
      %v1094 = vpop.permute.xlu0 %1093
      %1095 = vrot.lane.b32.xlu0 %v719, 24
      %v1096 = vpop.permute.xlu0 %1095
      %1097 = vrot.lane.b32.xlu0 %v720, 24
      %v1098 = vpop.permute.xlu0 %1097
      %1099 = vrot.lane.b32.xlu0 %v721, 24
      %v1100 = vpop.permute.xlu0 %1099
      %1101 = vrot.lane.b32.xlu0 %v722, 24
      %v1102 = vpop.permute.xlu0 %1101
      %1103 = vrot.lane.b32.xlu0 %v723, 24
      %v1104 = vpop.permute.xlu0 %1103
      %1105 = vrot.lane.b32.xlu0 %v724, 24
      %v1106 = vpop.permute.xlu0 %1105
      %1107 = vrot.lane.b32.xlu0 %v725, 24
      %v1108 = vpop.permute.xlu0 %1107
      %1109 = vrot.lane.b32.xlu0 %v726, 24
      %v1110 = vpop.permute.xlu0 %1109
      %1127 = vrot.lane.b32.xlu0 %v759, 28
      %v1128 = vpop.permute.xlu0 %1127
      %1129 = vrot.lane.b32.xlu0 %v760, 28
      %v1130 = vpop.permute.xlu0 %1129
      %1131 = vrot.lane.b32.xlu0 %v761, 28
      %v1132 = vpop.permute.xlu0 %1131
      %1133 = vrot.lane.b32.xlu0 %v762, 28
      %v1134 = vpop.permute.xlu0 %1133
      %1135 = vrot.lane.b32.xlu0 %v763, 28
      %v1136 = vpop.permute.xlu0 %1135
      %1137 = vrot.lane.b32.xlu0 %v764, 28
      %v1138 = vpop.permute.xlu0 %1137
      %1139 = vrot.lane.b32.xlu0 %v765, 28
      %v1140 = vpop.permute.xlu0 %1139
      %1141 = vrot.lane.b32.xlu0 %v766, 28
      %v1142 = vpop.permute.xlu0 %1141
      %1143 = vrot.lane.b32.xlu0 %v767, 28
      %v1144 = vpop.permute.xlu0 %1143
      %1145 = vrot.lane.b32.xlu0 %v768, 28
      %v1146 = vpop.permute.xlu0 %1145
      %1147 = vrot.lane.b32.xlu0 %v769, 28
      %v1148 = vpop.permute.xlu0 %1147
      %1149 = vrot.lane.b32.xlu0 %v770, 28
      %v1150 = vpop.permute.xlu0 %1149
      %1151 = vrot.lane.b32.xlu0 %v771, 28
      %v1152 = vpop.permute.xlu0 %1151
      %1153 = vrot.lane.b32.xlu0 %v772, 28
      %v1154 = vpop.permute.xlu0 %1153
      %1155 = vrot.lane.b32.xlu0 %v773, 28
      %v1156 = vpop.permute.xlu0 %1155
      %1157 = vrot.lane.b32.xlu0 %v774, 28
      %v1158 = vpop.permute.xlu0 %1157
      %1175 = vrot.lane.b32.xlu0 %v807, 32
      %v1176 = vpop.permute.xlu0 %1175
      %1177 = vrot.lane.b32.xlu0 %v808, 32
      %v1178 = vpop.permute.xlu0 %1177
      %1179 = vrot.lane.b32.xlu0 %v809, 32
      %v1180 = vpop.permute.xlu0 %1179
      %1181 = vrot.lane.b32.xlu0 %v810, 32
      %v1182 = vpop.permute.xlu0 %1181
      %1183 = vrot.lane.b32.xlu0 %v811, 32
      %v1184 = vpop.permute.xlu0 %1183
      %1185 = vrot.lane.b32.xlu0 %v812, 32
      %v1186 = vpop.permute.xlu0 %1185
      %1187 = vrot.lane.b32.xlu0 %v813, 32
      %v1188 = vpop.permute.xlu0 %1187
      %1189 = vrot.lane.b32.xlu0 %v814, 32
      %v1190 = vpop.permute.xlu0 %1189
      %1191 = vrot.lane.b32.xlu0 %v815, 32
      %v1192 = vpop.permute.xlu0 %1191
      %1193 = vrot.lane.b32.xlu0 %v816, 32
      %v1194 = vpop.permute.xlu0 %1193
      %1195 = vrot.lane.b32.xlu0 %v817, 32
      %v1196 = vpop.permute.xlu0 %1195
      %1197 = vrot.lane.b32.xlu0 %v818, 32
      %v1198 = vpop.permute.xlu0 %1197
      %1199 = vrot.lane.b32.xlu0 %v819, 32
      %v1200 = vpop.permute.xlu0 %1199
      %1201 = vrot.lane.b32.xlu0 %v820, 32
      %v1202 = vpop.permute.xlu0 %1201
      %1203 = vrot.lane.b32.xlu0 %v821, 32
      %v1204 = vpop.permute.xlu0 %1203
      %1205 = vrot.lane.b32.xlu0 %v822, 32
      %v1206 = vpop.permute.xlu0 %1205
      %v1209 = vsel %vm301, %v422, %v840
      %v1212 = vsel %vm301, %v423, %v842
      %v1215 = vsel %vm301, %v424, %v844
      %v1218 = vsel %vm301, %v425, %v846
      %v1221 = vsel %vm301, %v426, %v848
      %v1224 = vsel %vm301, %v427, %v850
      %v1227 = vsel %vm301, %v428, %v852
      %v1230 = vsel %vm301, %v429, %v854
      %v1233 = vsel %vm301, %v430, %v856
      %v1236 = vsel %vm301, %v431, %v858
      %v1239 = vsel %vm301, %v432, %v860
      %v1242 = vsel %vm301, %v433, %v862
      %v1245 = vsel %vm301, %v434, %v864
      %v1248 = vsel %vm301, %v435, %v866
      %v1251 = vsel %vm301, %v436, %v868
      %v1254 = vsel %vm301, %v437, %v870
      %vm1255 = vcmask 64512
      %v1257 = vsel %vm1255, %v1209, %v888
      %v1259 = vsel %vm1255, %v1212, %v890
      %v1261 = vsel %vm1255, %v1215, %v892
      %v1263 = vsel %vm1255, %v1218, %v894
      %v1265 = vsel %vm1255, %v1221, %v896
      %v1267 = vsel %vm1255, %v1224, %v898
      %v1269 = vsel %vm1255, %v1227, %v900
      %v1271 = vsel %vm1255, %v1230, %v902
      %v1273 = vsel %vm1255, %v1233, %v904
      %v1275 = vsel %vm1255, %v1236, %v906
      %v1277 = vsel %vm1255, %v1239, %v908
      %v1279 = vsel %vm1255, %v1242, %v910
      %v1281 = vsel %vm1255, %v1245, %v912
      %v1283 = vsel %vm1255, %v1248, %v914
      %v1285 = vsel %vm1255, %v1251, %v916
      %v1287 = vsel %vm1255, %v1254, %v918
      %vm1288 = vcmask 97280
      %v1290 = vsel %vm1288, %v1257, %v936
      %v1292 = vsel %vm1288, %v1259, %v938
      %v1294 = vsel %vm1288, %v1261, %v940
      %v1296 = vsel %vm1288, %v1263, %v942
      %v1298 = vsel %vm1288, %v1265, %v944
      %v1300 = vsel %vm1288, %v1267, %v946
      %v1302 = vsel %vm1288, %v1269, %v948
      %v1304 = vsel %vm1288, %v1271, %v950
      %v1306 = vsel %vm1288, %v1273, %v952
      %v1308 = vsel %vm1288, %v1275, %v954
      %v1310 = vsel %vm1288, %v1277, %v956
      %v1312 = vsel %vm1288, %v1279, %v958
      %v1314 = vsel %vm1288, %v1281, %v960
      %v1316 = vsel %vm1288, %v1283, %v962
      %v1318 = vsel %vm1288, %v1285, %v964
      %v1320 = vsel %vm1288, %v1287, %v966
      %vm1321 = vcmask 130048
      %v1323 = vsel %vm1321, %v1290, %v984
      %v1325 = vsel %vm1321, %v1292, %v986
      %v1327 = vsel %vm1321, %v1294, %v988
      %v1329 = vsel %vm1321, %v1296, %v990
      %v1331 = vsel %vm1321, %v1298, %v992
      %v1333 = vsel %vm1321, %v1300, %v994
      %v1335 = vsel %vm1321, %v1302, %v996
      %v1337 = vsel %vm1321, %v1304, %v998
      %v1339 = vsel %vm1321, %v1306, %v1000
      %v1341 = vsel %vm1321, %v1308, %v1002
      %v1343 = vsel %vm1321, %v1310, %v1004
      %v1345 = vsel %vm1321, %v1312, %v1006
      %v1347 = vsel %vm1321, %v1314, %v1008
      %v1349 = vsel %vm1321, %v1316, %v1010
      %v1351 = vsel %vm1321, %v1318, %v1012
      %v1353 = vsel %vm1321, %v1320, %v1014
      %vm1354 = vcmask 162816
      %v1356 = vsel %vm1354, %v1323, %v1032
      %v1358 = vsel %vm1354, %v1325, %v1034
      %v1360 = vsel %vm1354, %v1327, %v1036
      %v1362 = vsel %vm1354, %v1329, %v1038
      %v1364 = vsel %vm1354, %v1331, %v1040
      %v1366 = vsel %vm1354, %v1333, %v1042
      %v1368 = vsel %vm1354, %v1335, %v1044
      %v1370 = vsel %vm1354, %v1337, %v1046
      %v1372 = vsel %vm1354, %v1339, %v1048
      %v1374 = vsel %vm1354, %v1341, %v1050
      %v1376 = vsel %vm1354, %v1343, %v1052
      %v1378 = vsel %vm1354, %v1345, %v1054
      %v1380 = vsel %vm1354, %v1347, %v1056
      %v1382 = vsel %vm1354, %v1349, %v1058
      %v1384 = vsel %vm1354, %v1351, %v1060
      %v1386 = vsel %vm1354, %v1353, %v1062
      %vm1387 = vcmask 195584
      %v1389 = vsel %vm1387, %v1356, %v1080
      %v1391 = vsel %vm1387, %v1358, %v1082
      %v1393 = vsel %vm1387, %v1360, %v1084
      %v1395 = vsel %vm1387, %v1362, %v1086
      %v1397 = vsel %vm1387, %v1364, %v1088
      %v1399 = vsel %vm1387, %v1366, %v1090
      %v1401 = vsel %vm1387, %v1368, %v1092
      %v1403 = vsel %vm1387, %v1370, %v1094
      %v1405 = vsel %vm1387, %v1372, %v1096
      %v1407 = vsel %vm1387, %v1374, %v1098
      %v1409 = vsel %vm1387, %v1376, %v1100
      %v1411 = vsel %vm1387, %v1378, %v1102
      %v1413 = vsel %vm1387, %v1380, %v1104
      %v1415 = vsel %vm1387, %v1382, %v1106
      %v1417 = vsel %vm1387, %v1384, %v1108
      %v1419 = vsel %vm1387, %v1386, %v1110
      %vm1420 = vcmask 228352
      %v1422 = vsel %vm1420, %v1389, %v1128
      %v1424 = vsel %vm1420, %v1391, %v1130
      %v1426 = vsel %vm1420, %v1393, %v1132
      %v1428 = vsel %vm1420, %v1395, %v1134
      %v1430 = vsel %vm1420, %v1397, %v1136
      %v1432 = vsel %vm1420, %v1399, %v1138
      %v1434 = vsel %vm1420, %v1401, %v1140
      %v1436 = vsel %vm1420, %v1403, %v1142
      %v1438 = vsel %vm1420, %v1405, %v1144
      %v1440 = vsel %vm1420, %v1407, %v1146
      %v1442 = vsel %vm1420, %v1409, %v1148
      %v1444 = vsel %vm1420, %v1411, %v1150
      %v1446 = vsel %vm1420, %v1413, %v1152
      %v1448 = vsel %vm1420, %v1415, %v1154
      %v1450 = vsel %vm1420, %v1417, %v1156
      %v1452 = vsel %vm1420, %v1419, %v1158
      %vm1453 = vcmask 261120
      %v1455 = vsel %vm1453, %v1422, %v1176
      %v1457 = vsel %vm1453, %v1424, %v1178
      %v1459 = vsel %vm1453, %v1426, %v1180
      %v1461 = vsel %vm1453, %v1428, %v1182
      %v1463 = vsel %vm1453, %v1430, %v1184
      %v1465 = vsel %vm1453, %v1432, %v1186
      %v1467 = vsel %vm1453, %v1434, %v1188
      %v1469 = vsel %vm1453, %v1436, %v1190
      %v1471 = vsel %vm1453, %v1438, %v1192
      %v1473 = vsel %vm1453, %v1440, %v1194
      %v1475 = vsel %vm1453, %v1442, %v1196
      %v1477 = vsel %vm1453, %v1444, %v1198
      %v1479 = vsel %vm1453, %v1446, %v1200
      %v1481 = vsel %vm1453, %v1448, %v1202
      %v1483 = vsel %vm1453, %v1450, %v1204
      %v1485 = vsel %vm1453, %v1452, %v1206
      %v1486 = vld [vmem:[%s1] sm:$0xf]
      %v1487 = vld [vmem:[%s1 + $0x4] sm:$0xf]
      %v1488 = vld [vmem:[%s1 + $0x8] sm:$0xf]
      %v1489 = vld [vmem:[%s1 + $0xc] sm:$0xf]
      %v1490 = vld [vmem:[%s1 + $0x10] sm:$0x3]
      %v1496 = vunpack.c.l.b16 %v1486
      %v1497 = vunpack.c.l.b16 %v1487
      %v1498 = vunpack.c.l.b16 %v1488
      %v1499 = vunpack.c.l.b16 %v1489
      %v1500 = vunpack.c.l.b16 %v1490
      %v1501 = vpack.c.b16 %v1497, %v1496
      %v1502 = vpack.c.b16 %v1499, %v1498
      %v1503 = vpack.c.b16 %v1500, %v1500
      %vm1506 = vcmask 293888
      %v1507 = vsel %vm1506, %v1455, 0
      %v1509 = vsel %vm1506, %v1457, 0
      %v1511 = vsel %vm1506, %v1459, 0
      %v1513 = vsel %vm1506, %v1461, 0
      %v1515 = vsel %vm1506, %v1463, 0
      %v1517 = vsel %vm1506, %v1465, 0
      %v1519 = vsel %vm1506, %v1467, 0
      %v1521 = vsel %vm1506, %v1469, 0
      %v1523 = vsel %vm1506, %v1471, 0
      %v1525 = vsel %vm1506, %v1473, 0
      %v1527 = vsel %vm1506, %v1475, 0
      %v1529 = vsel %vm1506, %v1477, 0
      %v1531 = vsel %vm1506, %v1479, 0
      %v1533 = vsel %vm1506, %v1481, 0
      %v1535 = vsel %vm1506, %v1483, 0
      %v1537 = vsel %vm1506, %v1485, 0
      %vm1539 = vcmask 1041408
      %v1541 = vsel %vm1539, %v1503, 0
      %1543 = vmatprep.subr.bf16.mxu0 0
      %1544 = vmatpush1.bf16.msra.mxu0 %v1501
      %1545 = vmatprep.subr.bf16.mxu0 0
      %1546 = vmatpush1.bf16.msra.mxu0 %v1502
      %1547 = vmatprep.subr.bf16.mxu0 0
      %1548 = vmatpush1.bf16.msra.mxu0 %v1541
      %1549 = vmatprep.subr.bf16.mxu0 0
      %1550 = vmatpush1.bf16.msra.mxu0 0
      %1551 = vmatprep.subr.bf16.mxu0 0
      %1552 = vmatpush1.bf16.msra.mxu0 0
      %1553 = vmatprep.subr.bf16.mxu0 0
      %1554 = vmatpush1.bf16.msra.mxu0 0
      %1555 = vmatprep.subr.bf16.mxu0 0
      %1556 = vmatpush1.bf16.msra.mxu0 0
      %1557 = vmatprep.subr.bf16.mxu0 0
      %1558 = vmatpush1.bf16.msra.mxu0 0
      %1559 = vmatprep.subr.bf16.mxu0 0
      %1560 = vmatpush1.bf16.msra.mxu0 0
      %1561 = vmatprep.subr.bf16.mxu0 0
      %1562 = vmatpush1.bf16.msra.mxu0 0
      %1563 = vmatprep.subr.bf16.mxu0 0
      %1564 = vmatpush1.bf16.msra.mxu0 0
      %1565 = vmatprep.subr.bf16.mxu0 0
      %1566 = vmatpush1.bf16.msra.mxu0 0
      %1567 = vmatprep.subr.bf16.mxu0 0
      %1568 = vmatpush1.bf16.msra.mxu0 0
      %1569 = vmatprep.subr.bf16.mxu0 0
      %1570 = vmatpush1.bf16.msra.mxu0 0
      %1571 = vmatprep.subr.bf16.mxu0 0
      %1572 = vmatpush1.bf16.msra.mxu0 0
      %1573 = vmatprep.subr.bf16.mxu0 0
      %1574 = vmatpush1.bf16.msra.mxu0 0
      %1575 = vmatprep.mubr.bf16.mxu0 0
      %1576 = vmatmul.mubr.bf16.gmra.mrb[0].mxu0 %v1507
      %v1577 = vpop.f32.mrb[0].mxu0
      %v1578 = vadd.f32 0.0, %v1577
      %v1579 = vpop.f32.mrb[0].mxu0
      %v1580 = vpop.f32.mrb[0].mxu0
      %v1581 = vadd.f32 0.0, %v1580
      %v1582 = vpop.f32.mrb[0].mxu0
      %1583 = vmatprep.mubr.bf16.mxu0 0
      %1584 = vmatmul.mubr.bf16.gmra.mrb[0].mxu0 %v1509
      %v1585 = vpop.f32.mrb[0].mxu0
      %v1586 = vadd.f32 0.0, %v1585
      %v1587 = vpop.f32.mrb[0].mxu0
      %v1588 = vpop.f32.mrb[0].mxu0
      %v1589 = vadd.f32 0.0, %v1588
      %v1590 = vpop.f32.mrb[0].mxu0
      %1591 = vmatprep.mubr.bf16.mxu0 0
      %1592 = vmatmul.mubr.bf16.gmra.mrb[0].mxu0 %v1511
      %v1593 = vpop.f32.mrb[0].mxu0
      %v1594 = vadd.f32 0.0, %v1593
      %v1595 = vpop.f32.mrb[0].mxu0
      %v1596 = vpop.f32.mrb[0].mxu0
      %v1597 = vadd.f32 0.0, %v1596
      %v1598 = vpop.f32.mrb[0].mxu0
      %1599 = vmatprep.mubr.bf16.mxu0 0
      %1600 = vmatmul.mubr.bf16.gmra.mrb[0].mxu0 %v1513
      %v1601 = vpop.f32.mrb[0].mxu0
      %v1602 = vadd.f32 0.0, %v1601
      %v1603 = vpop.f32.mrb[0].mxu0
      %v1604 = vpop.f32.mrb[0].mxu0
      %v1605 = vadd.f32 0.0, %v1604
      %v1606 = vpop.f32.mrb[0].mxu0
      %1607 = vmatprep.mubr.bf16.mxu0 0
      %1608 = vmatmul.mubr.bf16.gmra.mrb[0].mxu0 %v1515
      %v1609 = vpop.f32.mrb[0].mxu0
      %v1610 = vadd.f32 0.0, %v1609
      %v1611 = vpop.f32.mrb[0].mxu0
      %v1612 = vpop.f32.mrb[0].mxu0
      %v1613 = vadd.f32 0.0, %v1612
      %v1614 = vpop.f32.mrb[0].mxu0
      %1615 = vmatprep.mubr.bf16.mxu0 0
      %1616 = vmatmul.mubr.bf16.gmra.mrb[0].mxu0 %v1517
      %v1617 = vpop.f32.mrb[0].mxu0
      %v1618 = vadd.f32 0.0, %v1617
      %v1619 = vpop.f32.mrb[0].mxu0
      %v1620 = vpop.f32.mrb[0].mxu0
      %v1621 = vadd.f32 0.0, %v1620
      %v1622 = vpop.f32.mrb[0].mxu0
      %1623 = vmatprep.mubr.bf16.mxu0 0
      %1624 = vmatmul.mubr.bf16.gmra.mrb[0].mxu0 %v1519
      %v1625 = vpop.f32.mrb[0].mxu0
      %v1626 = vadd.f32 0.0, %v1625
      %v1627 = vpop.f32.mrb[0].mxu0
      %v1628 = vpop.f32.mrb[0].mxu0
      %v1629 = vadd.f32 0.0, %v1628
      %v1630 = vpop.f32.mrb[0].mxu0
      %1631 = vmatprep.mubr.bf16.mxu0 0
      %1632 = vmatmul.mubr.bf16.gmra.mrb[0].mxu0 %v1521
      %v1633 = vpop.f32.mrb[0].mxu0
      %v1634 = vadd.f32 0.0, %v1633
      %v1635 = vpop.f32.mrb[0].mxu0
      %v1636 = vpop.f32.mrb[0].mxu0
      %v1637 = vadd.f32 0.0, %v1636
      %v1638 = vpop.f32.mrb[0].mxu0
      %1639 = vmatprep.mubr.bf16.mxu0 0
      %1640 = vmatmul.mubr.bf16.gmra.mrb[0].mxu0 %v1523
      %v1641 = vpop.f32.mrb[0].mxu0
      %v1642 = vadd.f32 0.0, %v1641
      %v1643 = vpop.f32.mrb[0].mxu0
      %v1644 = vpop.f32.mrb[0].mxu0
      %v1645 = vadd.f32 0.0, %v1644
      %v1646 = vpop.f32.mrb[0].mxu0
      %1647 = vmatprep.mubr.bf16.mxu0 0
      %1648 = vmatmul.mubr.bf16.gmra.mrb[0].mxu0 %v1525
      %v1649 = vpop.f32.mrb[0].mxu0
      %v1650 = vadd.f32 0.0, %v1649
      %v1651 = vpop.f32.mrb[0].mxu0
      %v1652 = vpop.f32.mrb[0].mxu0
      %v1653 = vadd.f32 0.0, %v1652
      %v1654 = vpop.f32.mrb[0].mxu0
      %1655 = vmatprep.mubr.bf16.mxu0 0
      %1656 = vmatmul.mubr.bf16.gmra.mrb[0].mxu0 %v1527
      %v1657 = vpop.f32.mrb[0].mxu0
      %v1658 = vadd.f32 0.0, %v1657
      %v1659 = vpop.f32.mrb[0].mxu0
      %v1660 = vpop.f32.mrb[0].mxu0
      %v1661 = vadd.f32 0.0, %v1660
      %v1662 = vpop.f32.mrb[0].mxu0
      %1663 = vmatprep.mubr.bf16.mxu0 0
      %1664 = vmatmul.mubr.bf16.gmra.mrb[0].mxu0 %v1529
      %v1665 = vpop.f32.mrb[0].mxu0
      %v1666 = vadd.f32 0.0, %v1665
      %v1667 = vpop.f32.mrb[0].mxu0
      %v1668 = vpop.f32.mrb[0].mxu0
      %v1669 = vadd.f32 0.0, %v1668
      %v1670 = vpop.f32.mrb[0].mxu0
      %1671 = vmatprep.mubr.bf16.mxu0 0
      %1672 = vmatmul.mubr.bf16.gmra.mrb[0].mxu0 %v1531
      %v1673 = vpop.f32.mrb[0].mxu0
      %v1674 = vadd.f32 0.0, %v1673
      %v1675 = vpop.f32.mrb[0].mxu0
      %v1676 = vpop.f32.mrb[0].mxu0
      %v1677 = vadd.f32 0.0, %v1676
      %v1678 = vpop.f32.mrb[0].mxu0
      %1679 = vmatprep.mubr.bf16.mxu0 0
      %1680 = vmatmul.mubr.bf16.gmra.mrb[0].mxu0 %v1533
      %v1681 = vpop.f32.mrb[0].mxu0
      %v1682 = vadd.f32 0.0, %v1681
      %v1683 = vpop.f32.mrb[0].mxu0
      %v1684 = vpop.f32.mrb[0].mxu0
      %v1685 = vadd.f32 0.0, %v1684
      %v1686 = vpop.f32.mrb[0].mxu0
      %1687 = vmatprep.mubr.bf16.mxu0 0
      %1688 = vmatmul.mubr.bf16.gmra.mrb[0].mxu0 %v1535
      %v1689 = vpop.f32.mrb[0].mxu0
      %v1690 = vadd.f32 0.0, %v1689
      %v1691 = vpop.f32.mrb[0].mxu0
      %v1692 = vpop.f32.mrb[0].mxu0
      %v1693 = vadd.f32 0.0, %v1692
      %v1694 = vpop.f32.mrb[0].mxu0
      %1695 = vmatprep.mubr.bf16.mxu0 0
      %1696 = vmatmul.mubr.bf16.gmra.mrb[0].mxu0 %v1537
      %v1697 = vpop.f32.mrb[0].mxu0
      %v1698 = vadd.f32 0.0, %v1697
      %v1699 = vpop.f32.mrb[0].mxu0
      %v1700 = vpop.f32.mrb[0].mxu0
      %v1701 = vadd.f32 0.0, %v1700
      %v1702 = vpop.f32.mrb[0].mxu0
      %1703 = vdwg.mxu0
      %v1704 = vpack.c.bf16 %v1581, %v1578
      %v1705 = vpack.c.bf16 %v1589, %v1586
      %v1706 = vpack.c.bf16 %v1597, %v1594
      %v1707 = vpack.c.bf16 %v1605, %v1602
      %v1708 = vpack.c.bf16 %v1613, %v1610
      %v1709 = vpack.c.bf16 %v1621, %v1618
      %v1710 = vpack.c.bf16 %v1629, %v1626
      %v1711 = vpack.c.bf16 %v1637, %v1634
      %v1712 = vpack.c.bf16 %v1645, %v1642
      %v1713 = vpack.c.bf16 %v1653, %v1650
      %v1714 = vpack.c.bf16 %v1661, %v1658
      %v1715 = vpack.c.bf16 %v1669, %v1666
      %v1716 = vpack.c.bf16 %v1677, %v1674
      %v1717 = vpack.c.bf16 %v1685, %v1682
      %v1718 = vpack.c.bf16 %v1693, %v1690
      %v1719 = vpack.c.bf16 %v1701, %v1698
      %v1736 = vunpack.c.l.b16 %v1704
      %v1737 = vunpack.c.h.b16 %v1704
      %v1738 = vunpack.c.l.b16 %v1705
      %v1739 = vunpack.c.h.b16 %v1705
      %v1740 = vunpack.c.l.b16 %v1706
      %v1741 = vunpack.c.h.b16 %v1706
      %v1742 = vunpack.c.l.b16 %v1707
      %v1743 = vunpack.c.h.b16 %v1707
      %v1744 = vunpack.c.l.b16 %v1708
      %v1745 = vunpack.c.h.b16 %v1708
      %v1746 = vunpack.c.l.b16 %v1709
      %v1747 = vunpack.c.h.b16 %v1709
      %v1748 = vunpack.c.l.b16 %v1710
      %v1749 = vunpack.c.h.b16 %v1710
      %v1750 = vunpack.c.l.b16 %v1711
      %v1751 = vunpack.c.h.b16 %v1711
      %v1752 = vunpack.c.l.b16 %v1712
      %v1753 = vunpack.c.h.b16 %v1712
      %v1754 = vunpack.c.l.b16 %v1713
      %v1755 = vunpack.c.h.b16 %v1713
      %v1756 = vunpack.c.l.b16 %v1714
      %v1757 = vunpack.c.h.b16 %v1714
      %v1758 = vunpack.c.l.b16 %v1715
      %v1759 = vunpack.c.h.b16 %v1715
      %v1760 = vunpack.c.l.b16 %v1716
      %v1761 = vunpack.c.h.b16 %v1716
      %v1762 = vunpack.c.l.b16 %v1717
      %v1763 = vunpack.c.h.b16 %v1717
      %v1764 = vunpack.c.l.b16 %v1718
      %v1765 = vunpack.c.h.b16 %v1718
      %v1766 = vunpack.c.l.b16 %v1719
      %v1767 = vunpack.c.h.b16 %v1719
      %v1768 = vpack.c.b16 %v1736, %v1736
      %v1769 = vpack.c.b16 %v1737, %v1737
      %v1770 = vpack.c.b16 %v1738, %v1738
      %v1771 = vpack.c.b16 %v1739, %v1739
      %v1772 = vpack.c.b16 %v1740, %v1740
      %v1773 = vpack.c.b16 %v1741, %v1741
      %v1774 = vpack.c.b16 %v1742, %v1742
      %v1775 = vpack.c.b16 %v1743, %v1743
      %v1776 = vpack.c.b16 %v1744, %v1744
      %v1777 = vpack.c.b16 %v1745, %v1745
      %v1778 = vpack.c.b16 %v1746, %v1746
      %v1779 = vpack.c.b16 %v1747, %v1747
      %v1780 = vpack.c.b16 %v1748, %v1748
      %v1781 = vpack.c.b16 %v1749, %v1749
      %v1782 = vpack.c.b16 %v1750, %v1750
      %v1783 = vpack.c.b16 %v1751, %v1751
      %v1784 = vpack.c.b16 %v1752, %v1752
      %v1785 = vpack.c.b16 %v1753, %v1753
      %v1786 = vpack.c.b16 %v1754, %v1754
      %v1787 = vpack.c.b16 %v1755, %v1755
      %v1788 = vpack.c.b16 %v1756, %v1756
      %v1789 = vpack.c.b16 %v1757, %v1757
      %v1790 = vpack.c.b16 %v1758, %v1758
      %v1791 = vpack.c.b16 %v1759, %v1759
      %v1792 = vpack.c.b16 %v1760, %v1760
      %v1793 = vpack.c.b16 %v1761, %v1761
      %v1794 = vpack.c.b16 %v1762, %v1762
      %v1795 = vpack.c.b16 %v1763, %v1763
      %v1796 = vpack.c.b16 %v1764, %v1764
      %v1797 = vpack.c.b16 %v1765, %v1765
      %v1798 = vpack.c.b16 %v1766, %v1766
      %v1799 = vpack.c.b16 %v1767, %v1767
      %vm1832 = vcmask 27648
      %1833 = vst.msk [vmem:[%s231] sm:$0xf] %vm1832, %v1768
      %1834 = vst.msk [vmem:[%s231 + $0x4] sm:$0xf] %vm1832, %v1769
      %1835 = vst.msk [vmem:[%s231 + $0x8] sm:$0xf] %vm1832, %v1770
      %1836 = vst.msk [vmem:[%s231 + $0xc] sm:$0xf] %vm1832, %v1771
      %1837 = vst.msk [vmem:[%s231 + $0x10] sm:$0xf] %vm1832, %v1772
      %1838 = vst.msk [vmem:[%s231 + $0x14] sm:$0xf] %vm1832, %v1773
      %1839 = vst.msk [vmem:[%s231 + $0x18] sm:$0xf] %vm1832, %v1774
      %1840 = vst.msk [vmem:[%s231 + $0x1c] sm:$0xf] %vm1832, %v1775
      %1841 = vst.msk [vmem:[%s231 + $0x20] sm:$0xf] %vm1832, %v1776
      %1842 = vst.msk [vmem:[%s231 + $0x24] sm:$0xf] %vm1832, %v1777
      %1843 = vst.msk [vmem:[%s231 + $0x28] sm:$0xf] %vm1832, %v1778
      %1844 = vst.msk [vmem:[%s231 + $0x2c] sm:$0xf] %vm1832, %v1779
      %1845 = vst.msk [vmem:[%s231 + $0x30] sm:$0xf] %vm1832, %v1780
      %1846 = vst.msk [vmem:[%s231 + $0x34] sm:$0xf] %vm1832, %v1781
      %1847 = vst.msk [vmem:[%s231 + $0x38] sm:$0xf] %vm1832, %v1782
      %1848 = vst.msk [vmem:[%s231 + $0x3c] sm:$0xf] %vm1832, %v1783
      %1849 = vst.msk [vmem:[%s231 + $0x40] sm:$0xf] %vm1832, %v1784
      %1850 = vst.msk [vmem:[%s231 + $0x44] sm:$0xf] %vm1832, %v1785
      %1851 = vst.msk [vmem:[%s231 + $0x48] sm:$0xf] %vm1832, %v1786
      %1852 = vst.msk [vmem:[%s231 + $0x4c] sm:$0xf] %vm1832, %v1787
      %1853 = vst.msk [vmem:[%s231 + $0x50] sm:$0xf] %vm1832, %v1788
      %1854 = vst.msk [vmem:[%s231 + $0x54] sm:$0xf] %vm1832, %v1789
      %1855 = vst.msk [vmem:[%s231 + $0x58] sm:$0xf] %vm1832, %v1790
      %1856 = vst.msk [vmem:[%s231 + $0x5c] sm:$0xf] %vm1832, %v1791
      %1857 = vst.msk [vmem:[%s231 + $0x60] sm:$0xf] %vm1832, %v1792
      %1858 = vst.msk [vmem:[%s231 + $0x64] sm:$0xf] %vm1832, %v1793
      %1859 = vst.msk [vmem:[%s231 + $0x68] sm:$0xf] %vm1832, %v1794
      %1860 = vst.msk [vmem:[%s231 + $0x6c] sm:$0xf] %vm1832, %v1795
      %1861 = vst.msk [vmem:[%s231 + $0x70] sm:$0xf] %vm1832, %v1796
      %1862 = vst.msk [vmem:[%s231 + $0x74] sm:$0xf] %vm1832, %v1797
      %1863 = vst.msk [vmem:[%s231 + $0x78] sm:$0xf] %vm1832, %v1798
      %1864 = vst.msk [vmem:[%s231 + $0x7c] sm:$0xf] %vm1832, %v1799
      %v1865 = vsel %vm301, %v1578, 0.0
      %v1866 = vsel %vm301, %v1581, 0.0
      %v1867 = vadd.f32 %v1865, %v1866
      %v1868 = vsel %vm301, %v1586, 0.0
      %v1869 = vadd.f32 %v1867, %v1868
      %v1870 = vsel %vm301, %v1589, 0.0
      %v1871 = vadd.f32 %v1869, %v1870
      %v1872 = vsel %vm301, %v1594, 0.0
      %v1873 = vadd.f32 %v1871, %v1872
      %v1874 = vsel %vm301, %v1597, 0.0
      %v1875 = vadd.f32 %v1873, %v1874
      %v1876 = vsel %vm301, %v1602, 0.0
      %v1877 = vadd.f32 %v1875, %v1876
      %v1878 = vsel %vm301, %v1605, 0.0
      %v1879 = vadd.f32 %v1877, %v1878
      %v1880 = vsel %vm301, %v1610, 0.0
      %v1881 = vadd.f32 %v1879, %v1880
      %v1882 = vsel %vm301, %v1613, 0.0
      %v1883 = vadd.f32 %v1881, %v1882
      %v1884 = vsel %vm301, %v1618, 0.0
      %v1885 = vadd.f32 %v1883, %v1884
      %v1886 = vsel %vm301, %v1621, 0.0
      %v1887 = vadd.f32 %v1885, %v1886
      %v1888 = vsel %vm301, %v1626, 0.0
      %v1889 = vadd.f32 %v1887, %v1888
      %v1890 = vsel %vm301, %v1629, 0.0
      %v1891 = vadd.f32 %v1889, %v1890
      %v1892 = vsel %vm301, %v1634, 0.0
      %v1893 = vadd.f32 %v1891, %v1892
      %v1894 = vsel %vm301, %v1637, 0.0
      %v1895 = vadd.f32 %v1893, %v1894
      %v1896 = vsel %vm301, %v1642, 0.0
      %v1897 = vadd.f32 %v1895, %v1896
      %v1898 = vsel %vm301, %v1645, 0.0
      %v1899 = vadd.f32 %v1897, %v1898
      %v1900 = vsel %vm301, %v1650, 0.0
      %v1901 = vadd.f32 %v1899, %v1900
      %v1902 = vsel %vm301, %v1653, 0.0
      %v1903 = vadd.f32 %v1901, %v1902
      %v1904 = vsel %vm301, %v1658, 0.0
      %v1905 = vadd.f32 %v1903, %v1904
      %v1906 = vsel %vm301, %v1661, 0.0
      %v1907 = vadd.f32 %v1905, %v1906
      %v1908 = vsel %vm301, %v1666, 0.0
      %v1909 = vadd.f32 %v1907, %v1908
      %v1910 = vsel %vm301, %v1669, 0.0
      %v1911 = vadd.f32 %v1909, %v1910
      %v1912 = vsel %vm301, %v1674, 0.0
      %v1913 = vadd.f32 %v1911, %v1912
      %v1914 = vsel %vm301, %v1677, 0.0
      %v1915 = vadd.f32 %v1913, %v1914
      %v1916 = vsel %vm301, %v1682, 0.0
      %v1917 = vadd.f32 %v1915, %v1916
      %v1918 = vsel %vm301, %v1685, 0.0
      %v1919 = vadd.f32 %v1917, %v1918
      %v1920 = vsel %vm301, %v1690, 0.0
      %v1921 = vadd.f32 %v1919, %v1920
      %v1922 = vsel %vm301, %v1693, 0.0
      %v1923 = vadd.f32 %v1921, %v1922
      %v1924 = vsel %vm301, %v1698, 0.0
      %v1925 = vadd.f32 %v1923, %v1924
      %v1926 = vsel %vm301, %v1701, 0.0
      %v1927 = vadd.f32 %v1925, %v1926
      %v1928 = vrot.slane %v1927, 4
      %v1929 = vadd.f32 %v1927, %v1928
      %v1930 = vrot.slane %v1929, 2
      %v1931 = vadd.f32 %v1929, %v1930
      %v1932 = vrot.slane %v1931, 1
      %v1933 = vadd.f32 %v1931, %v1932
      %vm1934 = vcmask 24576
      %1935 = vst.msk [vmem:[%s235] sm:$0x1] %vm1934, %v1933
      %v1936 = vmul.f32 %v1578, %v1578
      %v1937 = vmul.f32 %v1581, %v1581
      %v1938 = vmul.f32 %v1586, %v1586
      %v1939 = vmul.f32 %v1589, %v1589
      %v1940 = vmul.f32 %v1594, %v1594
      %v1941 = vmul.f32 %v1597, %v1597
      %v1942 = vmul.f32 %v1602, %v1602
      %v1943 = vmul.f32 %v1605, %v1605
      %v1944 = vmul.f32 %v1610, %v1610
      %v1945 = vmul.f32 %v1613, %v1613
      %v1946 = vmul.f32 %v1618, %v1618
      %v1947 = vmul.f32 %v1621, %v1621
      %v1948 = vmul.f32 %v1626, %v1626
      %v1949 = vmul.f32 %v1629, %v1629
      %v1950 = vmul.f32 %v1634, %v1634
      %v1951 = vmul.f32 %v1637, %v1637
      %v1952 = vmul.f32 %v1642, %v1642
      %v1953 = vmul.f32 %v1645, %v1645
      %v1954 = vmul.f32 %v1650, %v1650
      %v1955 = vmul.f32 %v1653, %v1653
      %v1956 = vmul.f32 %v1658, %v1658
      %v1957 = vmul.f32 %v1661, %v1661
      %v1958 = vmul.f32 %v1666, %v1666
      %v1959 = vmul.f32 %v1669, %v1669
      %v1960 = vmul.f32 %v1674, %v1674
      %v1961 = vmul.f32 %v1677, %v1677
      %v1962 = vmul.f32 %v1682, %v1682
      %v1963 = vmul.f32 %v1685, %v1685
      %v1964 = vmul.f32 %v1690, %v1690
      %v1965 = vmul.f32 %v1693, %v1693
      %v1966 = vmul.f32 %v1698, %v1698
      %v1967 = vmul.f32 %v1701, %v1701
      %v1968 = vsel %vm301, %v1936, 0.0
      %v1969 = vsel %vm301, %v1937, 0.0
      %v1970 = vadd.f32 %v1968, %v1969
      %v1971 = vsel %vm301, %v1938, 0.0
      %v1972 = vadd.f32 %v1970, %v1971
      %v1973 = vsel %vm301, %v1939, 0.0
      %v1974 = vadd.f32 %v1972, %v1973
      %v1975 = vsel %vm301, %v1940, 0.0
      %v1976 = vadd.f32 %v1974, %v1975
      %v1977 = vsel %vm301, %v1941, 0.0
      %v1978 = vadd.f32 %v1976, %v1977
      %v1979 = vsel %vm301, %v1942, 0.0
      %v1980 = vadd.f32 %v1978, %v1979
      %v1981 = vsel %vm301, %v1943, 0.0
      %v1982 = vadd.f32 %v1980, %v1981
      %v1983 = vsel %vm301, %v1944, 0.0
      %v1984 = vadd.f32 %v1982, %v1983
      %v1985 = vsel %vm301, %v1945, 0.0
      %v1986 = vadd.f32 %v1984, %v1985
      %v1987 = vsel %vm301, %v1946, 0.0
      %v1988 = vadd.f32 %v1986, %v1987
      %v1989 = vsel %vm301, %v1947, 0.0
      %v1990 = vadd.f32 %v1988, %v1989
      %v1991 = vsel %vm301, %v1948, 0.0
      %v1992 = vadd.f32 %v1990, %v1991
      %v1993 = vsel %vm301, %v1949, 0.0
      %v1994 = vadd.f32 %v1992, %v1993
      %v1995 = vsel %vm301, %v1950, 0.0
      %v1996 = vadd.f32 %v1994, %v1995
      %v1997 = vsel %vm301, %v1951, 0.0
      %v1998 = vadd.f32 %v1996, %v1997
      %v1999 = vsel %vm301, %v1952, 0.0
      %v2000 = vadd.f32 %v1998, %v1999
      %v2001 = vsel %vm301, %v1953, 0.0
      %v2002 = vadd.f32 %v2000, %v2001
      %v2003 = vsel %vm301, %v1954, 0.0
      %v2004 = vadd.f32 %v2002, %v2003
      %v2005 = vsel %vm301, %v1955, 0.0
      %v2006 = vadd.f32 %v2004, %v2005
      %v2007 = vsel %vm301, %v1956, 0.0
      %v2008 = vadd.f32 %v2006, %v2007
      %v2009 = vsel %vm301, %v1957, 0.0
      %v2010 = vadd.f32 %v2008, %v2009
      %v2011 = vsel %vm301, %v1958, 0.0
      %v2012 = vadd.f32 %v2010, %v2011
      %v2013 = vsel %vm301, %v1959, 0.0
      %v2014 = vadd.f32 %v2012, %v2013
      %v2015 = vsel %vm301, %v1960, 0.0
      %v2016 = vadd.f32 %v2014, %v2015
      %v2017 = vsel %vm301, %v1961, 0.0
      %v2018 = vadd.f32 %v2016, %v2017
      %v2019 = vsel %vm301, %v1962, 0.0
      %v2020 = vadd.f32 %v2018, %v2019
      %v2021 = vsel %vm301, %v1963, 0.0
      %v2022 = vadd.f32 %v2020, %v2021
      %v2023 = vsel %vm301, %v1964, 0.0
      %v2024 = vadd.f32 %v2022, %v2023
      %v2025 = vsel %vm301, %v1965, 0.0
      %v2026 = vadd.f32 %v2024, %v2025
      %v2027 = vsel %vm301, %v1966, 0.0
      %v2028 = vadd.f32 %v2026, %v2027
      %v2029 = vsel %vm301, %v1967, 0.0
      %v2030 = vadd.f32 %v2028, %v2029
      %v2031 = vrot.slane %v2030, 4
      %v2032 = vadd.f32 %v2030, %v2031
      %v2033 = vrot.slane %v2032, 2
      %v2034 = vadd.f32 %v2032, %v2033
      %v2035 = vrot.slane %v2034, 1
      %v2036 = vadd.f32 %v2034, %v2035
      %2037 = vst.msk [vmem:[%s235 + $0x1] sm:$0x1] %vm1934, %v2036
      %p2038 = scmp.lt.s32.totalorder %s17, 1
      %s2039 = scalar_select %p2038, %s17, 1
      %s2040 = smul.addr %s2039, 32
      %s2041 = smul.addr %s2040, 4
      %s2042 = scalar_lea.vmem %s4, %s2041
      %p2043 = scmp.lt.s32.totalorder %s17, 1
      %s2044 = scalar_select %p2043, %s17, 1
      %s2045 = smul.addr %s2044, 2
      %s2046 = scalar_lea.vmem %s5, %s2045
      // Predicated region
      $region37: #{block_forward.3} parent=35 // pred_check
        %p2047 = pneg %p124
      $region38: #{block_forward.3} parent=35 // pred_check_branch
        %2049 = sbr.rel (%p2047) target = $region40
      $region39: #{block_forward.3} parent=35 // pred_region
        _
      $region40: #{block_forward.3} parent=35 // pred_fallthru
        _
      // Predicated region
      $region41: #{block_forward.3} parent=35 // pred_check
        %p2050 = pneg %p150
      $region42: #{block_forward.3} parent=35 // pred_check_branch
        %2052 = sbr.rel (%p2050) target = $region44
      $region43: #{block_forward.3} parent=35 // pred_region
        _
      $region44: #{block_forward.3} parent=35 // pred_fallthru
        _
    $region36: #{block_forward.3} parent=5 // pred_fallthru
      _
    %p2053 = scmp.le.s32.totalorder 2, %s12
    // Predicated region
    $region45: #{block_forward.3} parent=5 // pred_check
      %p2054 = pneg %p2053
    $region46: #{block_forward.3} parent=5 // pred_check_branch
      %2056 = sbr.rel (%p2054) target = $region48
    $region47: #{block_forward.3} parent=5 // pred_region
      %s2057 = ssub.s32 %s12, 2
      // Predicated region
      $region49: #{block_forward.3} parent=47 // pred_check
        %p2058 = pneg %p130
      $region50: #{block_forward.3} parent=47 // pred_check_branch
        %2060 = sbr.rel (%p2058) target = $region52
      $region51: #{block_forward.3} parent=47 // pred_region
        %p2061 = scmp.lt.s32.totalorder %s18, 1
        %s2062 = scalar_select %p2061, %s18, 1
        %s2063 = smul.addr %s2062, 32
        %s2064 = smul.addr %s2063, 4
        %s2065 = scalar_lea.vmem %s4, %s2064
      $region52: #{block_forward.3} parent=47 // pred_fallthru
        _
      // Predicated region
      $region53: #{block_forward.3} parent=47 // pred_check
        %p2066 = pneg %p156
      $region54: #{block_forward.3} parent=47 // pred_check_branch
        %2068 = sbr.rel (%p2066) target = $region56
      $region55: #{block_forward.3} parent=47 // pred_region
        %p2069 = scmp.lt.s32.totalorder %s18, 1
        %s2070 = scalar_select %p2069, %s18, 1
        %s2071 = smul.addr %s2070, 2
        %s2072 = scalar_lea.vmem %s5, %s2071
      $region56: #{block_forward.3} parent=47 // pred_fallthru
        _
    $region48: #{block_forward.3} parent=5 // pred_fallthru
      _
  $region6: #{block_forward.3} parent=0 // loop_footer
    %s16 = sadd.s32 1, %s12
  $region7: #{block_forward.3} parent=0 // loop_footer_branch
    %11 = sbr.rel target = $region3
  $region8: #{block_forward.3} parent=0 // loop_exit
    _

// kernel: block_forward.4
$region0: #{block_forward.4}
  #allocation0 [shape = 'u32[]', space=smem, size = 0x4, offset = 0x4, fixed_abs, tag = 'smem constant byte address 0x4 - core index']
  #allocation1 [shape = 'u32[144,128]{1,0:T(1,128)}', space=vmem, size = 0x12000, scoped, tag = 'internal scratch']
  #allocation2 [shape = 'f32[18,18,4]{2,1,0:T(8,128)}', space=vmem, size = 0x36000, scoped, tag = 'scratch operand']
  %s0 = inlined_call_operand.vmem [shape: bf16[2,256,4], index: 0, kind: input, shape index: {}]
  %s1 = inlined_call_operand.vmem [shape: bf16[36,4], index: 1, kind: input, shape index: {}]
  %s2 = inlined_call_operand.vmem [shape: f32[1,4], index: 2, kind: input, shape index: {}]
  %s3 = inlined_call_operand.vmem [shape: f32[1,4], index: 3, kind: input, shape index: {}]
  %s4 = inlined_call_operand.vmem [shape: bf16[2,256,4], index: 4, kind: output, shape index: {0}]
  %s5 = inlined_call_operand.vmem [shape: f32[2,2,4], index: 5, kind: output, shape index: {1}]
  %6 = xla_tuple %s4, %s5
  %s7 = sld [smem:[#allocation0]]
  $region57: #{block_forward.4} parent=0
    _
  %s9 = ssub.s32 1, %s7
  %s10 = scalar_select 0, %s9, %s7
  loop: start=0, step=1, limit=4
  $region2: #{block_forward.4} parent=0 // loop_pre_header
    _
  $region3: #{block_forward.4} parent=0 // loop_header
    %s12 = sphi 0, %s16
    %p13 = scmp.ge.s32.totalorder %s12, 4
    %s22 = sphi 0, %s24
    %s25 = sphi 0, %s22
    %s26 = sphi 0, %s25
    %s42 = sphi 0, %s26
    %s46 = sphi 0, %s46
    %s48 = sphi 0, %s46
    %s49 = sphi 0, %s48
    %s63 = sphi 0, %s49
    %s67 = sphi 0, %s67
    %s69 = sphi 0, %s67
    %s70 = sphi 0, %s69
    %s84 = sphi 0, %s70
    %s88 = sphi 0, %s88
    %s90 = sphi 0, %s88
    %s91 = sphi 0, %s90
    %s105 = sphi 0, %s91
    %s111 = sphi 0, %s113
    %s114 = sphi 0, %s111
    %s115 = sphi 0, %s114
    %s131 = sphi 0, %s115
    %s137 = sphi 0, %s139
    %s140 = sphi 0, %s137
    %s141 = sphi 0, %s140
    %s157 = sphi 0, %s141
  $region4: #{block_forward.4} parent=0 // loop_header_branch
    %15 = sbr.rel (%p13) target = $region8
  $region5: #{block_forward.4} parent=0 // loop_body
    %s17 = ssub.s32 %s12, 1
    %s18 = ssub.s32 %s12, 2
    %s19 = sadd.s32 %s12, 1
    %s20 = ssub.s32 %s12, %s19
    %p21 = scmp.eq.s32.totalorder %s20, 0
    %s23 = sadd.s32 %s22, 1
    %s24 = scalar_select %p21, %s22, %s23
    %p27 = pneg %p21
    %p28 = scmp.eq.s32.totalorder %s12, 1
    %p29 = por %p27, %p28
    %p30 = scmp.ne.s32.totalorder %s22, %s25
    %p31 = scmp.eq.s32.totalorder %s12, 0
    %p32 = por %p30, %p31
    %p33 = scmp.ne.s32.totalorder %s22, %s25
    %p34 = scmp.eq.s32.totalorder %s17, 1
    %p35 = por %p33, %p34
    %p36 = scmp.ne.s32.totalorder %s25, %s26
    %p37 = scmp.eq.s32.totalorder %s17, 0
    %p38 = por %p36, %p37
    %p39 = scmp.ne.s32.totalorder %s25, %s26
    %p40 = scmp.eq.s32.totalorder %s18, 1
    %p41 = por %p39, %p40
    %p43 = scmp.ne.s32.totalorder %s26, %s42
    %p44 = scmp.eq.s32.totalorder %s18, 0
    %p45 = por %p43, %p44
    %s47 = sadd.s32 %s46, 1
    %p50 = scmp.eq.s32.totalorder %s12, 1
    %p51 = scmp.ne.s32.totalorder %s46, %s48
    %p52 = scmp.eq.s32.totalorder %s12, 0
    %p53 = por %p51, %p52
    %p54 = scmp.ne.s32.totalorder %s46, %s48
    %p55 = scmp.eq.s32.totalorder %s17, 1
    %p56 = por %p54, %p55
    %p57 = scmp.ne.s32.totalorder %s48, %s49
    %p58 = scmp.eq.s32.totalorder %s17, 0
    %p59 = por %p57, %p58
    %p60 = scmp.ne.s32.totalorder %s48, %s49
    %p61 = scmp.eq.s32.totalorder %s18, 1
    %p62 = por %p60, %p61
    %p64 = scmp.ne.s32.totalorder %s49, %s63
    %p65 = scmp.eq.s32.totalorder %s18, 0
    %p66 = por %p64, %p65
    %s68 = sadd.s32 %s67, 1
    %p71 = scmp.eq.s32.totalorder %s12, 1
    %p72 = scmp.ne.s32.totalorder %s67, %s69
    %p73 = scmp.eq.s32.totalorder %s12, 0
    %p74 = por %p72, %p73
    %p75 = scmp.ne.s32.totalorder %s67, %s69
    %p76 = scmp.eq.s32.totalorder %s17, 1
    %p77 = por %p75, %p76
    %p78 = scmp.ne.s32.totalorder %s69, %s70
    %p79 = scmp.eq.s32.totalorder %s17, 0
    %p80 = por %p78, %p79
    %p81 = scmp.ne.s32.totalorder %s69, %s70
    %p82 = scmp.eq.s32.totalorder %s18, 1
    %p83 = por %p81, %p82
    %p85 = scmp.ne.s32.totalorder %s70, %s84
    %p86 = scmp.eq.s32.totalorder %s18, 0
    %p87 = por %p85, %p86
    %s89 = sadd.s32 %s88, 1
    %p92 = scmp.eq.s32.totalorder %s12, 1
    %p93 = scmp.ne.s32.totalorder %s88, %s90
    %p94 = scmp.eq.s32.totalorder %s12, 0
    %p95 = por %p93, %p94
    %p96 = scmp.ne.s32.totalorder %s88, %s90
    %p97 = scmp.eq.s32.totalorder %s17, 1
    %p98 = por %p96, %p97
    %p99 = scmp.ne.s32.totalorder %s90, %s91
    %p100 = scmp.eq.s32.totalorder %s17, 0
    %p101 = por %p99, %p100
    %p102 = scmp.ne.s32.totalorder %s90, %s91
    %p103 = scmp.eq.s32.totalorder %s18, 1
    %p104 = por %p102, %p103
    %p106 = scmp.ne.s32.totalorder %s91, %s105
    %p107 = scmp.eq.s32.totalorder %s18, 0
    %p108 = por %p106, %p107
    %s109 = ssub.s32 %s12, %s19
    %p110 = scmp.eq.s32.totalorder %s109, 0
    %s112 = sadd.s32 %s111, 1
    %s113 = scalar_select %p110, %s111, %s112
    %p116 = pneg %p110
    %p117 = scmp.eq.s32.totalorder %s12, 1
    %p118 = por %p116, %p117
    %p119 = scmp.ne.s32.totalorder %s111, %s114
    %p120 = scmp.eq.s32.totalorder %s12, 0
    %p121 = por %p119, %p120
    %p122 = scmp.ne.s32.totalorder %s111, %s114
    %p123 = scmp.eq.s32.totalorder %s17, 1
    %p124 = por %p122, %p123
    %p125 = scmp.ne.s32.totalorder %s114, %s115
    %p126 = scmp.eq.s32.totalorder %s17, 0
    %p127 = por %p125, %p126
    %p128 = scmp.ne.s32.totalorder %s114, %s115
    %p129 = scmp.eq.s32.totalorder %s18, 1
    %p130 = por %p128, %p129
    %p132 = scmp.ne.s32.totalorder %s115, %s131
    %p133 = scmp.eq.s32.totalorder %s18, 0
    %p134 = por %p132, %p133
    %s135 = ssub.s32 %s12, %s19
    %p136 = scmp.eq.s32.totalorder %s135, 0
    %s138 = sadd.s32 %s137, 1
    %s139 = scalar_select %p136, %s137, %s138
    %p142 = pneg %p136
    %p143 = scmp.eq.s32.totalorder %s12, 1
    %p144 = por %p142, %p143
    %p145 = scmp.ne.s32.totalorder %s137, %s140
    %p146 = scmp.eq.s32.totalorder %s12, 0
    %p147 = por %p145, %p146
    %p148 = scmp.ne.s32.totalorder %s137, %s140
    %p149 = scmp.eq.s32.totalorder %s17, 1
    %p150 = por %p148, %p149
    %p151 = scmp.ne.s32.totalorder %s140, %s141
    %p152 = scmp.eq.s32.totalorder %s17, 0
    %p153 = por %p151, %p152
    %p154 = scmp.ne.s32.totalorder %s140, %s141
    %p155 = scmp.eq.s32.totalorder %s18, 1
    %p156 = por %p154, %p155
    %p158 = scmp.ne.s32.totalorder %s141, %s157
    %p159 = scmp.eq.s32.totalorder %s18, 0
    %p160 = por %p158, %p159
    %p161 = scmp.le.s32.totalorder 1, %s12
    %p162 = scmp.lt.s32.totalorder %s12, 3
    %p163 = pnand %p161, %p162
    %p164 = pneg %p163
    // Predicated region
    $region9: #{block_forward.4} parent=5 // pred_check
      _
    $region10: #{block_forward.4} parent=5 // pred_check_branch
      %166 = sbr.rel (%p163) target = $region12
    $region11: #{block_forward.4} parent=5 // pred_region
      %s167 = ssub.s32 %s12, 1
      // Predicated region
      $region13: #{block_forward.4} parent=11 // pred_check
        %p168 = pneg %p59
      $region14: #{block_forward.4} parent=11 // pred_check_branch
        %170 = sbr.rel (%p168) target = $region16
      $region15: #{block_forward.4} parent=11 // pred_region
        _
      $region16: #{block_forward.4} parent=11 // pred_fallthru
        _
      // Predicated region
      $region17: #{block_forward.4} parent=11 // pred_check
        %p171 = pneg %p80
      $region18: #{block_forward.4} parent=11 // pred_check_branch
        %173 = sbr.rel (%p171) target = $region20
      $region19: #{block_forward.4} parent=11 // pred_region
        _
      $region20: #{block_forward.4} parent=11 // pred_fallthru
        _
      // Predicated region
      $region21: #{block_forward.4} parent=11 // pred_check
        %p174 = pneg %p101
      $region22: #{block_forward.4} parent=11 // pred_check_branch
        %176 = sbr.rel (%p174) target = $region24
      $region23: #{block_forward.4} parent=11 // pred_region
        _
      $region24: #{block_forward.4} parent=11 // pred_fallthru
        _
    $region12: #{block_forward.4} parent=5 // pred_fallthru
      _
    %p177 = scmp.lt.s32.totalorder %s12, 2
    // Predicated region
    $region25: #{block_forward.4} parent=5 // pred_check
      %p178 = pneg %p177
    $region26: #{block_forward.4} parent=5 // pred_check_branch
      %180 = sbr.rel (%p178) target = $region28
    $region27: #{block_forward.4} parent=5 // pred_region
      // Predicated region
      $region29: #{block_forward.4} parent=27 // pred_check
        %p181 = pneg %p32
      $region30: #{block_forward.4} parent=27 // pred_check_branch
        %183 = sbr.rel (%p181) target = $region32
      $region31: #{block_forward.4} parent=27 // pred_region
        %p184 = scmp.lt.s32.totalorder %s12, 1
        %s185 = scalar_select %p184, %s12, 1
        %s186 = smul.addr %s185, 32
        %s187 = smul.addr %s186, 4
        %s188 = scalar_lea.vmem %s0, %s187
      $region32: #{block_forward.4} parent=27 // pred_fallthru
        _
    $region28: #{block_forward.4} parent=5 // pred_fallthru
      _
    %p189 = scmp.le.s32.totalorder 1, %s12
    %p190 = scmp.lt.s32.totalorder %s12, 3
    %p191 = pnand %p189, %p190
    %p192 = pneg %p191
    // Predicated region
    $region33: #{block_forward.4} parent=5 // pred_check
      _
    $region34: #{block_forward.4} parent=5 // pred_check_branch
      %194 = sbr.rel (%p191) target = $region36
    $region35: #{block_forward.4} parent=5 // pred_region
      %s195 = ssub.s32 %s12, 1
      %p196 = scmp.lt.s32.totalorder %s17, 1
      %s197 = scalar_select %p196, %s17, 1
      %s198 = smul.addr %s197, 32
      %s199 = smul.addr %s198, 4
      %s200 = scalar_lea.vmem %s0, %s199
      %p201 = pneg %p38
      %p202 = pneg %p35
      %p203 = pneg %p59
      %p204 = pneg %p56
      %p205 = pneg %p80
      %p206 = pneg %p77
      %p207 = pneg %p101
      %p208 = pneg %p98
      %p209 = pneg %p127
      %p210 = pneg %p124
      %p211 = scmp.lt.s32.totalorder %s17, 1
      %s212 = scalar_select %p211, %s17, 1
      %s213 = smul.addr %s212, 32
      %s214 = smul.addr %s213, 4
      %s215 = scalar_lea.vmem %s4, %s214
      %p216 = pneg %p153
      %p217 = pneg %p150
      %p218 = scmp.lt.s32.totalorder %s17, 1
      %s219 = scalar_select %p218, %s17, 1
      %s220 = smul.addr %s219, 2
      %s221 = scalar_lea.vmem %s5, %s220
      %p222 = scmp.lt.s32.totalorder %s17, 1
      %s223 = scalar_select %p222, %s17, 1
      %s224 = smul.addr %s223, 32
      %s225 = smul.addr %s224, 4
      %s226 = scalar_lea.vmem %s0, %s225
      %p227 = scmp.lt.s32.totalorder %s17, 1
      %s228 = scalar_select %p227, %s17, 1
      %s229 = smul.addr %s228, 32
      %s230 = smul.addr %s229, 4
      %s231 = scalar_lea.vmem %s4, %s230
      %p232 = scmp.lt.s32.totalorder %s17, 1
      %s233 = scalar_select %p232, %s17, 1
      %s234 = smul.addr %s233, 2
      %s235 = scalar_lea.vmem %s5, %s234
      %v237 = vld [vmem:[%s226] sm:$0xf]
      %v238 = vld [vmem:[%s226 + $0x4] sm:$0xf]
      %v239 = vld [vmem:[%s226 + $0x8] sm:$0xf]
      %v240 = vld [vmem:[%s226 + $0xc] sm:$0xf]
      %v241 = vld [vmem:[%s226 + $0x10] sm:$0xf]
      %v242 = vld [vmem:[%s226 + $0x14] sm:$0xf]
      %v243 = vld [vmem:[%s226 + $0x18] sm:$0xf]
      %v244 = vld [vmem:[%s226 + $0x1c] sm:$0xf]
      %v245 = vld [vmem:[%s226 + $0x20] sm:$0xf]
      %v246 = vld [vmem:[%s226 + $0x24] sm:$0xf]
      %v247 = vld [vmem:[%s226 + $0x28] sm:$0xf]
      %v248 = vld [vmem:[%s226 + $0x2c] sm:$0xf]
      %v249 = vld [vmem:[%s226 + $0x30] sm:$0xf]
      %v250 = vld [vmem:[%s226 + $0x34] sm:$0xf]
      %v251 = vld [vmem:[%s226 + $0x38] sm:$0xf]
      %v252 = vld [vmem:[%s226 + $0x3c] sm:$0xf]
      %v253 = vld [vmem:[%s226 + $0x40] sm:$0xf]
      %v254 = vld [vmem:[%s226 + $0x44] sm:$0xf]
      %v255 = vld [vmem:[%s226 + $0x48] sm:$0xf]
      %v256 = vld [vmem:[%s226 + $0x4c] sm:$0xf]
      %v257 = vld [vmem:[%s226 + $0x50] sm:$0xf]
      %v258 = vld [vmem:[%s226 + $0x54] sm:$0xf]
      %v259 = vld [vmem:[%s226 + $0x58] sm:$0xf]
      %v260 = vld [vmem:[%s226 + $0x5c] sm:$0xf]
      %v261 = vld [vmem:[%s226 + $0x60] sm:$0xf]
      %v262 = vld [vmem:[%s226 + $0x64] sm:$0xf]
      %v263 = vld [vmem:[%s226 + $0x68] sm:$0xf]
      %v264 = vld [vmem:[%s226 + $0x6c] sm:$0xf]
      %v265 = vld [vmem:[%s226 + $0x70] sm:$0xf]
      %v266 = vld [vmem:[%s226 + $0x74] sm:$0xf]
      %v267 = vld [vmem:[%s226 + $0x78] sm:$0xf]
      %v268 = vld [vmem:[%s226 + $0x7c] sm:$0xf]
      %v269 = vunpack.c.l.bf16 %v237
      %v270 = vunpack.c.l.bf16 %v238
      %v271 = vunpack.c.l.bf16 %v239
      %v272 = vunpack.c.l.bf16 %v240
      %v273 = vunpack.c.l.bf16 %v241
      %v274 = vunpack.c.l.bf16 %v242
      %v275 = vunpack.c.l.bf16 %v243
      %v276 = vunpack.c.l.bf16 %v244
      %v277 = vunpack.c.l.bf16 %v245
      %v278 = vunpack.c.l.bf16 %v246
      %v279 = vunpack.c.l.bf16 %v247
      %v280 = vunpack.c.l.bf16 %v248
      %v281 = vunpack.c.l.bf16 %v249
      %v282 = vunpack.c.l.bf16 %v250
      %v283 = vunpack.c.l.bf16 %v251
      %v284 = vunpack.c.l.bf16 %v252
      %v285 = vunpack.c.l.bf16 %v253
      %v286 = vunpack.c.l.bf16 %v254
      %v287 = vunpack.c.l.bf16 %v255
      %v288 = vunpack.c.l.bf16 %v256
      %v289 = vunpack.c.l.bf16 %v257
      %v290 = vunpack.c.l.bf16 %v258
      %v291 = vunpack.c.l.bf16 %v259
      %v292 = vunpack.c.l.bf16 %v260
      %v293 = vunpack.c.l.bf16 %v261
      %v294 = vunpack.c.l.bf16 %v262
      %v295 = vunpack.c.l.bf16 %v263
      %v296 = vunpack.c.l.bf16 %v264
      %v297 = vunpack.c.l.bf16 %v265
      %v298 = vunpack.c.l.bf16 %v266
      %v299 = vunpack.c.l.bf16 %v267
      %v300 = vunpack.c.l.bf16 %v268
      %v301 = vld [vmem:[%s2] sm:$0x1]
      %v303 = vlaneseq
      %v304 = vshrl.u32 %v303, 7
      %v305 = vsub.s32 0, %v304
      %v306 = vrot.slane %v301, %v305
      %v308 = vmul.f32 %v269, %v306
      %v309 = vmul.f32 %v270, %v306
      %v310 = vmul.f32 %v271, %v306
      %v311 = vmul.f32 %v272, %v306
      %v312 = vmul.f32 %v273, %v306
      %v313 = vmul.f32 %v274, %v306
      %v314 = vmul.f32 %v275, %v306
      %v315 = vmul.f32 %v276, %v306
      %v316 = vmul.f32 %v277, %v306
      %v317 = vmul.f32 %v278, %v306
      %v318 = vmul.f32 %v279, %v306
      %v319 = vmul.f32 %v280, %v306
      %v320 = vmul.f32 %v281, %v306
      %v321 = vmul.f32 %v282, %v306
      %v322 = vmul.f32 %v283, %v306
      %v323 = vmul.f32 %v284, %v306
      %v324 = vmul.f32 %v285, %v306
      %v325 = vmul.f32 %v286, %v306
      %v326 = vmul.f32 %v287, %v306
      %v327 = vmul.f32 %v288, %v306
      %v328 = vmul.f32 %v289, %v306
      %v329 = vmul.f32 %v290, %v306
      %v330 = vmul.f32 %v291, %v306
      %v331 = vmul.f32 %v292, %v306
      %v332 = vmul.f32 %v293, %v306
      %v333 = vmul.f32 %v294, %v306
      %v334 = vmul.f32 %v295, %v306
      %v335 = vmul.f32 %v296, %v306
      %v336 = vmul.f32 %v297, %v306
      %v337 = vmul.f32 %v298, %v306
      %v338 = vmul.f32 %v299, %v306
      %v339 = vmul.f32 %v300, %v306
      %v340 = vld [vmem:[%s3] sm:$0x1]
      %v342 = vlaneseq
      %v343 = vshrl.u32 %v342, 7
      %v344 = vsub.s32 0, %v343
      %v345 = vrot.slane %v340, %v344
      %v347 = vadd.f32 %v308, %v345
      %v348 = vadd.f32 %v309, %v345
      %v349 = vadd.f32 %v310, %v345
      %v350 = vadd.f32 %v311, %v345
      %v351 = vadd.f32 %v312, %v345
      %v352 = vadd.f32 %v313, %v345
      %v353 = vadd.f32 %v314, %v345
      %v354 = vadd.f32 %v315, %v345
      %v355 = vadd.f32 %v316, %v345
      %v356 = vadd.f32 %v317, %v345
      %v357 = vadd.f32 %v318, %v345
      %v358 = vadd.f32 %v319, %v345
      %v359 = vadd.f32 %v320, %v345
      %v360 = vadd.f32 %v321, %v345
      %v361 = vadd.f32 %v322, %v345
      %v362 = vadd.f32 %v323, %v345
      %v363 = vadd.f32 %v324, %v345
      %v364 = vadd.f32 %v325, %v345
      %v365 = vadd.f32 %v326, %v345
      %v366 = vadd.f32 %v327, %v345
      %v367 = vadd.f32 %v328, %v345
      %v368 = vadd.f32 %v329, %v345
      %v369 = vadd.f32 %v330, %v345
      %v370 = vadd.f32 %v331, %v345
      %v371 = vadd.f32 %v332, %v345
      %v372 = vadd.f32 %v333, %v345
      %v373 = vadd.f32 %v334, %v345
      %v374 = vadd.f32 %v335, %v345
      %v375 = vadd.f32 %v336, %v345
      %v376 = vadd.f32 %v337, %v345
      %v377 = vadd.f32 %v338, %v345
      %v378 = vadd.f32 %v339, %v345
      %v379 = vmax.f32 %v347, 0.0
      %v380 = vmax.f32 %v348, 0.0
      %v381 = vmax.f32 %v349, 0.0
      %v382 = vmax.f32 %v350, 0.0
      %v383 = vmax.f32 %v351, 0.0
      %v384 = vmax.f32 %v352, 0.0
      %v385 = vmax.f32 %v353, 0.0
      %v386 = vmax.f32 %v354, 0.0
      %v387 = vmax.f32 %v355, 0.0
      %v388 = vmax.f32 %v356, 0.0
      %v389 = vmax.f32 %v357, 0.0
      %v390 = vmax.f32 %v358, 0.0
      %v391 = vmax.f32 %v359, 0.0
      %v392 = vmax.f32 %v360, 0.0
      %v393 = vmax.f32 %v361, 0.0
      %v394 = vmax.f32 %v362, 0.0
      %v395 = vmax.f32 %v363, 0.0
      %v396 = vmax.f32 %v364, 0.0
      %v397 = vmax.f32 %v365, 0.0
      %v398 = vmax.f32 %v366, 0.0
      %v399 = vmax.f32 %v367, 0.0
      %v400 = vmax.f32 %v368, 0.0
      %v401 = vmax.f32 %v369, 0.0
      %v402 = vmax.f32 %v370, 0.0
      %v403 = vmax.f32 %v371, 0.0
      %v404 = vmax.f32 %v372, 0.0
      %v405 = vmax.f32 %v373, 0.0
      %v406 = vmax.f32 %v374, 0.0
      %v407 = vmax.f32 %v375, 0.0
      %v408 = vmax.f32 %v376, 0.0
      %v409 = vmax.f32 %v377, 0.0
      %v410 = vmax.f32 %v378, 0.0
      %vm411 = vcmask 31744
      %412 = vst.msk [vmem:[#allocation2] sm:$0xff] %vm411, 0.0
      %413 = vst.msk [vmem:[#allocation2 + $0x8] sm:$0xff] %vm411, 0.0
      %vm414 = vcmask 25600
      %415 = vst.msk [vmem:[#allocation2 + $0x10] sm:$0x3] %vm414, 0.0
      %416 = vst.msk [vmem:[#allocation2 + $0x18] sm:$0xff] %vm411, 0.0
      %417 = vst.msk [vmem:[#allocation2 + $0x20] sm:$0xff] %vm411, 0.0
      %418 = vst.msk [vmem:[#allocation2 + $0x28] sm:$0x3] %vm414, 0.0
      %419 = vst.msk [vmem:[#allocation2 + $0x30] sm:$0xff] %vm411, 0.0
      %420 = vst.msk [vmem:[#allocation2 + $0x38] sm:$0xff] %vm411, 0.0
      %421 = vst.msk [vmem:[#allocation2 + $0x40] sm:$0x3] %vm414, 0.0
      %422 = vst.msk [vmem:[#allocation2 + $0x48] sm:$0xff] %vm411, 0.0
      %423 = vst.msk [vmem:[#allocation2 + $0x50] sm:$0xff] %vm411, 0.0
      %424 = vst.msk [vmem:[#allocation2 + $0x58] sm:$0x3] %vm414, 0.0
      %425 = vst.msk [vmem:[#allocation2 + $0x60] sm:$0xff] %vm411, 0.0
      %426 = vst.msk [vmem:[#allocation2 + $0x68] sm:$0xff] %vm411, 0.0
      %427 = vst.msk [vmem:[#allocation2 + $0x70] sm:$0x3] %vm414, 0.0
      %428 = vst.msk [vmem:[#allocation2 + $0x78] sm:$0xff] %vm411, 0.0
      %429 = vst.msk [vmem:[#allocation2 + $0x80] sm:$0xff] %vm411, 0.0
      %430 = vst.msk [vmem:[#allocation2 + $0x88] sm:$0x3] %vm414, 0.0
      %431 = vst.msk [vmem:[#allocation2 + $0x90] sm:$0xff] %vm411, 0.0
      %432 = vst.msk [vmem:[#allocation2 + $0x98] sm:$0xff] %vm411, 0.0
      %433 = vst.msk [vmem:[#allocation2 + $0xa0] sm:$0x3] %vm414, 0.0
      %434 = vst.msk [vmem:[#allocation2 + $0xa8] sm:$0xff] %vm411, 0.0
      %435 = vst.msk [vmem:[#allocation2 + $0xb0] sm:$0xff] %vm411, 0.0
      %436 = vst.msk [vmem:[#allocation2 + $0xb8] sm:$0x3] %vm414, 0.0
      %437 = vst.msk [vmem:[#allocation2 + $0xc0] sm:$0xff] %vm411, 0.0
      %438 = vst.msk [vmem:[#allocation2 + $0xc8] sm:$0xff] %vm411, 0.0
      %439 = vst.msk [vmem:[#allocation2 + $0xd0] sm:$0x3] %vm414, 0.0
      %440 = vst.msk [vmem:[#allocation2 + $0xd8] sm:$0xff] %vm411, 0.0
      %441 = vst.msk [vmem:[#allocation2 + $0xe0] sm:$0xff] %vm411, 0.0
      %442 = vst.msk [vmem:[#allocation2 + $0xe8] sm:$0x3] %vm414, 0.0
      %443 = vst.msk [vmem:[#allocation2 + $0xf0] sm:$0xff] %vm411, 0.0
      %444 = vst.msk [vmem:[#allocation2 + $0xf8] sm:$0xff] %vm411, 0.0
      %445 = vst.msk [vmem:[#allocation2 + $0x100] sm:$0x3] %vm414, 0.0
      %446 = vst.msk [vmem:[#allocation2 + $0x108] sm:$0xff] %vm411, 0.0
      %447 = vst.msk [vmem:[#allocation2 + $0x110] sm:$0xff] %vm411, 0.0
      %448 = vst.msk [vmem:[#allocation2 + $0x118] sm:$0x3] %vm414, 0.0
      %449 = vst.msk [vmem:[#allocation2 + $0x120] sm:$0xff] %vm411, 0.0
      %450 = vst.msk [vmem:[#allocation2 + $0x128] sm:$0xff] %vm411, 0.0
      %451 = vst.msk [vmem:[#allocation2 + $0x130] sm:$0x3] %vm414, 0.0
      %452 = vst.msk [vmem:[#allocation2 + $0x138] sm:$0xff] %vm411, 0.0
      %453 = vst.msk [vmem:[#allocation2 + $0x140] sm:$0xff] %vm411, 0.0
      %454 = vst.msk [vmem:[#allocation2 + $0x148] sm:$0x3] %vm414, 0.0
      %455 = vst.msk [vmem:[#allocation2 + $0x150] sm:$0xff] %vm411, 0.0
      %456 = vst.msk [vmem:[#allocation2 + $0x158] sm:$0xff] %vm411, 0.0
      %457 = vst.msk [vmem:[#allocation2 + $0x160] sm:$0x3] %vm414, 0.0
      %458 = vst.msk [vmem:[#allocation2 + $0x168] sm:$0xff] %vm411, 0.0
      %459 = vst.msk [vmem:[#allocation2 + $0x170] sm:$0xff] %vm411, 0.0
      %460 = vst.msk [vmem:[#allocation2 + $0x178] sm:$0x3] %vm414, 0.0
      %461 = vst.msk [vmem:[#allocation2 + $0x180] sm:$0xff] %vm411, 0.0
      %462 = vst.msk [vmem:[#allocation2 + $0x188] sm:$0xff] %vm411, 0.0
      %463 = vst.msk [vmem:[#allocation2 + $0x190] sm:$0x3] %vm414, 0.0
      %464 = vst.msk [vmem:[#allocation2 + $0x198] sm:$0xff] %vm411, 0.0
      %465 = vst.msk [vmem:[#allocation2 + $0x1a0] sm:$0xff] %vm411, 0.0
      %466 = vst.msk [vmem:[#allocation2 + $0x1a8] sm:$0x3] %vm414, 0.0
      %s467 = scalar_lea.vmem [#allocation2], 24
      %468 = vst.msk [vmem:[%s467 + $0x1] sm:$0xff] %vm411, %v379
      %469 = vst.msk [vmem:[%s467 + $0x9] sm:$0xff] %vm411, %v380
      %470 = vst.msk [vmem:[%s467 + $0x19] sm:$0xff] %vm411, %v381
      %471 = vst.msk [vmem:[%s467 + $0x21] sm:$0xff] %vm411, %v382
      %472 = vst.msk [vmem:[%s467 + $0x31] sm:$0xff] %vm411, %v383
      %473 = vst.msk [vmem:[%s467 + $0x39] sm:$0xff] %vm411, %v384
      %474 = vst.msk [vmem:[%s467 + $0x49] sm:$0xff] %vm411, %v385
      %475 = vst.msk [vmem:[%s467 + $0x51] sm:$0xff] %vm411, %v386
      %476 = vst.msk [vmem:[%s467 + $0x61] sm:$0xff] %vm411, %v387
      %477 = vst.msk [vmem:[%s467 + $0x69] sm:$0xff] %vm411, %v388
      %478 = vst.msk [vmem:[%s467 + $0x79] sm:$0xff] %vm411, %v389
      %479 = vst.msk [vmem:[%s467 + $0x81] sm:$0xff] %vm411, %v390
      %480 = vst.msk [vmem:[%s467 + $0x91] sm:$0xff] %vm411, %v391
      %481 = vst.msk [vmem:[%s467 + $0x99] sm:$0xff] %vm411, %v392
      %482 = vst.msk [vmem:[%s467 + $0xa9] sm:$0xff] %vm411, %v393
      %483 = vst.msk [vmem:[%s467 + $0xb1] sm:$0xff] %vm411, %v394
      %484 = vst.msk [vmem:[%s467 + $0xc1] sm:$0xff] %vm411, %v395
      %485 = vst.msk [vmem:[%s467 + $0xc9] sm:$0xff] %vm411, %v396
      %486 = vst.msk [vmem:[%s467 + $0xd9] sm:$0xff] %vm411, %v397
      %487 = vst.msk [vmem:[%s467 + $0xe1] sm:$0xff] %vm411, %v398
      %488 = vst.msk [vmem:[%s467 + $0xf1] sm:$0xff] %vm411, %v399
      %489 = vst.msk [vmem:[%s467 + $0xf9] sm:$0xff] %vm411, %v400
      %490 = vst.msk [vmem:[%s467 + $0x109] sm:$0xff] %vm411, %v401
      %491 = vst.msk [vmem:[%s467 + $0x111] sm:$0xff] %vm411, %v402
      %492 = vst.msk [vmem:[%s467 + $0x121] sm:$0xff] %vm411, %v403
      %493 = vst.msk [vmem:[%s467 + $0x129] sm:$0xff] %vm411, %v404
      %494 = vst.msk [vmem:[%s467 + $0x139] sm:$0xff] %vm411, %v405
      %495 = vst.msk [vmem:[%s467 + $0x141] sm:$0xff] %vm411, %v406
      %496 = vst.msk [vmem:[%s467 + $0x151] sm:$0xff] %vm411, %v407
      %497 = vst.msk [vmem:[%s467 + $0x159] sm:$0xff] %vm411, %v408
      %498 = vst.msk [vmem:[%s467 + $0x169] sm:$0xff] %vm411, %v409
      %499 = vst.msk [vmem:[%s467 + $0x171] sm:$0xff] %vm411, %v410
      %v500 = vld [vmem:[#allocation2] sm:$0xff]
      %v501 = vld [vmem:[#allocation2 + $0x8] sm:$0xff]
      %v502 = vld [vmem:[#allocation2 + $0x18] sm:$0xff]
      %v503 = vld [vmem:[#allocation2 + $0x20] sm:$0xff]
      %v504 = vld [vmem:[#allocation2 + $0x30] sm:$0xff]
      %v505 = vld [vmem:[#allocation2 + $0x38] sm:$0xff]
      %v506 = vld [vmem:[#allocation2 + $0x48] sm:$0xff]
      %v507 = vld [vmem:[#allocation2 + $0x50] sm:$0xff]
      %v508 = vld [vmem:[#allocation2 + $0x60] sm:$0xff]
      %v509 = vld [vmem:[#allocation2 + $0x68] sm:$0xff]
      %v510 = vld [vmem:[#allocation2 + $0x78] sm:$0xff]
      %v511 = vld [vmem:[#allocation2 + $0x80] sm:$0xff]
      %v512 = vld [vmem:[#allocation2 + $0x90] sm:$0xff]
      %v513 = vld [vmem:[#allocation2 + $0x98] sm:$0xff]
      %v514 = vld [vmem:[#allocation2 + $0xa8] sm:$0xff]
      %v515 = vld [vmem:[#allocation2 + $0xb0] sm:$0xff]
      %v516 = vld [vmem:[#allocation2 + $0xc0] sm:$0xff]
      %v517 = vld [vmem:[#allocation2 + $0xc8] sm:$0xff]
      %v518 = vld [vmem:[#allocation2 + $0xd8] sm:$0xff]
      %v519 = vld [vmem:[#allocation2 + $0xe0] sm:$0xff]
      %v520 = vld [vmem:[#allocation2 + $0xf0] sm:$0xff]
      %v521 = vld [vmem:[#allocation2 + $0xf8] sm:$0xff]
      %v522 = vld [vmem:[#allocation2 + $0x108] sm:$0xff]
      %v523 = vld [vmem:[#allocation2 + $0x110] sm:$0xff]
      %v524 = vld [vmem:[#allocation2 + $0x120] sm:$0xff]
      %v525 = vld [vmem:[#allocation2 + $0x128] sm:$0xff]
      %v526 = vld [vmem:[#allocation2 + $0x138] sm:$0xff]
      %v527 = vld [vmem:[#allocation2 + $0x140] sm:$0xff]
      %v528 = vld [vmem:[#allocation2 + $0x150] sm:$0xff]
      %v529 = vld [vmem:[#allocation2 + $0x158] sm:$0xff]
      %v530 = vld [vmem:[#allocation2 + $0x168] sm:$0xff]
      %v531 = vld [vmem:[#allocation2 + $0x170] sm:$0xff]
      %v532 = vpack.c.bf16 %v501, %v500
      %v533 = vpack.c.bf16 %v503, %v502
      %v534 = vpack.c.bf16 %v505, %v504
      %v535 = vpack.c.bf16 %v507, %v506
      %v536 = vpack.c.bf16 %v509, %v508
      %v537 = vpack.c.bf16 %v511, %v510
      %v538 = vpack.c.bf16 %v513, %v512
      %v539 = vpack.c.bf16 %v515, %v514
      %v540 = vpack.c.bf16 %v517, %v516
      %v541 = vpack.c.bf16 %v519, %v518
      %v542 = vpack.c.bf16 %v521, %v520
      %v543 = vpack.c.bf16 %v523, %v522
      %v544 = vpack.c.bf16 %v525, %v524
      %v545 = vpack.c.bf16 %v527, %v526
      %v546 = vpack.c.bf16 %v529, %v528
      %v547 = vpack.c.bf16 %v531, %v530
      %v548 = vld [vmem:[#allocation2 + $0x1] sm:$0xff]
      %v549 = vld [vmem:[#allocation2 + $0x9] sm:$0xff]
      %v550 = vld [vmem:[#allocation2 + $0x19] sm:$0xff]
      %v551 = vld [vmem:[#allocation2 + $0x21] sm:$0xff]
      %v552 = vld [vmem:[#allocation2 + $0x31] sm:$0xff]
      %v553 = vld [vmem:[#allocation2 + $0x39] sm:$0xff]
      %v554 = vld [vmem:[#allocation2 + $0x49] sm:$0xff]
      %v555 = vld [vmem:[#allocation2 + $0x51] sm:$0xff]
      %v556 = vld [vmem:[#allocation2 + $0x61] sm:$0xff]
      %v557 = vld [vmem:[#allocation2 + $0x69] sm:$0xff]
      %v558 = vld [vmem:[#allocation2 + $0x79] sm:$0xff]
      %v559 = vld [vmem:[#allocation2 + $0x81] sm:$0xff]
      %v560 = vld [vmem:[#allocation2 + $0x91] sm:$0xff]
      %v561 = vld [vmem:[#allocation2 + $0x99] sm:$0xff]
      %v562 = vld [vmem:[#allocation2 + $0xa9] sm:$0xff]
      %v563 = vld [vmem:[#allocation2 + $0xb1] sm:$0xff]
      %v564 = vld [vmem:[#allocation2 + $0xc1] sm:$0xff]
      %v565 = vld [vmem:[#allocation2 + $0xc9] sm:$0xff]
      %v566 = vld [vmem:[#allocation2 + $0xd9] sm:$0xff]
      %v567 = vld [vmem:[#allocation2 + $0xe1] sm:$0xff]
      %v568 = vld [vmem:[#allocation2 + $0xf1] sm:$0xff]
      %v569 = vld [vmem:[#allocation2 + $0xf9] sm:$0xff]
      %v570 = vld [vmem:[#allocation2 + $0x109] sm:$0xff]
      %v571 = vld [vmem:[#allocation2 + $0x111] sm:$0xff]
      %v572 = vld [vmem:[#allocation2 + $0x121] sm:$0xff]
      %v573 = vld [vmem:[#allocation2 + $0x129] sm:$0xff]
      %v574 = vld [vmem:[#allocation2 + $0x139] sm:$0xff]
      %v575 = vld [vmem:[#allocation2 + $0x141] sm:$0xff]
      %v576 = vld [vmem:[#allocation2 + $0x151] sm:$0xff]
      %v577 = vld [vmem:[#allocation2 + $0x159] sm:$0xff]
      %v578 = vld [vmem:[#allocation2 + $0x169] sm:$0xff]
      %v579 = vld [vmem:[#allocation2 + $0x171] sm:$0xff]
      %v580 = vpack.c.bf16 %v549, %v548
      %v581 = vpack.c.bf16 %v551, %v550
      %v582 = vpack.c.bf16 %v553, %v552
      %v583 = vpack.c.bf16 %v555, %v554
      %v584 = vpack.c.bf16 %v557, %v556
      %v585 = vpack.c.bf16 %v559, %v558
      %v586 = vpack.c.bf16 %v561, %v560
      %v587 = vpack.c.bf16 %v563, %v562
      %v588 = vpack.c.bf16 %v565, %v564
      %v589 = vpack.c.bf16 %v567, %v566
      %v590 = vpack.c.bf16 %v569, %v568
      %v591 = vpack.c.bf16 %v571, %v570
      %v592 = vpack.c.bf16 %v573, %v572
      %v593 = vpack.c.bf16 %v575, %v574
      %v594 = vpack.c.bf16 %v577, %v576
      %v595 = vpack.c.bf16 %v579, %v578
      %v596 = vld [vmem:[#allocation2 + $0x2] sm:$0xff]
      %v597 = vld [vmem:[#allocation2 + $0xa] sm:$0xff]
      %v598 = vld [vmem:[#allocation2 + $0x1a] sm:$0xff]
      %v599 = vld [vmem:[#allocation2 + $0x22] sm:$0xff]
      %v600 = vld [vmem:[#allocation2 + $0x32] sm:$0xff]
      %v601 = vld [vmem:[#allocation2 + $0x3a] sm:$0xff]
      %v602 = vld [vmem:[#allocation2 + $0x4a] sm:$0xff]
      %v603 = vld [vmem:[#allocation2 + $0x52] sm:$0xff]
      %v604 = vld [vmem:[#allocation2 + $0x62] sm:$0xff]
      %v605 = vld [vmem:[#allocation2 + $0x6a] sm:$0xff]
      %v606 = vld [vmem:[#allocation2 + $0x7a] sm:$0xff]
      %v607 = vld [vmem:[#allocation2 + $0x82] sm:$0xff]
      %v608 = vld [vmem:[#allocation2 + $0x92] sm:$0xff]
      %v609 = vld [vmem:[#allocation2 + $0x9a] sm:$0xff]
      %v610 = vld [vmem:[#allocation2 + $0xaa] sm:$0xff]
      %v611 = vld [vmem:[#allocation2 + $0xb2] sm:$0xff]
      %v612 = vld [vmem:[#allocation2 + $0xc2] sm:$0xff]
      %v613 = vld [vmem:[#allocation2 + $0xca] sm:$0xff]
      %v614 = vld [vmem:[#allocation2 + $0xda] sm:$0xff]
      %v615 = vld [vmem:[#allocation2 + $0xe2] sm:$0xff]
      %v616 = vld [vmem:[#allocation2 + $0xf2] sm:$0xff]
      %v617 = vld [vmem:[#allocation2 + $0xfa] sm:$0xff]
      %v618 = vld [vmem:[#allocation2 + $0x10a] sm:$0xff]
      %v619 = vld [vmem:[#allocation2 + $0x112] sm:$0xff]
      %v620 = vld [vmem:[#allocation2 + $0x122] sm:$0xff]
      %v621 = vld [vmem:[#allocation2 + $0x12a] sm:$0xff]
      %v622 = vld [vmem:[#allocation2 + $0x13a] sm:$0xff]
      %v623 = vld [vmem:[#allocation2 + $0x142] sm:$0xff]
      %v624 = vld [vmem:[#allocation2 + $0x152] sm:$0xff]
      %v625 = vld [vmem:[#allocation2 + $0x15a] sm:$0xff]
      %v626 = vld [vmem:[#allocation2 + $0x16a] sm:$0xff]
      %v627 = vld [vmem:[#allocation2 + $0x172] sm:$0xff]
      %v628 = vpack.c.bf16 %v597, %v596
      %v629 = vpack.c.bf16 %v599, %v598
      %v630 = vpack.c.bf16 %v601, %v600
      %v631 = vpack.c.bf16 %v603, %v602
      %v632 = vpack.c.bf16 %v605, %v604
      %v633 = vpack.c.bf16 %v607, %v606
      %v634 = vpack.c.bf16 %v609, %v608
      %v635 = vpack.c.bf16 %v611, %v610
      %v636 = vpack.c.bf16 %v613, %v612
      %v637 = vpack.c.bf16 %v615, %v614
      %v638 = vpack.c.bf16 %v617, %v616
      %v639 = vpack.c.bf16 %v619, %v618
      %v640 = vpack.c.bf16 %v621, %v620
      %v641 = vpack.c.bf16 %v623, %v622
      %v642 = vpack.c.bf16 %v625, %v624
      %v643 = vpack.c.bf16 %v627, %v626
      %v644 = vld [vmem:[%s467] sm:$0xff]
      %v645 = vld [vmem:[%s467 + $0x8] sm:$0xff]
      %v646 = vld [vmem:[%s467 + $0x18] sm:$0xff]
      %v647 = vld [vmem:[%s467 + $0x20] sm:$0xff]
      %v648 = vld [vmem:[%s467 + $0x30] sm:$0xff]
      %v649 = vld [vmem:[%s467 + $0x38] sm:$0xff]
      %v650 = vld [vmem:[%s467 + $0x48] sm:$0xff]
      %v651 = vld [vmem:[%s467 + $0x50] sm:$0xff]
      %v652 = vld [vmem:[%s467 + $0x60] sm:$0xff]
      %v653 = vld [vmem:[%s467 + $0x68] sm:$0xff]
      %v654 = vld [vmem:[%s467 + $0x78] sm:$0xff]
      %v655 = vld [vmem:[%s467 + $0x80] sm:$0xff]
      %v656 = vld [vmem:[%s467 + $0x90] sm:$0xff]
      %v657 = vld [vmem:[%s467 + $0x98] sm:$0xff]
      %v658 = vld [vmem:[%s467 + $0xa8] sm:$0xff]
      %v659 = vld [vmem:[%s467 + $0xb0] sm:$0xff]
      %v660 = vld [vmem:[%s467 + $0xc0] sm:$0xff]
      %v661 = vld [vmem:[%s467 + $0xc8] sm:$0xff]
      %v662 = vld [vmem:[%s467 + $0xd8] sm:$0xff]
      %v663 = vld [vmem:[%s467 + $0xe0] sm:$0xff]
      %v664 = vld [vmem:[%s467 + $0xf0] sm:$0xff]
      %v665 = vld [vmem:[%s467 + $0xf8] sm:$0xff]
      %v666 = vld [vmem:[%s467 + $0x108] sm:$0xff]
      %v667 = vld [vmem:[%s467 + $0x110] sm:$0xff]
      %v668 = vld [vmem:[%s467 + $0x120] sm:$0xff]
      %v669 = vld [vmem:[%s467 + $0x128] sm:$0xff]
      %v670 = vld [vmem:[%s467 + $0x138] sm:$0xff]
      %v671 = vld [vmem:[%s467 + $0x140] sm:$0xff]
      %v672 = vld [vmem:[%s467 + $0x150] sm:$0xff]
      %v673 = vld [vmem:[%s467 + $0x158] sm:$0xff]
      %v674 = vld [vmem:[%s467 + $0x168] sm:$0xff]
      %v675 = vld [vmem:[%s467 + $0x170] sm:$0xff]
      %v676 = vpack.c.bf16 %v645, %v644
      %v677 = vpack.c.bf16 %v647, %v646
      %v678 = vpack.c.bf16 %v649, %v648
      %v679 = vpack.c.bf16 %v651, %v650
      %v680 = vpack.c.bf16 %v653, %v652
      %v681 = vpack.c.bf16 %v655, %v654
      %v682 = vpack.c.bf16 %v657, %v656
      %v683 = vpack.c.bf16 %v659, %v658
      %v684 = vpack.c.bf16 %v661, %v660
      %v685 = vpack.c.bf16 %v663, %v662
      %v686 = vpack.c.bf16 %v665, %v664
      %v687 = vpack.c.bf16 %v667, %v666
      %v688 = vpack.c.bf16 %v669, %v668
      %v689 = vpack.c.bf16 %v671, %v670
      %v690 = vpack.c.bf16 %v673, %v672
      %v691 = vpack.c.bf16 %v675, %v674
      %v692 = vld [vmem:[%s467 + $0x1] sm:$0xff]
      %v693 = vld [vmem:[%s467 + $0x9] sm:$0xff]
      %v694 = vld [vmem:[%s467 + $0x19] sm:$0xff]
      %v695 = vld [vmem:[%s467 + $0x21] sm:$0xff]
      %v696 = vld [vmem:[%s467 + $0x31] sm:$0xff]
      %v697 = vld [vmem:[%s467 + $0x39] sm:$0xff]
      %v698 = vld [vmem:[%s467 + $0x49] sm:$0xff]
      %v699 = vld [vmem:[%s467 + $0x51] sm:$0xff]
      %v700 = vld [vmem:[%s467 + $0x61] sm:$0xff]
      %v701 = vld [vmem:[%s467 + $0x69] sm:$0xff]
      %v702 = vld [vmem:[%s467 + $0x79] sm:$0xff]
      %v703 = vld [vmem:[%s467 + $0x81] sm:$0xff]
      %v704 = vld [vmem:[%s467 + $0x91] sm:$0xff]
      %v705 = vld [vmem:[%s467 + $0x99] sm:$0xff]
      %v706 = vld [vmem:[%s467 + $0xa9] sm:$0xff]
      %v707 = vld [vmem:[%s467 + $0xb1] sm:$0xff]
      %v708 = vld [vmem:[%s467 + $0xc1] sm:$0xff]
      %v709 = vld [vmem:[%s467 + $0xc9] sm:$0xff]
      %v710 = vld [vmem:[%s467 + $0xd9] sm:$0xff]
      %v711 = vld [vmem:[%s467 + $0xe1] sm:$0xff]
      %v712 = vld [vmem:[%s467 + $0xf1] sm:$0xff]
      %v713 = vld [vmem:[%s467 + $0xf9] sm:$0xff]
      %v714 = vld [vmem:[%s467 + $0x109] sm:$0xff]
      %v715 = vld [vmem:[%s467 + $0x111] sm:$0xff]
      %v716 = vld [vmem:[%s467 + $0x121] sm:$0xff]
      %v717 = vld [vmem:[%s467 + $0x129] sm:$0xff]
      %v718 = vld [vmem:[%s467 + $0x139] sm:$0xff]
      %v719 = vld [vmem:[%s467 + $0x141] sm:$0xff]
      %v720 = vld [vmem:[%s467 + $0x151] sm:$0xff]
      %v721 = vld [vmem:[%s467 + $0x159] sm:$0xff]
      %v722 = vld [vmem:[%s467 + $0x169] sm:$0xff]
      %v723 = vld [vmem:[%s467 + $0x171] sm:$0xff]
      %v724 = vpack.c.bf16 %v693, %v692
      %v725 = vpack.c.bf16 %v695, %v694
      %v726 = vpack.c.bf16 %v697, %v696
      %v727 = vpack.c.bf16 %v699, %v698
      %v728 = vpack.c.bf16 %v701, %v700
      %v729 = vpack.c.bf16 %v703, %v702
      %v730 = vpack.c.bf16 %v705, %v704
      %v731 = vpack.c.bf16 %v707, %v706
      %v732 = vpack.c.bf16 %v709, %v708
      %v733 = vpack.c.bf16 %v711, %v710
      %v734 = vpack.c.bf16 %v713, %v712
      %v735 = vpack.c.bf16 %v715, %v714
      %v736 = vpack.c.bf16 %v717, %v716
      %v737 = vpack.c.bf16 %v719, %v718
      %v738 = vpack.c.bf16 %v721, %v720
      %v739 = vpack.c.bf16 %v723, %v722
      %v740 = vld [vmem:[%s467 + $0x2] sm:$0xff]
      %v741 = vld [vmem:[%s467 + $0xa] sm:$0xff]
      %v742 = vld [vmem:[%s467 + $0x1a] sm:$0xff]
      %v743 = vld [vmem:[%s467 + $0x22] sm:$0xff]
      %v744 = vld [vmem:[%s467 + $0x32] sm:$0xff]
      %v745 = vld [vmem:[%s467 + $0x3a] sm:$0xff]
      %v746 = vld [vmem:[%s467 + $0x4a] sm:$0xff]
      %v747 = vld [vmem:[%s467 + $0x52] sm:$0xff]
      %v748 = vld [vmem:[%s467 + $0x62] sm:$0xff]
      %v749 = vld [vmem:[%s467 + $0x6a] sm:$0xff]
      %v750 = vld [vmem:[%s467 + $0x7a] sm:$0xff]
      %v751 = vld [vmem:[%s467 + $0x82] sm:$0xff]
      %v752 = vld [vmem:[%s467 + $0x92] sm:$0xff]
      %v753 = vld [vmem:[%s467 + $0x9a] sm:$0xff]
      %v754 = vld [vmem:[%s467 + $0xaa] sm:$0xff]
      %v755 = vld [vmem:[%s467 + $0xb2] sm:$0xff]
      %v756 = vld [vmem:[%s467 + $0xc2] sm:$0xff]
      %v757 = vld [vmem:[%s467 + $0xca] sm:$0xff]
      %v758 = vld [vmem:[%s467 + $0xda] sm:$0xff]
      %v759 = vld [vmem:[%s467 + $0xe2] sm:$0xff]
      %v760 = vld [vmem:[%s467 + $0xf2] sm:$0xff]
      %v761 = vld [vmem:[%s467 + $0xfa] sm:$0xff]
      %v762 = vld [vmem:[%s467 + $0x10a] sm:$0xff]
      %v763 = vld [vmem:[%s467 + $0x112] sm:$0xff]
      %v764 = vld [vmem:[%s467 + $0x122] sm:$0xff]
      %v765 = vld [vmem:[%s467 + $0x12a] sm:$0xff]
      %v766 = vld [vmem:[%s467 + $0x13a] sm:$0xff]
      %v767 = vld [vmem:[%s467 + $0x142] sm:$0xff]
      %v768 = vld [vmem:[%s467 + $0x152] sm:$0xff]
      %v769 = vld [vmem:[%s467 + $0x15a] sm:$0xff]
      %v770 = vld [vmem:[%s467 + $0x16a] sm:$0xff]
      %v771 = vld [vmem:[%s467 + $0x172] sm:$0xff]
      %v772 = vpack.c.bf16 %v741, %v740
      %v773 = vpack.c.bf16 %v743, %v742
      %v774 = vpack.c.bf16 %v745, %v744
      %v775 = vpack.c.bf16 %v747, %v746
      %v776 = vpack.c.bf16 %v749, %v748
      %v777 = vpack.c.bf16 %v751, %v750
      %v778 = vpack.c.bf16 %v753, %v752
      %v779 = vpack.c.bf16 %v755, %v754
      %v780 = vpack.c.bf16 %v757, %v756
      %v781 = vpack.c.bf16 %v759, %v758
      %v782 = vpack.c.bf16 %v761, %v760
      %v783 = vpack.c.bf16 %v763, %v762
      %v784 = vpack.c.bf16 %v765, %v764
      %v785 = vpack.c.bf16 %v767, %v766
      %v786 = vpack.c.bf16 %v769, %v768
      %v787 = vpack.c.bf16 %v771, %v770
      %s788 = scalar_lea.vmem [#allocation2], 48
      %v789 = vld [vmem:[%s788] sm:$0xff]
      %v790 = vld [vmem:[%s788 + $0x8] sm:$0xff]
      %v791 = vld [vmem:[%s788 + $0x18] sm:$0xff]
      %v792 = vld [vmem:[%s788 + $0x20] sm:$0xff]
      %v793 = vld [vmem:[%s788 + $0x30] sm:$0xff]
      %v794 = vld [vmem:[%s788 + $0x38] sm:$0xff]
      %v795 = vld [vmem:[%s788 + $0x48] sm:$0xff]
      %v796 = vld [vmem:[%s788 + $0x50] sm:$0xff]
      %v797 = vld [vmem:[%s788 + $0x60] sm:$0xff]
      %v798 = vld [vmem:[%s788 + $0x68] sm:$0xff]
      %v799 = vld [vmem:[%s788 + $0x78] sm:$0xff]
      %v800 = vld [vmem:[%s788 + $0x80] sm:$0xff]
      %v801 = vld [vmem:[%s788 + $0x90] sm:$0xff]
      %v802 = vld [vmem:[%s788 + $0x98] sm:$0xff]
      %v803 = vld [vmem:[%s788 + $0xa8] sm:$0xff]
      %v804 = vld [vmem:[%s788 + $0xb0] sm:$0xff]
      %v805 = vld [vmem:[%s788 + $0xc0] sm:$0xff]
      %v806 = vld [vmem:[%s788 + $0xc8] sm:$0xff]
      %v807 = vld [vmem:[%s788 + $0xd8] sm:$0xff]
      %v808 = vld [vmem:[%s788 + $0xe0] sm:$0xff]
      %v809 = vld [vmem:[%s788 + $0xf0] sm:$0xff]
      %v810 = vld [vmem:[%s788 + $0xf8] sm:$0xff]
      %v811 = vld [vmem:[%s788 + $0x108] sm:$0xff]
      %v812 = vld [vmem:[%s788 + $0x110] sm:$0xff]
      %v813 = vld [vmem:[%s788 + $0x120] sm:$0xff]
      %v814 = vld [vmem:[%s788 + $0x128] sm:$0xff]
      %v815 = vld [vmem:[%s788 + $0x138] sm:$0xff]
      %v816 = vld [vmem:[%s788 + $0x140] sm:$0xff]
      %v817 = vld [vmem:[%s788 + $0x150] sm:$0xff]
      %v818 = vld [vmem:[%s788 + $0x158] sm:$0xff]
      %v819 = vld [vmem:[%s788 + $0x168] sm:$0xff]
      %v820 = vld [vmem:[%s788 + $0x170] sm:$0xff]
      %v821 = vpack.c.bf16 %v790, %v789
      %v822 = vpack.c.bf16 %v792, %v791
      %v823 = vpack.c.bf16 %v794, %v793
      %v824 = vpack.c.bf16 %v796, %v795
      %v825 = vpack.c.bf16 %v798, %v797
      %v826 = vpack.c.bf16 %v800, %v799
      %v827 = vpack.c.bf16 %v802, %v801
      %v828 = vpack.c.bf16 %v804, %v803
      %v829 = vpack.c.bf16 %v806, %v805
      %v830 = vpack.c.bf16 %v808, %v807
      %v831 = vpack.c.bf16 %v810, %v809
      %v832 = vpack.c.bf16 %v812, %v811
      %v833 = vpack.c.bf16 %v814, %v813
      %v834 = vpack.c.bf16 %v816, %v815
      %v835 = vpack.c.bf16 %v818, %v817
      %v836 = vpack.c.bf16 %v820, %v819
      %v837 = vld [vmem:[%s788 + $0x1] sm:$0xff]
      %v838 = vld [vmem:[%s788 + $0x9] sm:$0xff]
      %v839 = vld [vmem:[%s788 + $0x19] sm:$0xff]
      %v840 = vld [vmem:[%s788 + $0x21] sm:$0xff]
      %v841 = vld [vmem:[%s788 + $0x31] sm:$0xff]
      %v842 = vld [vmem:[%s788 + $0x39] sm:$0xff]
      %v843 = vld [vmem:[%s788 + $0x49] sm:$0xff]
      %v844 = vld [vmem:[%s788 + $0x51] sm:$0xff]
      %v845 = vld [vmem:[%s788 + $0x61] sm:$0xff]
      %v846 = vld [vmem:[%s788 + $0x69] sm:$0xff]
      %v847 = vld [vmem:[%s788 + $0x79] sm:$0xff]
      %v848 = vld [vmem:[%s788 + $0x81] sm:$0xff]
      %v849 = vld [vmem:[%s788 + $0x91] sm:$0xff]
      %v850 = vld [vmem:[%s788 + $0x99] sm:$0xff]
      %v851 = vld [vmem:[%s788 + $0xa9] sm:$0xff]
      %v852 = vld [vmem:[%s788 + $0xb1] sm:$0xff]
      %v853 = vld [vmem:[%s788 + $0xc1] sm:$0xff]
      %v854 = vld [vmem:[%s788 + $0xc9] sm:$0xff]
      %v855 = vld [vmem:[%s788 + $0xd9] sm:$0xff]
      %v856 = vld [vmem:[%s788 + $0xe1] sm:$0xff]
      %v857 = vld [vmem:[%s788 + $0xf1] sm:$0xff]
      %v858 = vld [vmem:[%s788 + $0xf9] sm:$0xff]
      %v859 = vld [vmem:[%s788 + $0x109] sm:$0xff]
      %v860 = vld [vmem:[%s788 + $0x111] sm:$0xff]
      %v861 = vld [vmem:[%s788 + $0x121] sm:$0xff]
      %v862 = vld [vmem:[%s788 + $0x129] sm:$0xff]
      %v863 = vld [vmem:[%s788 + $0x139] sm:$0xff]
      %v864 = vld [vmem:[%s788 + $0x141] sm:$0xff]
      %v865 = vld [vmem:[%s788 + $0x151] sm:$0xff]
      %v866 = vld [vmem:[%s788 + $0x159] sm:$0xff]
      %v867 = vld [vmem:[%s788 + $0x169] sm:$0xff]
      %v868 = vld [vmem:[%s788 + $0x171] sm:$0xff]
      %v869 = vpack.c.bf16 %v838, %v837
      %v870 = vpack.c.bf16 %v840, %v839
      %v871 = vpack.c.bf16 %v842, %v841
      %v872 = vpack.c.bf16 %v844, %v843
      %v873 = vpack.c.bf16 %v846, %v845
      %v874 = vpack.c.bf16 %v848, %v847
      %v875 = vpack.c.bf16 %v850, %v849
      %v876 = vpack.c.bf16 %v852, %v851
      %v877 = vpack.c.bf16 %v854, %v853
      %v878 = vpack.c.bf16 %v856, %v855
      %v879 = vpack.c.bf16 %v858, %v857
      %v880 = vpack.c.bf16 %v860, %v859
      %v881 = vpack.c.bf16 %v862, %v861
      %v882 = vpack.c.bf16 %v864, %v863
      %v883 = vpack.c.bf16 %v866, %v865
      %v884 = vpack.c.bf16 %v868, %v867
      %v885 = vld [vmem:[%s788 + $0x2] sm:$0xff]
      %v886 = vld [vmem:[%s788 + $0xa] sm:$0xff]
      %v887 = vld [vmem:[%s788 + $0x1a] sm:$0xff]
      %v888 = vld [vmem:[%s788 + $0x22] sm:$0xff]
      %v889 = vld [vmem:[%s788 + $0x32] sm:$0xff]
      %v890 = vld [vmem:[%s788 + $0x3a] sm:$0xff]
      %v891 = vld [vmem:[%s788 + $0x4a] sm:$0xff]
      %v892 = vld [vmem:[%s788 + $0x52] sm:$0xff]
      %v893 = vld [vmem:[%s788 + $0x62] sm:$0xff]
      %v894 = vld [vmem:[%s788 + $0x6a] sm:$0xff]
      %v895 = vld [vmem:[%s788 + $0x7a] sm:$0xff]
      %v896 = vld [vmem:[%s788 + $0x82] sm:$0xff]
      %v897 = vld [vmem:[%s788 + $0x92] sm:$0xff]
      %v898 = vld [vmem:[%s788 + $0x9a] sm:$0xff]
      %v899 = vld [vmem:[%s788 + $0xaa] sm:$0xff]
      %v900 = vld [vmem:[%s788 + $0xb2] sm:$0xff]
      %v901 = vld [vmem:[%s788 + $0xc2] sm:$0xff]
      %v902 = vld [vmem:[%s788 + $0xca] sm:$0xff]
      %v903 = vld [vmem:[%s788 + $0xda] sm:$0xff]
      %v904 = vld [vmem:[%s788 + $0xe2] sm:$0xff]
      %v905 = vld [vmem:[%s788 + $0xf2] sm:$0xff]
      %v906 = vld [vmem:[%s788 + $0xfa] sm:$0xff]
      %v907 = vld [vmem:[%s788 + $0x10a] sm:$0xff]
      %v908 = vld [vmem:[%s788 + $0x112] sm:$0xff]
      %v909 = vld [vmem:[%s788 + $0x122] sm:$0xff]
      %v910 = vld [vmem:[%s788 + $0x12a] sm:$0xff]
      %v911 = vld [vmem:[%s788 + $0x13a] sm:$0xff]
      %v912 = vld [vmem:[%s788 + $0x142] sm:$0xff]
      %v913 = vld [vmem:[%s788 + $0x152] sm:$0xff]
      %v914 = vld [vmem:[%s788 + $0x15a] sm:$0xff]
      %v915 = vld [vmem:[%s788 + $0x16a] sm:$0xff]
      %v916 = vld [vmem:[%s788 + $0x172] sm:$0xff]
      %v917 = vpack.c.bf16 %v886, %v885
      %v918 = vpack.c.bf16 %v888, %v887
      %v919 = vpack.c.bf16 %v890, %v889
      %v920 = vpack.c.bf16 %v892, %v891
      %v921 = vpack.c.bf16 %v894, %v893
      %v922 = vpack.c.bf16 %v896, %v895
      %v923 = vpack.c.bf16 %v898, %v897
      %v924 = vpack.c.bf16 %v900, %v899
      %v925 = vpack.c.bf16 %v902, %v901
      %v926 = vpack.c.bf16 %v904, %v903
      %v927 = vpack.c.bf16 %v906, %v905
      %v928 = vpack.c.bf16 %v908, %v907
      %v929 = vpack.c.bf16 %v910, %v909
      %v930 = vpack.c.bf16 %v912, %v911
      %v931 = vpack.c.bf16 %v914, %v913
      %v932 = vpack.c.bf16 %v916, %v915
      %949 = vrot.lane.b32.xlu0 %v580, 4
      %v950 = vpop.permute.xlu0 %949
      %951 = vrot.lane.b32.xlu0 %v581, 4
      %v952 = vpop.permute.xlu0 %951
      %953 = vrot.lane.b32.xlu0 %v582, 4
      %v954 = vpop.permute.xlu0 %953
      %955 = vrot.lane.b32.xlu0 %v583, 4
      %v956 = vpop.permute.xlu0 %955
      %957 = vrot.lane.b32.xlu0 %v584, 4
      %v958 = vpop.permute.xlu0 %957
      %959 = vrot.lane.b32.xlu0 %v585, 4
      %v960 = vpop.permute.xlu0 %959
      %961 = vrot.lane.b32.xlu0 %v586, 4
      %v962 = vpop.permute.xlu0 %961
      %963 = vrot.lane.b32.xlu0 %v587, 4
      %v964 = vpop.permute.xlu0 %963
      %965 = vrot.lane.b32.xlu0 %v588, 4
      %v966 = vpop.permute.xlu0 %965
      %967 = vrot.lane.b32.xlu0 %v589, 4
      %v968 = vpop.permute.xlu0 %967
      %969 = vrot.lane.b32.xlu0 %v590, 4
      %v970 = vpop.permute.xlu0 %969
      %971 = vrot.lane.b32.xlu0 %v591, 4
      %v972 = vpop.permute.xlu0 %971
      %973 = vrot.lane.b32.xlu0 %v592, 4
      %v974 = vpop.permute.xlu0 %973
      %975 = vrot.lane.b32.xlu0 %v593, 4
      %v976 = vpop.permute.xlu0 %975
      %977 = vrot.lane.b32.xlu0 %v594, 4
      %v978 = vpop.permute.xlu0 %977
      %979 = vrot.lane.b32.xlu0 %v595, 4
      %v980 = vpop.permute.xlu0 %979
      %997 = vrot.lane.b32.xlu0 %v628, 8
      %v998 = vpop.permute.xlu0 %997
      %999 = vrot.lane.b32.xlu0 %v629, 8
      %v1000 = vpop.permute.xlu0 %999
      %1001 = vrot.lane.b32.xlu0 %v630, 8
      %v1002 = vpop.permute.xlu0 %1001
      %1003 = vrot.lane.b32.xlu0 %v631, 8
      %v1004 = vpop.permute.xlu0 %1003
      %1005 = vrot.lane.b32.xlu0 %v632, 8
      %v1006 = vpop.permute.xlu0 %1005
      %1007 = vrot.lane.b32.xlu0 %v633, 8
      %v1008 = vpop.permute.xlu0 %1007
      %1009 = vrot.lane.b32.xlu0 %v634, 8
      %v1010 = vpop.permute.xlu0 %1009
      %1011 = vrot.lane.b32.xlu0 %v635, 8
      %v1012 = vpop.permute.xlu0 %1011
      %1013 = vrot.lane.b32.xlu0 %v636, 8
      %v1014 = vpop.permute.xlu0 %1013
      %1015 = vrot.lane.b32.xlu0 %v637, 8
      %v1016 = vpop.permute.xlu0 %1015
      %1017 = vrot.lane.b32.xlu0 %v638, 8
      %v1018 = vpop.permute.xlu0 %1017
      %1019 = vrot.lane.b32.xlu0 %v639, 8
      %v1020 = vpop.permute.xlu0 %1019
      %1021 = vrot.lane.b32.xlu0 %v640, 8
      %v1022 = vpop.permute.xlu0 %1021
      %1023 = vrot.lane.b32.xlu0 %v641, 8
      %v1024 = vpop.permute.xlu0 %1023
      %1025 = vrot.lane.b32.xlu0 %v642, 8
      %v1026 = vpop.permute.xlu0 %1025
      %1027 = vrot.lane.b32.xlu0 %v643, 8
      %v1028 = vpop.permute.xlu0 %1027
      %1045 = vrot.lane.b32.xlu0 %v676, 12
      %v1046 = vpop.permute.xlu0 %1045
      %1047 = vrot.lane.b32.xlu0 %v677, 12
      %v1048 = vpop.permute.xlu0 %1047
      %1049 = vrot.lane.b32.xlu0 %v678, 12
      %v1050 = vpop.permute.xlu0 %1049
      %1051 = vrot.lane.b32.xlu0 %v679, 12
      %v1052 = vpop.permute.xlu0 %1051
      %1053 = vrot.lane.b32.xlu0 %v680, 12
      %v1054 = vpop.permute.xlu0 %1053
      %1055 = vrot.lane.b32.xlu0 %v681, 12
      %v1056 = vpop.permute.xlu0 %1055
      %1057 = vrot.lane.b32.xlu0 %v682, 12
      %v1058 = vpop.permute.xlu0 %1057
      %1059 = vrot.lane.b32.xlu0 %v683, 12
      %v1060 = vpop.permute.xlu0 %1059
      %1061 = vrot.lane.b32.xlu0 %v684, 12
      %v1062 = vpop.permute.xlu0 %1061
      %1063 = vrot.lane.b32.xlu0 %v685, 12
      %v1064 = vpop.permute.xlu0 %1063
      %1065 = vrot.lane.b32.xlu0 %v686, 12
      %v1066 = vpop.permute.xlu0 %1065
      %1067 = vrot.lane.b32.xlu0 %v687, 12
      %v1068 = vpop.permute.xlu0 %1067
      %1069 = vrot.lane.b32.xlu0 %v688, 12
      %v1070 = vpop.permute.xlu0 %1069
      %1071 = vrot.lane.b32.xlu0 %v689, 12
      %v1072 = vpop.permute.xlu0 %1071
      %1073 = vrot.lane.b32.xlu0 %v690, 12
      %v1074 = vpop.permute.xlu0 %1073
      %1075 = vrot.lane.b32.xlu0 %v691, 12
      %v1076 = vpop.permute.xlu0 %1075
      %1093 = vrot.lane.b32.xlu0 %v724, 16
      %v1094 = vpop.permute.xlu0 %1093
      %1095 = vrot.lane.b32.xlu0 %v725, 16
      %v1096 = vpop.permute.xlu0 %1095
      %1097 = vrot.lane.b32.xlu0 %v726, 16
      %v1098 = vpop.permute.xlu0 %1097
      %1099 = vrot.lane.b32.xlu0 %v727, 16
      %v1100 = vpop.permute.xlu0 %1099
      %1101 = vrot.lane.b32.xlu0 %v728, 16
      %v1102 = vpop.permute.xlu0 %1101
      %1103 = vrot.lane.b32.xlu0 %v729, 16
      %v1104 = vpop.permute.xlu0 %1103
      %1105 = vrot.lane.b32.xlu0 %v730, 16
      %v1106 = vpop.permute.xlu0 %1105
      %1107 = vrot.lane.b32.xlu0 %v731, 16
      %v1108 = vpop.permute.xlu0 %1107
      %1109 = vrot.lane.b32.xlu0 %v732, 16
      %v1110 = vpop.permute.xlu0 %1109
      %1111 = vrot.lane.b32.xlu0 %v733, 16
      %v1112 = vpop.permute.xlu0 %1111
      %1113 = vrot.lane.b32.xlu0 %v734, 16
      %v1114 = vpop.permute.xlu0 %1113
      %1115 = vrot.lane.b32.xlu0 %v735, 16
      %v1116 = vpop.permute.xlu0 %1115
      %1117 = vrot.lane.b32.xlu0 %v736, 16
      %v1118 = vpop.permute.xlu0 %1117
      %1119 = vrot.lane.b32.xlu0 %v737, 16
      %v1120 = vpop.permute.xlu0 %1119
      %1121 = vrot.lane.b32.xlu0 %v738, 16
      %v1122 = vpop.permute.xlu0 %1121
      %1123 = vrot.lane.b32.xlu0 %v739, 16
      %v1124 = vpop.permute.xlu0 %1123
      %1141 = vrot.lane.b32.xlu0 %v772, 20
      %v1142 = vpop.permute.xlu0 %1141
      %1143 = vrot.lane.b32.xlu0 %v773, 20
      %v1144 = vpop.permute.xlu0 %1143
      %1145 = vrot.lane.b32.xlu0 %v774, 20
      %v1146 = vpop.permute.xlu0 %1145
      %1147 = vrot.lane.b32.xlu0 %v775, 20
      %v1148 = vpop.permute.xlu0 %1147
      %1149 = vrot.lane.b32.xlu0 %v776, 20
      %v1150 = vpop.permute.xlu0 %1149
      %1151 = vrot.lane.b32.xlu0 %v777, 20
      %v1152 = vpop.permute.xlu0 %1151
      %1153 = vrot.lane.b32.xlu0 %v778, 20
      %v1154 = vpop.permute.xlu0 %1153
      %1155 = vrot.lane.b32.xlu0 %v779, 20
      %v1156 = vpop.permute.xlu0 %1155
      %1157 = vrot.lane.b32.xlu0 %v780, 20
      %v1158 = vpop.permute.xlu0 %1157
      %1159 = vrot.lane.b32.xlu0 %v781, 20
      %v1160 = vpop.permute.xlu0 %1159
      %1161 = vrot.lane.b32.xlu0 %v782, 20
      %v1162 = vpop.permute.xlu0 %1161
      %1163 = vrot.lane.b32.xlu0 %v783, 20
      %v1164 = vpop.permute.xlu0 %1163
      %1165 = vrot.lane.b32.xlu0 %v784, 20
      %v1166 = vpop.permute.xlu0 %1165
      %1167 = vrot.lane.b32.xlu0 %v785, 20
      %v1168 = vpop.permute.xlu0 %1167
      %1169 = vrot.lane.b32.xlu0 %v786, 20
      %v1170 = vpop.permute.xlu0 %1169
      %1171 = vrot.lane.b32.xlu0 %v787, 20
      %v1172 = vpop.permute.xlu0 %1171
      %1189 = vrot.lane.b32.xlu0 %v821, 24
      %v1190 = vpop.permute.xlu0 %1189
      %1191 = vrot.lane.b32.xlu0 %v822, 24
      %v1192 = vpop.permute.xlu0 %1191
      %1193 = vrot.lane.b32.xlu0 %v823, 24
      %v1194 = vpop.permute.xlu0 %1193
      %1195 = vrot.lane.b32.xlu0 %v824, 24
      %v1196 = vpop.permute.xlu0 %1195
      %1197 = vrot.lane.b32.xlu0 %v825, 24
      %v1198 = vpop.permute.xlu0 %1197
      %1199 = vrot.lane.b32.xlu0 %v826, 24
      %v1200 = vpop.permute.xlu0 %1199
      %1201 = vrot.lane.b32.xlu0 %v827, 24
      %v1202 = vpop.permute.xlu0 %1201
      %1203 = vrot.lane.b32.xlu0 %v828, 24
      %v1204 = vpop.permute.xlu0 %1203
      %1205 = vrot.lane.b32.xlu0 %v829, 24
      %v1206 = vpop.permute.xlu0 %1205
      %1207 = vrot.lane.b32.xlu0 %v830, 24
      %v1208 = vpop.permute.xlu0 %1207
      %1209 = vrot.lane.b32.xlu0 %v831, 24
      %v1210 = vpop.permute.xlu0 %1209
      %1211 = vrot.lane.b32.xlu0 %v832, 24
      %v1212 = vpop.permute.xlu0 %1211
      %1213 = vrot.lane.b32.xlu0 %v833, 24
      %v1214 = vpop.permute.xlu0 %1213
      %1215 = vrot.lane.b32.xlu0 %v834, 24
      %v1216 = vpop.permute.xlu0 %1215
      %1217 = vrot.lane.b32.xlu0 %v835, 24
      %v1218 = vpop.permute.xlu0 %1217
      %1219 = vrot.lane.b32.xlu0 %v836, 24
      %v1220 = vpop.permute.xlu0 %1219
      %1237 = vrot.lane.b32.xlu0 %v869, 28
      %v1238 = vpop.permute.xlu0 %1237
      %1239 = vrot.lane.b32.xlu0 %v870, 28
      %v1240 = vpop.permute.xlu0 %1239
      %1241 = vrot.lane.b32.xlu0 %v871, 28
      %v1242 = vpop.permute.xlu0 %1241
      %1243 = vrot.lane.b32.xlu0 %v872, 28
      %v1244 = vpop.permute.xlu0 %1243
      %1245 = vrot.lane.b32.xlu0 %v873, 28
      %v1246 = vpop.permute.xlu0 %1245
      %1247 = vrot.lane.b32.xlu0 %v874, 28
      %v1248 = vpop.permute.xlu0 %1247
      %1249 = vrot.lane.b32.xlu0 %v875, 28
      %v1250 = vpop.permute.xlu0 %1249
      %1251 = vrot.lane.b32.xlu0 %v876, 28
      %v1252 = vpop.permute.xlu0 %1251
      %1253 = vrot.lane.b32.xlu0 %v877, 28
      %v1254 = vpop.permute.xlu0 %1253
      %1255 = vrot.lane.b32.xlu0 %v878, 28
      %v1256 = vpop.permute.xlu0 %1255
      %1257 = vrot.lane.b32.xlu0 %v879, 28
      %v1258 = vpop.permute.xlu0 %1257
      %1259 = vrot.lane.b32.xlu0 %v880, 28
      %v1260 = vpop.permute.xlu0 %1259
      %1261 = vrot.lane.b32.xlu0 %v881, 28
      %v1262 = vpop.permute.xlu0 %1261
      %1263 = vrot.lane.b32.xlu0 %v882, 28
      %v1264 = vpop.permute.xlu0 %1263
      %1265 = vrot.lane.b32.xlu0 %v883, 28
      %v1266 = vpop.permute.xlu0 %1265
      %1267 = vrot.lane.b32.xlu0 %v884, 28
      %v1268 = vpop.permute.xlu0 %1267
      %1285 = vrot.lane.b32.xlu0 %v917, 32
      %v1286 = vpop.permute.xlu0 %1285
      %1287 = vrot.lane.b32.xlu0 %v918, 32
      %v1288 = vpop.permute.xlu0 %1287
      %1289 = vrot.lane.b32.xlu0 %v919, 32
      %v1290 = vpop.permute.xlu0 %1289
      %1291 = vrot.lane.b32.xlu0 %v920, 32
      %v1292 = vpop.permute.xlu0 %1291
      %1293 = vrot.lane.b32.xlu0 %v921, 32
      %v1294 = vpop.permute.xlu0 %1293
      %1295 = vrot.lane.b32.xlu0 %v922, 32
      %v1296 = vpop.permute.xlu0 %1295
      %1297 = vrot.lane.b32.xlu0 %v923, 32
      %v1298 = vpop.permute.xlu0 %1297
      %1299 = vrot.lane.b32.xlu0 %v924, 32
      %v1300 = vpop.permute.xlu0 %1299
      %1301 = vrot.lane.b32.xlu0 %v925, 32
      %v1302 = vpop.permute.xlu0 %1301
      %1303 = vrot.lane.b32.xlu0 %v926, 32
      %v1304 = vpop.permute.xlu0 %1303
      %1305 = vrot.lane.b32.xlu0 %v927, 32
      %v1306 = vpop.permute.xlu0 %1305
      %1307 = vrot.lane.b32.xlu0 %v928, 32
      %v1308 = vpop.permute.xlu0 %1307
      %1309 = vrot.lane.b32.xlu0 %v929, 32
      %v1310 = vpop.permute.xlu0 %1309
      %1311 = vrot.lane.b32.xlu0 %v930, 32
      %v1312 = vpop.permute.xlu0 %1311
      %1313 = vrot.lane.b32.xlu0 %v931, 32
      %v1314 = vpop.permute.xlu0 %1313
      %1315 = vrot.lane.b32.xlu0 %v932, 32
      %v1316 = vpop.permute.xlu0 %1315
      %v1319 = vsel %vm411, %v532, %v950
      %v1322 = vsel %vm411, %v533, %v952
      %v1325 = vsel %vm411, %v534, %v954
      %v1328 = vsel %vm411, %v535, %v956
      %v1331 = vsel %vm411, %v536, %v958
      %v1334 = vsel %vm411, %v537, %v960
      %v1337 = vsel %vm411, %v538, %v962
      %v1340 = vsel %vm411, %v539, %v964
      %v1343 = vsel %vm411, %v540, %v966
      %v1346 = vsel %vm411, %v541, %v968
      %v1349 = vsel %vm411, %v542, %v970
      %v1352 = vsel %vm411, %v543, %v972
      %v1355 = vsel %vm411, %v544, %v974
      %v1358 = vsel %vm411, %v545, %v976
      %v1361 = vsel %vm411, %v546, %v978
      %v1364 = vsel %vm411, %v547, %v980
      %vm1365 = vcmask 64512
      %v1367 = vsel %vm1365, %v1319, %v998
      %v1369 = vsel %vm1365, %v1322, %v1000
      %v1371 = vsel %vm1365, %v1325, %v1002
      %v1373 = vsel %vm1365, %v1328, %v1004
      %v1375 = vsel %vm1365, %v1331, %v1006
      %v1377 = vsel %vm1365, %v1334, %v1008
      %v1379 = vsel %vm1365, %v1337, %v1010
      %v1381 = vsel %vm1365, %v1340, %v1012
      %v1383 = vsel %vm1365, %v1343, %v1014
      %v1385 = vsel %vm1365, %v1346, %v1016
      %v1387 = vsel %vm1365, %v1349, %v1018
      %v1389 = vsel %vm1365, %v1352, %v1020
      %v1391 = vsel %vm1365, %v1355, %v1022
      %v1393 = vsel %vm1365, %v1358, %v1024
      %v1395 = vsel %vm1365, %v1361, %v1026
      %v1397 = vsel %vm1365, %v1364, %v1028
      %vm1398 = vcmask 97280
      %v1400 = vsel %vm1398, %v1367, %v1046
      %v1402 = vsel %vm1398, %v1369, %v1048
      %v1404 = vsel %vm1398, %v1371, %v1050
      %v1406 = vsel %vm1398, %v1373, %v1052
      %v1408 = vsel %vm1398, %v1375, %v1054
      %v1410 = vsel %vm1398, %v1377, %v1056
      %v1412 = vsel %vm1398, %v1379, %v1058
      %v1414 = vsel %vm1398, %v1381, %v1060
      %v1416 = vsel %vm1398, %v1383, %v1062
      %v1418 = vsel %vm1398, %v1385, %v1064
      %v1420 = vsel %vm1398, %v1387, %v1066
      %v1422 = vsel %vm1398, %v1389, %v1068
      %v1424 = vsel %vm1398, %v1391, %v1070
      %v1426 = vsel %vm1398, %v1393, %v1072
      %v1428 = vsel %vm1398, %v1395, %v1074
      %v1430 = vsel %vm1398, %v1397, %v1076
      %vm1431 = vcmask 130048
      %v1433 = vsel %vm1431, %v1400, %v1094
      %v1435 = vsel %vm1431, %v1402, %v1096
      %v1437 = vsel %vm1431, %v1404, %v1098
      %v1439 = vsel %vm1431, %v1406, %v1100
      %v1441 = vsel %vm1431, %v1408, %v1102
      %v1443 = vsel %vm1431, %v1410, %v1104
      %v1445 = vsel %vm1431, %v1412, %v1106
      %v1447 = vsel %vm1431, %v1414, %v1108
      %v1449 = vsel %vm1431, %v1416, %v1110
      %v1451 = vsel %vm1431, %v1418, %v1112
      %v1453 = vsel %vm1431, %v1420, %v1114
      %v1455 = vsel %vm1431, %v1422, %v1116
      %v1457 = vsel %vm1431, %v1424, %v1118
      %v1459 = vsel %vm1431, %v1426, %v1120
      %v1461 = vsel %vm1431, %v1428, %v1122
      %v1463 = vsel %vm1431, %v1430, %v1124
      %vm1464 = vcmask 162816
      %v1466 = vsel %vm1464, %v1433, %v1142
      %v1468 = vsel %vm1464, %v1435, %v1144
      %v1470 = vsel %vm1464, %v1437, %v1146
      %v1472 = vsel %vm1464, %v1439, %v1148
      %v1474 = vsel %vm1464, %v1441, %v1150
      %v1476 = vsel %vm1464, %v1443, %v1152
      %v1478 = vsel %vm1464, %v1445, %v1154
      %v1480 = vsel %vm1464, %v1447, %v1156
      %v1482 = vsel %vm1464, %v1449, %v1158
      %v1484 = vsel %vm1464, %v1451, %v1160
      %v1486 = vsel %vm1464, %v1453, %v1162
      %v1488 = vsel %vm1464, %v1455, %v1164
      %v1490 = vsel %vm1464, %v1457, %v1166
      %v1492 = vsel %vm1464, %v1459, %v1168
      %v1494 = vsel %vm1464, %v1461, %v1170
      %v1496 = vsel %vm1464, %v1463, %v1172
      %vm1497 = vcmask 195584
      %v1499 = vsel %vm1497, %v1466, %v1190
      %v1501 = vsel %vm1497, %v1468, %v1192
      %v1503 = vsel %vm1497, %v1470, %v1194
      %v1505 = vsel %vm1497, %v1472, %v1196
      %v1507 = vsel %vm1497, %v1474, %v1198
      %v1509 = vsel %vm1497, %v1476, %v1200
      %v1511 = vsel %vm1497, %v1478, %v1202
      %v1513 = vsel %vm1497, %v1480, %v1204
      %v1515 = vsel %vm1497, %v1482, %v1206
      %v1517 = vsel %vm1497, %v1484, %v1208
      %v1519 = vsel %vm1497, %v1486, %v1210
      %v1521 = vsel %vm1497, %v1488, %v1212
      %v1523 = vsel %vm1497, %v1490, %v1214
      %v1525 = vsel %vm1497, %v1492, %v1216
      %v1527 = vsel %vm1497, %v1494, %v1218
      %v1529 = vsel %vm1497, %v1496, %v1220
      %vm1530 = vcmask 228352
      %v1532 = vsel %vm1530, %v1499, %v1238
      %v1534 = vsel %vm1530, %v1501, %v1240
      %v1536 = vsel %vm1530, %v1503, %v1242
      %v1538 = vsel %vm1530, %v1505, %v1244
      %v1540 = vsel %vm1530, %v1507, %v1246
      %v1542 = vsel %vm1530, %v1509, %v1248
      %v1544 = vsel %vm1530, %v1511, %v1250
      %v1546 = vsel %vm1530, %v1513, %v1252
      %v1548 = vsel %vm1530, %v1515, %v1254
      %v1550 = vsel %vm1530, %v1517, %v1256
      %v1552 = vsel %vm1530, %v1519, %v1258
      %v1554 = vsel %vm1530, %v1521, %v1260
      %v1556 = vsel %vm1530, %v1523, %v1262
      %v1558 = vsel %vm1530, %v1525, %v1264
      %v1560 = vsel %vm1530, %v1527, %v1266
      %v1562 = vsel %vm1530, %v1529, %v1268
      %vm1563 = vcmask 261120
      %v1565 = vsel %vm1563, %v1532, %v1286
      %v1567 = vsel %vm1563, %v1534, %v1288
      %v1569 = vsel %vm1563, %v1536, %v1290
      %v1571 = vsel %vm1563, %v1538, %v1292
      %v1573 = vsel %vm1563, %v1540, %v1294
      %v1575 = vsel %vm1563, %v1542, %v1296
      %v1577 = vsel %vm1563, %v1544, %v1298
      %v1579 = vsel %vm1563, %v1546, %v1300
      %v1581 = vsel %vm1563, %v1548, %v1302
      %v1583 = vsel %vm1563, %v1550, %v1304
      %v1585 = vsel %vm1563, %v1552, %v1306
      %v1587 = vsel %vm1563, %v1554, %v1308
      %v1589 = vsel %vm1563, %v1556, %v1310
      %v1591 = vsel %vm1563, %v1558, %v1312
      %v1593 = vsel %vm1563, %v1560, %v1314
      %v1595 = vsel %vm1563, %v1562, %v1316
      %v1596 = vld [vmem:[%s1] sm:$0xf]
      %v1597 = vld [vmem:[%s1 + $0x4] sm:$0xf]
      %v1598 = vld [vmem:[%s1 + $0x8] sm:$0xf]
      %v1599 = vld [vmem:[%s1 + $0xc] sm:$0xf]
      %v1600 = vld [vmem:[%s1 + $0x10] sm:$0x3]
      %v1606 = vunpack.c.l.b16 %v1596
      %v1607 = vunpack.c.l.b16 %v1597
      %v1608 = vunpack.c.l.b16 %v1598
      %v1609 = vunpack.c.l.b16 %v1599
      %v1610 = vunpack.c.l.b16 %v1600
      %v1611 = vpack.c.b16 %v1607, %v1606
      %v1612 = vpack.c.b16 %v1609, %v1608
      %v1613 = vpack.c.b16 %v1610, %v1610
      %vm1616 = vcmask 293888
      %v1617 = vsel %vm1616, %v1565, 0
      %v1619 = vsel %vm1616, %v1567, 0
      %v1621 = vsel %vm1616, %v1569, 0
      %v1623 = vsel %vm1616, %v1571, 0
      %v1625 = vsel %vm1616, %v1573, 0
      %v1627 = vsel %vm1616, %v1575, 0
      %v1629 = vsel %vm1616, %v1577, 0
      %v1631 = vsel %vm1616, %v1579, 0
      %v1633 = vsel %vm1616, %v1581, 0
      %v1635 = vsel %vm1616, %v1583, 0
      %v1637 = vsel %vm1616, %v1585, 0
      %v1639 = vsel %vm1616, %v1587, 0
      %v1641 = vsel %vm1616, %v1589, 0
      %v1643 = vsel %vm1616, %v1591, 0
      %v1645 = vsel %vm1616, %v1593, 0
      %v1647 = vsel %vm1616, %v1595, 0
      %vm1649 = vcmask 1041408
      %v1651 = vsel %vm1649, %v1613, 0
      %1653 = vmatprep.subr.bf16.mxu0 0
      %1654 = vmatpush1.bf16.msra.mxu0 %v1611
      %1655 = vmatprep.subr.bf16.mxu0 0
      %1656 = vmatpush1.bf16.msra.mxu0 %v1612
      %1657 = vmatprep.subr.bf16.mxu0 0
      %1658 = vmatpush1.bf16.msra.mxu0 %v1651
      %1659 = vmatprep.subr.bf16.mxu0 0
      %1660 = vmatpush1.bf16.msra.mxu0 0
      %1661 = vmatprep.subr.bf16.mxu0 0
      %1662 = vmatpush1.bf16.msra.mxu0 0
      %1663 = vmatprep.subr.bf16.mxu0 0
      %1664 = vmatpush1.bf16.msra.mxu0 0
      %1665 = vmatprep.subr.bf16.mxu0 0
      %1666 = vmatpush1.bf16.msra.mxu0 0
      %1667 = vmatprep.subr.bf16.mxu0 0
      %1668 = vmatpush1.bf16.msra.mxu0 0
      %1669 = vmatprep.subr.bf16.mxu0 0
      %1670 = vmatpush1.bf16.msra.mxu0 0
      %1671 = vmatprep.subr.bf16.mxu0 0
      %1672 = vmatpush1.bf16.msra.mxu0 0
      %1673 = vmatprep.subr.bf16.mxu0 0
      %1674 = vmatpush1.bf16.msra.mxu0 0
      %1675 = vmatprep.subr.bf16.mxu0 0
      %1676 = vmatpush1.bf16.msra.mxu0 0
      %1677 = vmatprep.subr.bf16.mxu0 0
      %1678 = vmatpush1.bf16.msra.mxu0 0
      %1679 = vmatprep.subr.bf16.mxu0 0
      %1680 = vmatpush1.bf16.msra.mxu0 0
      %1681 = vmatprep.subr.bf16.mxu0 0
      %1682 = vmatpush1.bf16.msra.mxu0 0
      %1683 = vmatprep.subr.bf16.mxu0 0
      %1684 = vmatpush1.bf16.msra.mxu0 0
      %1685 = vmatprep.mubr.bf16.mxu0 0
      %1686 = vmatmul.mubr.bf16.gmra.mrb[0].mxu0 %v1617
      %v1687 = vpop.f32.mrb[0].mxu0
      %v1688 = vadd.f32 0.0, %v1687
      %v1689 = vpop.f32.mrb[0].mxu0
      %v1690 = vpop.f32.mrb[0].mxu0
      %v1691 = vadd.f32 0.0, %v1690
      %v1692 = vpop.f32.mrb[0].mxu0
      %1693 = vmatprep.mubr.bf16.mxu0 0
      %1694 = vmatmul.mubr.bf16.gmra.mrb[0].mxu0 %v1619
      %v1695 = vpop.f32.mrb[0].mxu0
      %v1696 = vadd.f32 0.0, %v1695
      %v1697 = vpop.f32.mrb[0].mxu0
      %v1698 = vpop.f32.mrb[0].mxu0
      %v1699 = vadd.f32 0.0, %v1698
      %v1700 = vpop.f32.mrb[0].mxu0
      %1701 = vmatprep.mubr.bf16.mxu0 0
      %1702 = vmatmul.mubr.bf16.gmra.mrb[0].mxu0 %v1621
      %v1703 = vpop.f32.mrb[0].mxu0
      %v1704 = vadd.f32 0.0, %v1703
      %v1705 = vpop.f32.mrb[0].mxu0
      %v1706 = vpop.f32.mrb[0].mxu0
      %v1707 = vadd.f32 0.0, %v1706
      %v1708 = vpop.f32.mrb[0].mxu0
      %1709 = vmatprep.mubr.bf16.mxu0 0
      %1710 = vmatmul.mubr.bf16.gmra.mrb[0].mxu0 %v1623
      %v1711 = vpop.f32.mrb[0].mxu0
      %v1712 = vadd.f32 0.0, %v1711
      %v1713 = vpop.f32.mrb[0].mxu0
      %v1714 = vpop.f32.mrb[0].mxu0
      %v1715 = vadd.f32 0.0, %v1714
      %v1716 = vpop.f32.mrb[0].mxu0
      %1717 = vmatprep.mubr.bf16.mxu0 0
      %1718 = vmatmul.mubr.bf16.gmra.mrb[0].mxu0 %v1625
      %v1719 = vpop.f32.mrb[0].mxu0
      %v1720 = vadd.f32 0.0, %v1719
      %v1721 = vpop.f32.mrb[0].mxu0
      %v1722 = vpop.f32.mrb[0].mxu0
      %v1723 = vadd.f32 0.0, %v1722
      %v1724 = vpop.f32.mrb[0].mxu0
      %1725 = vmatprep.mubr.bf16.mxu0 0
      %1726 = vmatmul.mubr.bf16.gmra.mrb[0].mxu0 %v1627
      %v1727 = vpop.f32.mrb[0].mxu0
      %v1728 = vadd.f32 0.0, %v1727
      %v1729 = vpop.f32.mrb[0].mxu0
      %v1730 = vpop.f32.mrb[0].mxu0
      %v1731 = vadd.f32 0.0, %v1730
      %v1732 = vpop.f32.mrb[0].mxu0
      %1733 = vmatprep.mubr.bf16.mxu0 0
      %1734 = vmatmul.mubr.bf16.gmra.mrb[0].mxu0 %v1629
      %v1735 = vpop.f32.mrb[0].mxu0
      %v1736 = vadd.f32 0.0, %v1735
      %v1737 = vpop.f32.mrb[0].mxu0
      %v1738 = vpop.f32.mrb[0].mxu0
      %v1739 = vadd.f32 0.0, %v1738
      %v1740 = vpop.f32.mrb[0].mxu0
      %1741 = vmatprep.mubr.bf16.mxu0 0
      %1742 = vmatmul.mubr.bf16.gmra.mrb[0].mxu0 %v1631
      %v1743 = vpop.f32.mrb[0].mxu0
      %v1744 = vadd.f32 0.0, %v1743
      %v1745 = vpop.f32.mrb[0].mxu0
      %v1746 = vpop.f32.mrb[0].mxu0
      %v1747 = vadd.f32 0.0, %v1746
      %v1748 = vpop.f32.mrb[0].mxu0
      %1749 = vmatprep.mubr.bf16.mxu0 0
      %1750 = vmatmul.mubr.bf16.gmra.mrb[0].mxu0 %v1633
      %v1751 = vpop.f32.mrb[0].mxu0
      %v1752 = vadd.f32 0.0, %v1751
      %v1753 = vpop.f32.mrb[0].mxu0
      %v1754 = vpop.f32.mrb[0].mxu0
      %v1755 = vadd.f32 0.0, %v1754
      %v1756 = vpop.f32.mrb[0].mxu0
      %1757 = vmatprep.mubr.bf16.mxu0 0
      %1758 = vmatmul.mubr.bf16.gmra.mrb[0].mxu0 %v1635
      %v1759 = vpop.f32.mrb[0].mxu0
      %v1760 = vadd.f32 0.0, %v1759
      %v1761 = vpop.f32.mrb[0].mxu0
      %v1762 = vpop.f32.mrb[0].mxu0
      %v1763 = vadd.f32 0.0, %v1762
      %v1764 = vpop.f32.mrb[0].mxu0
      %1765 = vmatprep.mubr.bf16.mxu0 0
      %1766 = vmatmul.mubr.bf16.gmra.mrb[0].mxu0 %v1637
      %v1767 = vpop.f32.mrb[0].mxu0
      %v1768 = vadd.f32 0.0, %v1767
      %v1769 = vpop.f32.mrb[0].mxu0
      %v1770 = vpop.f32.mrb[0].mxu0
      %v1771 = vadd.f32 0.0, %v1770
      %v1772 = vpop.f32.mrb[0].mxu0
      %1773 = vmatprep.mubr.bf16.mxu0 0
      %1774 = vmatmul.mubr.bf16.gmra.mrb[0].mxu0 %v1639
      %v1775 = vpop.f32.mrb[0].mxu0
      %v1776 = vadd.f32 0.0, %v1775
      %v1777 = vpop.f32.mrb[0].mxu0
      %v1778 = vpop.f32.mrb[0].mxu0
      %v1779 = vadd.f32 0.0, %v1778
      %v1780 = vpop.f32.mrb[0].mxu0
      %1781 = vmatprep.mubr.bf16.mxu0 0
      %1782 = vmatmul.mubr.bf16.gmra.mrb[0].mxu0 %v1641
      %v1783 = vpop.f32.mrb[0].mxu0
      %v1784 = vadd.f32 0.0, %v1783
      %v1785 = vpop.f32.mrb[0].mxu0
      %v1786 = vpop.f32.mrb[0].mxu0
      %v1787 = vadd.f32 0.0, %v1786
      %v1788 = vpop.f32.mrb[0].mxu0
      %1789 = vmatprep.mubr.bf16.mxu0 0
      %1790 = vmatmul.mubr.bf16.gmra.mrb[0].mxu0 %v1643
      %v1791 = vpop.f32.mrb[0].mxu0
      %v1792 = vadd.f32 0.0, %v1791
      %v1793 = vpop.f32.mrb[0].mxu0
      %v1794 = vpop.f32.mrb[0].mxu0
      %v1795 = vadd.f32 0.0, %v1794
      %v1796 = vpop.f32.mrb[0].mxu0
      %1797 = vmatprep.mubr.bf16.mxu0 0
      %1798 = vmatmul.mubr.bf16.gmra.mrb[0].mxu0 %v1645
      %v1799 = vpop.f32.mrb[0].mxu0
      %v1800 = vadd.f32 0.0, %v1799
      %v1801 = vpop.f32.mrb[0].mxu0
      %v1802 = vpop.f32.mrb[0].mxu0
      %v1803 = vadd.f32 0.0, %v1802
      %v1804 = vpop.f32.mrb[0].mxu0
      %1805 = vmatprep.mubr.bf16.mxu0 0
      %1806 = vmatmul.mubr.bf16.gmra.mrb[0].mxu0 %v1647
      %v1807 = vpop.f32.mrb[0].mxu0
      %v1808 = vadd.f32 0.0, %v1807
      %v1809 = vpop.f32.mrb[0].mxu0
      %v1810 = vpop.f32.mrb[0].mxu0
      %v1811 = vadd.f32 0.0, %v1810
      %v1812 = vpop.f32.mrb[0].mxu0
      %1813 = vdwg.mxu0
      %v1814 = vpack.c.bf16 %v1691, %v1688
      %v1815 = vpack.c.bf16 %v1699, %v1696
      %v1816 = vpack.c.bf16 %v1707, %v1704
      %v1817 = vpack.c.bf16 %v1715, %v1712
      %v1818 = vpack.c.bf16 %v1723, %v1720
      %v1819 = vpack.c.bf16 %v1731, %v1728
      %v1820 = vpack.c.bf16 %v1739, %v1736
      %v1821 = vpack.c.bf16 %v1747, %v1744
      %v1822 = vpack.c.bf16 %v1755, %v1752
      %v1823 = vpack.c.bf16 %v1763, %v1760
      %v1824 = vpack.c.bf16 %v1771, %v1768
      %v1825 = vpack.c.bf16 %v1779, %v1776
      %v1826 = vpack.c.bf16 %v1787, %v1784
      %v1827 = vpack.c.bf16 %v1795, %v1792
      %v1828 = vpack.c.bf16 %v1803, %v1800
      %v1829 = vpack.c.bf16 %v1811, %v1808
      %v1846 = vunpack.c.l.b16 %v1814
      %v1847 = vunpack.c.h.b16 %v1814
      %v1848 = vunpack.c.l.b16 %v1815
      %v1849 = vunpack.c.h.b16 %v1815
      %v1850 = vunpack.c.l.b16 %v1816
      %v1851 = vunpack.c.h.b16 %v1816
      %v1852 = vunpack.c.l.b16 %v1817
      %v1853 = vunpack.c.h.b16 %v1817
      %v1854 = vunpack.c.l.b16 %v1818
      %v1855 = vunpack.c.h.b16 %v1818
      %v1856 = vunpack.c.l.b16 %v1819
      %v1857 = vunpack.c.h.b16 %v1819
      %v1858 = vunpack.c.l.b16 %v1820
      %v1859 = vunpack.c.h.b16 %v1820
      %v1860 = vunpack.c.l.b16 %v1821
      %v1861 = vunpack.c.h.b16 %v1821
      %v1862 = vunpack.c.l.b16 %v1822
      %v1863 = vunpack.c.h.b16 %v1822
      %v1864 = vunpack.c.l.b16 %v1823
      %v1865 = vunpack.c.h.b16 %v1823
      %v1866 = vunpack.c.l.b16 %v1824
      %v1867 = vunpack.c.h.b16 %v1824
      %v1868 = vunpack.c.l.b16 %v1825
      %v1869 = vunpack.c.h.b16 %v1825
      %v1870 = vunpack.c.l.b16 %v1826
      %v1871 = vunpack.c.h.b16 %v1826
      %v1872 = vunpack.c.l.b16 %v1827
      %v1873 = vunpack.c.h.b16 %v1827
      %v1874 = vunpack.c.l.b16 %v1828
      %v1875 = vunpack.c.h.b16 %v1828
      %v1876 = vunpack.c.l.b16 %v1829
      %v1877 = vunpack.c.h.b16 %v1829
      %v1878 = vpack.c.b16 %v1846, %v1846
      %v1879 = vpack.c.b16 %v1847, %v1847
      %v1880 = vpack.c.b16 %v1848, %v1848
      %v1881 = vpack.c.b16 %v1849, %v1849
      %v1882 = vpack.c.b16 %v1850, %v1850
      %v1883 = vpack.c.b16 %v1851, %v1851
      %v1884 = vpack.c.b16 %v1852, %v1852
      %v1885 = vpack.c.b16 %v1853, %v1853
      %v1886 = vpack.c.b16 %v1854, %v1854
      %v1887 = vpack.c.b16 %v1855, %v1855
      %v1888 = vpack.c.b16 %v1856, %v1856
      %v1889 = vpack.c.b16 %v1857, %v1857
      %v1890 = vpack.c.b16 %v1858, %v1858
      %v1891 = vpack.c.b16 %v1859, %v1859
      %v1892 = vpack.c.b16 %v1860, %v1860
      %v1893 = vpack.c.b16 %v1861, %v1861
      %v1894 = vpack.c.b16 %v1862, %v1862
      %v1895 = vpack.c.b16 %v1863, %v1863
      %v1896 = vpack.c.b16 %v1864, %v1864
      %v1897 = vpack.c.b16 %v1865, %v1865
      %v1898 = vpack.c.b16 %v1866, %v1866
      %v1899 = vpack.c.b16 %v1867, %v1867
      %v1900 = vpack.c.b16 %v1868, %v1868
      %v1901 = vpack.c.b16 %v1869, %v1869
      %v1902 = vpack.c.b16 %v1870, %v1870
      %v1903 = vpack.c.b16 %v1871, %v1871
      %v1904 = vpack.c.b16 %v1872, %v1872
      %v1905 = vpack.c.b16 %v1873, %v1873
      %v1906 = vpack.c.b16 %v1874, %v1874
      %v1907 = vpack.c.b16 %v1875, %v1875
      %v1908 = vpack.c.b16 %v1876, %v1876
      %v1909 = vpack.c.b16 %v1877, %v1877
      %vm1942 = vcmask 27648
      %1943 = vst.msk [vmem:[%s231] sm:$0xf] %vm1942, %v1878
      %1944 = vst.msk [vmem:[%s231 + $0x4] sm:$0xf] %vm1942, %v1879
      %1945 = vst.msk [vmem:[%s231 + $0x8] sm:$0xf] %vm1942, %v1880
      %1946 = vst.msk [vmem:[%s231 + $0xc] sm:$0xf] %vm1942, %v1881
      %1947 = vst.msk [vmem:[%s231 + $0x10] sm:$0xf] %vm1942, %v1882
      %1948 = vst.msk [vmem:[%s231 + $0x14] sm:$0xf] %vm1942, %v1883
      %1949 = vst.msk [vmem:[%s231 + $0x18] sm:$0xf] %vm1942, %v1884
      %1950 = vst.msk [vmem:[%s231 + $0x1c] sm:$0xf] %vm1942, %v1885
      %1951 = vst.msk [vmem:[%s231 + $0x20] sm:$0xf] %vm1942, %v1886
      %1952 = vst.msk [vmem:[%s231 + $0x24] sm:$0xf] %vm1942, %v1887
      %1953 = vst.msk [vmem:[%s231 + $0x28] sm:$0xf] %vm1942, %v1888
      %1954 = vst.msk [vmem:[%s231 + $0x2c] sm:$0xf] %vm1942, %v1889
      %1955 = vst.msk [vmem:[%s231 + $0x30] sm:$0xf] %vm1942, %v1890
      %1956 = vst.msk [vmem:[%s231 + $0x34] sm:$0xf] %vm1942, %v1891
      %1957 = vst.msk [vmem:[%s231 + $0x38] sm:$0xf] %vm1942, %v1892
      %1958 = vst.msk [vmem:[%s231 + $0x3c] sm:$0xf] %vm1942, %v1893
      %1959 = vst.msk [vmem:[%s231 + $0x40] sm:$0xf] %vm1942, %v1894
      %1960 = vst.msk [vmem:[%s231 + $0x44] sm:$0xf] %vm1942, %v1895
      %1961 = vst.msk [vmem:[%s231 + $0x48] sm:$0xf] %vm1942, %v1896
      %1962 = vst.msk [vmem:[%s231 + $0x4c] sm:$0xf] %vm1942, %v1897
      %1963 = vst.msk [vmem:[%s231 + $0x50] sm:$0xf] %vm1942, %v1898
      %1964 = vst.msk [vmem:[%s231 + $0x54] sm:$0xf] %vm1942, %v1899
      %1965 = vst.msk [vmem:[%s231 + $0x58] sm:$0xf] %vm1942, %v1900
      %1966 = vst.msk [vmem:[%s231 + $0x5c] sm:$0xf] %vm1942, %v1901
      %1967 = vst.msk [vmem:[%s231 + $0x60] sm:$0xf] %vm1942, %v1902
      %1968 = vst.msk [vmem:[%s231 + $0x64] sm:$0xf] %vm1942, %v1903
      %1969 = vst.msk [vmem:[%s231 + $0x68] sm:$0xf] %vm1942, %v1904
      %1970 = vst.msk [vmem:[%s231 + $0x6c] sm:$0xf] %vm1942, %v1905
      %1971 = vst.msk [vmem:[%s231 + $0x70] sm:$0xf] %vm1942, %v1906
      %1972 = vst.msk [vmem:[%s231 + $0x74] sm:$0xf] %vm1942, %v1907
      %1973 = vst.msk [vmem:[%s231 + $0x78] sm:$0xf] %vm1942, %v1908
      %1974 = vst.msk [vmem:[%s231 + $0x7c] sm:$0xf] %vm1942, %v1909
      %v1975 = vsel %vm411, %v1688, 0.0
      %v1976 = vsel %vm411, %v1691, 0.0
      %v1977 = vadd.f32 %v1975, %v1976
      %v1978 = vsel %vm411, %v1696, 0.0
      %v1979 = vadd.f32 %v1977, %v1978
      %v1980 = vsel %vm411, %v1699, 0.0
      %v1981 = vadd.f32 %v1979, %v1980
      %v1982 = vsel %vm411, %v1704, 0.0
      %v1983 = vadd.f32 %v1981, %v1982
      %v1984 = vsel %vm411, %v1707, 0.0
      %v1985 = vadd.f32 %v1983, %v1984
      %v1986 = vsel %vm411, %v1712, 0.0
      %v1987 = vadd.f32 %v1985, %v1986
      %v1988 = vsel %vm411, %v1715, 0.0
      %v1989 = vadd.f32 %v1987, %v1988
      %v1990 = vsel %vm411, %v1720, 0.0
      %v1991 = vadd.f32 %v1989, %v1990
      %v1992 = vsel %vm411, %v1723, 0.0
      %v1993 = vadd.f32 %v1991, %v1992
      %v1994 = vsel %vm411, %v1728, 0.0
      %v1995 = vadd.f32 %v1993, %v1994
      %v1996 = vsel %vm411, %v1731, 0.0
      %v1997 = vadd.f32 %v1995, %v1996
      %v1998 = vsel %vm411, %v1736, 0.0
      %v1999 = vadd.f32 %v1997, %v1998
      %v2000 = vsel %vm411, %v1739, 0.0
      %v2001 = vadd.f32 %v1999, %v2000
      %v2002 = vsel %vm411, %v1744, 0.0
      %v2003 = vadd.f32 %v2001, %v2002
      %v2004 = vsel %vm411, %v1747, 0.0
      %v2005 = vadd.f32 %v2003, %v2004
      %v2006 = vsel %vm411, %v1752, 0.0
      %v2007 = vadd.f32 %v2005, %v2006
      %v2008 = vsel %vm411, %v1755, 0.0
      %v2009 = vadd.f32 %v2007, %v2008
      %v2010 = vsel %vm411, %v1760, 0.0
      %v2011 = vadd.f32 %v2009, %v2010
      %v2012 = vsel %vm411, %v1763, 0.0
      %v2013 = vadd.f32 %v2011, %v2012
      %v2014 = vsel %vm411, %v1768, 0.0
      %v2015 = vadd.f32 %v2013, %v2014
      %v2016 = vsel %vm411, %v1771, 0.0
      %v2017 = vadd.f32 %v2015, %v2016
      %v2018 = vsel %vm411, %v1776, 0.0
      %v2019 = vadd.f32 %v2017, %v2018
      %v2020 = vsel %vm411, %v1779, 0.0
      %v2021 = vadd.f32 %v2019, %v2020
      %v2022 = vsel %vm411, %v1784, 0.0
      %v2023 = vadd.f32 %v2021, %v2022
      %v2024 = vsel %vm411, %v1787, 0.0
      %v2025 = vadd.f32 %v2023, %v2024
      %v2026 = vsel %vm411, %v1792, 0.0
      %v2027 = vadd.f32 %v2025, %v2026
      %v2028 = vsel %vm411, %v1795, 0.0
      %v2029 = vadd.f32 %v2027, %v2028
      %v2030 = vsel %vm411, %v1800, 0.0
      %v2031 = vadd.f32 %v2029, %v2030
      %v2032 = vsel %vm411, %v1803, 0.0
      %v2033 = vadd.f32 %v2031, %v2032
      %v2034 = vsel %vm411, %v1808, 0.0
      %v2035 = vadd.f32 %v2033, %v2034
      %v2036 = vsel %vm411, %v1811, 0.0
      %v2037 = vadd.f32 %v2035, %v2036
      %v2038 = vrot.slane %v2037, 4
      %v2039 = vadd.f32 %v2037, %v2038
      %v2040 = vrot.slane %v2039, 2
      %v2041 = vadd.f32 %v2039, %v2040
      %v2042 = vrot.slane %v2041, 1
      %v2043 = vadd.f32 %v2041, %v2042
      %vm2044 = vcmask 24576
      %2045 = vst.msk [vmem:[%s235] sm:$0x1] %vm2044, %v2043
      %v2046 = vmul.f32 %v1688, %v1688
      %v2047 = vmul.f32 %v1691, %v1691
      %v2048 = vmul.f32 %v1696, %v1696
      %v2049 = vmul.f32 %v1699, %v1699
      %v2050 = vmul.f32 %v1704, %v1704
      %v2051 = vmul.f32 %v1707, %v1707
      %v2052 = vmul.f32 %v1712, %v1712
      %v2053 = vmul.f32 %v1715, %v1715
      %v2054 = vmul.f32 %v1720, %v1720
      %v2055 = vmul.f32 %v1723, %v1723
      %v2056 = vmul.f32 %v1728, %v1728
      %v2057 = vmul.f32 %v1731, %v1731
      %v2058 = vmul.f32 %v1736, %v1736
      %v2059 = vmul.f32 %v1739, %v1739
      %v2060 = vmul.f32 %v1744, %v1744
      %v2061 = vmul.f32 %v1747, %v1747
      %v2062 = vmul.f32 %v1752, %v1752
      %v2063 = vmul.f32 %v1755, %v1755
      %v2064 = vmul.f32 %v1760, %v1760
      %v2065 = vmul.f32 %v1763, %v1763
      %v2066 = vmul.f32 %v1768, %v1768
      %v2067 = vmul.f32 %v1771, %v1771
      %v2068 = vmul.f32 %v1776, %v1776
      %v2069 = vmul.f32 %v1779, %v1779
      %v2070 = vmul.f32 %v1784, %v1784
      %v2071 = vmul.f32 %v1787, %v1787
      %v2072 = vmul.f32 %v1792, %v1792
      %v2073 = vmul.f32 %v1795, %v1795
      %v2074 = vmul.f32 %v1800, %v1800
      %v2075 = vmul.f32 %v1803, %v1803
      %v2076 = vmul.f32 %v1808, %v1808
      %v2077 = vmul.f32 %v1811, %v1811
      %v2078 = vsel %vm411, %v2046, 0.0
      %v2079 = vsel %vm411, %v2047, 0.0
      %v2080 = vadd.f32 %v2078, %v2079
      %v2081 = vsel %vm411, %v2048, 0.0
      %v2082 = vadd.f32 %v2080, %v2081
      %v2083 = vsel %vm411, %v2049, 0.0
      %v2084 = vadd.f32 %v2082, %v2083
      %v2085 = vsel %vm411, %v2050, 0.0
      %v2086 = vadd.f32 %v2084, %v2085
      %v2087 = vsel %vm411, %v2051, 0.0
      %v2088 = vadd.f32 %v2086, %v2087
      %v2089 = vsel %vm411, %v2052, 0.0
      %v2090 = vadd.f32 %v2088, %v2089
      %v2091 = vsel %vm411, %v2053, 0.0
      %v2092 = vadd.f32 %v2090, %v2091
      %v2093 = vsel %vm411, %v2054, 0.0
      %v2094 = vadd.f32 %v2092, %v2093
      %v2095 = vsel %vm411, %v2055, 0.0
      %v2096 = vadd.f32 %v2094, %v2095
      %v2097 = vsel %vm411, %v2056, 0.0
      %v2098 = vadd.f32 %v2096, %v2097
      %v2099 = vsel %vm411, %v2057, 0.0
      %v2100 = vadd.f32 %v2098, %v2099
      %v2101 = vsel %vm411, %v2058, 0.0
      %v2102 = vadd.f32 %v2100, %v2101
      %v2103 = vsel %vm411, %v2059, 0.0
      %v2104 = vadd.f32 %v2102, %v2103
      %v2105 = vsel %vm411, %v2060, 0.0
      %v2106 = vadd.f32 %v2104, %v2105
      %v2107 = vsel %vm411, %v2061, 0.0
      %v2108 = vadd.f32 %v2106, %v2107
      %v2109 = vsel %vm411, %v2062, 0.0
      %v2110 = vadd.f32 %v2108, %v2109
      %v2111 = vsel %vm411, %v2063, 0.0
      %v2112 = vadd.f32 %v2110, %v2111
      %v2113 = vsel %vm411, %v2064, 0.0
      %v2114 = vadd.f32 %v2112, %v2113
      %v2115 = vsel %vm411, %v2065, 0.0
      %v2116 = vadd.f32 %v2114, %v2115
      %v2117 = vsel %vm411, %v2066, 0.0
      %v2118 = vadd.f32 %v2116, %v2117
      %v2119 = vsel %vm411, %v2067, 0.0
      %v2120 = vadd.f32 %v2118, %v2119
      %v2121 = vsel %vm411, %v2068, 0.0
      %v2122 = vadd.f32 %v2120, %v2121
      %v2123 = vsel %vm411, %v2069, 0.0
      %v2124 = vadd.f32 %v2122, %v2123
      %v2125 = vsel %vm411, %v2070, 0.0
      %v2126 = vadd.f32 %v2124, %v2125
      %v2127 = vsel %vm411, %v2071, 0.0
      %v2128 = vadd.f32 %v2126, %v2127
      %v2129 = vsel %vm411, %v2072, 0.0
      %v2130 = vadd.f32 %v2128, %v2129
      %v2131 = vsel %vm411, %v2073, 0.0
      %v2132 = vadd.f32 %v2130, %v2131
      %v2133 = vsel %vm411, %v2074, 0.0
      %v2134 = vadd.f32 %v2132, %v2133
      %v2135 = vsel %vm411, %v2075, 0.0
      %v2136 = vadd.f32 %v2134, %v2135
      %v2137 = vsel %vm411, %v2076, 0.0
      %v2138 = vadd.f32 %v2136, %v2137
      %v2139 = vsel %vm411, %v2077, 0.0
      %v2140 = vadd.f32 %v2138, %v2139
      %v2141 = vrot.slane %v2140, 4
      %v2142 = vadd.f32 %v2140, %v2141
      %v2143 = vrot.slane %v2142, 2
      %v2144 = vadd.f32 %v2142, %v2143
      %v2145 = vrot.slane %v2144, 1
      %v2146 = vadd.f32 %v2144, %v2145
      %2147 = vst.msk [vmem:[%s235 + $0x1] sm:$0x1] %vm2044, %v2146
      %p2148 = scmp.lt.s32.totalorder %s17, 1
      %s2149 = scalar_select %p2148, %s17, 1
      %s2150 = smul.addr %s2149, 32
      %s2151 = smul.addr %s2150, 4
      %s2152 = scalar_lea.vmem %s4, %s2151
      %p2153 = scmp.lt.s32.totalorder %s17, 1
      %s2154 = scalar_select %p2153, %s17, 1
      %s2155 = smul.addr %s2154, 2
      %s2156 = scalar_lea.vmem %s5, %s2155
      // Predicated region
      $region37: #{block_forward.4} parent=35 // pred_check
        %p2157 = pneg %p124
      $region38: #{block_forward.4} parent=35 // pred_check_branch
        %2159 = sbr.rel (%p2157) target = $region40
      $region39: #{block_forward.4} parent=35 // pred_region
        _
      $region40: #{block_forward.4} parent=35 // pred_fallthru
        _
      // Predicated region
      $region41: #{block_forward.4} parent=35 // pred_check
        %p2160 = pneg %p150
      $region42: #{block_forward.4} parent=35 // pred_check_branch
        %2162 = sbr.rel (%p2160) target = $region44
      $region43: #{block_forward.4} parent=35 // pred_region
        _
      $region44: #{block_forward.4} parent=35 // pred_fallthru
        _
    $region36: #{block_forward.4} parent=5 // pred_fallthru
      _
    %p2163 = scmp.le.s32.totalorder 2, %s12
    // Predicated region
    $region45: #{block_forward.4} parent=5 // pred_check
      %p2164 = pneg %p2163
    $region46: #{block_forward.4} parent=5 // pred_check_branch
      %2166 = sbr.rel (%p2164) target = $region48
    $region47: #{block_forward.4} parent=5 // pred_region
      %s2167 = ssub.s32 %s12, 2
      // Predicated region
      $region49: #{block_forward.4} parent=47 // pred_check
        %p2168 = pneg %p130
      $region50: #{block_forward.4} parent=47 // pred_check_branch
        %2170 = sbr.rel (%p2168) target = $region52
      $region51: #{block_forward.4} parent=47 // pred_region
        %p2171 = scmp.lt.s32.totalorder %s18, 1
        %s2172 = scalar_select %p2171, %s18, 1
        %s2173 = smul.addr %s2172, 32
        %s2174 = smul.addr %s2173, 4
        %s2175 = scalar_lea.vmem %s4, %s2174
      $region52: #{block_forward.4} parent=47 // pred_fallthru
        _
      // Predicated region
      $region53: #{block_forward.4} parent=47 // pred_check
        %p2176 = pneg %p156
      $region54: #{block_forward.4} parent=47 // pred_check_branch
        %2178 = sbr.rel (%p2176) target = $region56
      $region55: #{block_forward.4} parent=47 // pred_region
        %p2179 = scmp.lt.s32.totalorder %s18, 1
        %s2180 = scalar_select %p2179, %s18, 1
        %s2181 = smul.addr %s2180, 2
        %s2182 = scalar_lea.vmem %s5, %s2181
      $region56: #{block_forward.4} parent=47 // pred_fallthru
        _
    $region48: #{block_forward.4} parent=5 // pred_fallthru
      _
  $region6: #{block_forward.4} parent=0 // loop_footer
    %s16 = sadd.s32 1, %s12
  $region7: #{block_forward.4} parent=0 // loop_footer_branch
    %11 = sbr.rel target = $region3
  $region8: #{block_forward.4} parent=0 // loop_exit
    _

</llo_original>
